<compile_context>
chip_gen: v5e
topology: v5e:2x2
jax: 0.10.0
libtpu: 0.0.40
codegen_flags: <defaults>
</compile_context>

<pallas_src>
import math

import numpy as np
import jax
import jax.numpy as jnp
from jax.experimental import pallas as pl
from jax.experimental.pallas import tpu as pltpu

# ----------------------------- configuration --------------------------------
IMAGE_SIZE = 16
EMBED_IMAGE_SIZE = 4
NUM_HIDDENS = 32            # C2
EMBEDDING_DIM = 16          # E
IN_CHANNELS = 1
BN_EPS = 1e-5
NUM_OF_CONVS = int(math.log2(IMAGE_SIZE)) - int(math.log2(EMBED_IMAGE_SIZE))   # 2

C1 = NUM_HIDDENS // 2 ** (NUM_OF_CONVS - 1)   # 16
C2 = NUM_HIDDENS                              # 32
H1 = IMAGE_SIZE // 2                          # 8   (conv1 output spatial)
H2 = IMAGE_SIZE // 4                          # 4   (conv2 output spatial)
P1 = H1 * H1                                  # 64
P2 = H2 * H2                                  # 16
L1 = P1 * C1                                  # 1024  conv1 cols  (p*C1 + c)
L2 = P2 * C2                                  # 512   conv2 cols  (p2*C2 + c)
LOUT = EMBEDDING_DIM * P2                     # 256   output cols (e*P2 + p2)

_VMEM = pl.BlockSpec(memory_space=pltpu.MemorySpace.VMEM)


# ------------------------------ Pallas kernel --------------------------------
def _channel_allreduce(stats, period, width):
    """stats: (R, width) with columns (position, channel)-major, period=#channels.

    Doubling circular roll-and-add along the lane axis: after log2(width/period)
    steps EVERY column w holds the sum over all columns with the same
    (w % period) — the per-channel reduction AND its broadcast back to column
    width in one pass, entirely on the XLU (no MXU weight pushes)."""
    shift = period
    while shift < width:
        stats = stats + pltpu.roll(stats, shift, axis=1)
        shift *= 2
    return stats


def _bn_relu(y, gamma_w, beta_w, channels, count):
    """Training-mode BatchNorm + ReLU on y with columns = (position, channel).

    gamma_w/beta_w are already broadcast to column width (done once in
    fold_params).  Single pass: sum and sum-of-squares, biased variance
    (PyTorch normalization).  All statistics math stays in f32."""
    width = y.shape[1]
    colsum = jnp.sum(y, axis=0, keepdims=True)            # (1, W)
    colsq = jnp.sum(y * y, axis=0, keepdims=True)          # (1, W)
    stats = jnp.concatenate([colsum, colsq], axis=0)       # (2, W)
    stats = _channel_allreduce(stats, channels, width) * (1.0 / float(count))
    mean_w = stats[0:1, :]                                  # (1, W) per-channel mean
    var_w = jnp.maximum(stats[1:2, :] - mean_w * mean_w, 0.0)
    inv_std = jax.lax.rsqrt(var_w + BN_EPS)
    scale_w = gamma_w * inv_std
    shift_w = beta_w - mean_w * scale_w
    return jnp.maximum(y * scale_w + shift_w, 0.0)


def encoder_kernel(x_ref, w1_ref, w2_ref, w3_ref, slab1_ref, slab2_ref, b3_ref,
                   o_ref):
    n = x_ref.shape[0]

    s1 = slab1_ref[...]            # (3, 1024): conv1 offset, gamma1_w, beta1_w
    s2 = slab2_ref[...]            # (2, 512) : gamma2_w, beta2_w

    # conv1 (pixel-norm folded into weights/offset) ---------------------------
    x16 = x_ref[...].astype(jnp.bfloat16)
    y1 = jnp.dot(x16, w1_ref[...], preferred_element_type=jnp.float32)   # (N,1024)
    y1 = y1 + s1[0:1, :]
    a1 = _bn_relu(y1, s1[1:2, :], s1[2:3, :], C1, n * P1)

    # conv2 (bias exactly absorbed by train-mode BN -> dropped) ---------------
    y2 = jnp.dot(a1.astype(jnp.bfloat16), w2_ref[...],
                 preferred_element_type=jnp.float32)                      # (N, 512)
    a2 = _bn_relu(y2, s2[0:1, :], s2[1:2, :], C2, n * P2)

    # pre-VQ 1x1 conv, output columns already in NCHW flatten order -----------
    y3 = jnp.dot(a2.astype(jnp.bfloat16), w3_ref[...],
                 preferred_element_type=jnp.float32)                      # (N, 256)
    o_ref[...] = (y3 + b3_ref[...]).astype(o_ref.dtype)


# -------------------------- weight folding (one-time) ------------------------
def _same_pad_lo(size, k, s):
    out = -(-size // s)                       # ceil
    pad = max((out - 1) * s + k - size, 0)
    return pad // 2, out                      # (low pad, output size)


def _conv_fold(w_hwio, in_h, in_w, stride):
    """3x3 strided SAME conv as a dense matrix acting on a (spatial, cin)-major
    row layout; out columns are (spatial_out, cout)-major."""
    kh_n, kw_n, cin, cout = w_hwio.shape
    pt, oh_n = _same_pad_lo(in_h, kh_n, stride)
    pleft, ow_n = _same_pad_lo(in_w, kw_n, stride)
    W = np.zeros((in_h * in_w * cin, oh_n * ow_n * cout), np.float32)
    for oh in range(oh_n):
        for ow in range(ow_n):
            p = oh * ow_n + ow
            for kh in range(kh_n):
                for kw in range(kw_n):
                    ih = stride * oh + kh - pt
                    iw = stride * ow + kw - pleft
                    if 0 <= ih < in_h and 0 <= iw < in_w:
                        s = ih * in_w + iw
                        W[s * cin:(s + 1) * cin, p * cout:(p + 1) * cout] += w_hwio[kh, kw]
    return W


def _conv1_offset(w_hwio, b, in_h, in_w, stride):
    """Per-(position, channel) constant from the -0.5 pixel shift (zero padding
    makes it position dependent at the borders) plus the conv bias."""
    kh_n, kw_n, _, cout = w_hwio.shape
    pt, oh_n = _same_pad_lo(in_h, kh_n, stride)
    pleft, ow_n = _same_pad_lo(in_w, kw_n, stride)
    off = np.zeros((1, oh_n * ow_n * cout), np.float32)
    for oh in range(oh_n):
        for ow in range(ow_n):
            p = oh * ow_n + ow
            acc = np.asarray(b, np.float32).copy()
            for kh in range(kh_n):
                for kw in range(kw_n):
                    ih = stride * oh + kh - pt
                    iw = stride * ow + kw - pleft
                    if 0 <= ih < in_h and 0 <= iw < in_w:
                        acc = acc - 0.5 * w_hwio[kh, kw].sum(axis=0)
            off[0, p * cout:(p + 1) * cout] = acc
    return off


def _prevq_fold(wv_oi, bv):
    """1x1 conv folded with the final NCHW-flatten permutation."""
    e_n, c2 = wv_oi.shape
    W = np.zeros((P2 * c2, e_n * P2), np.float32)
    for p in range(P2):
        for e in range(e_n):
            W[p * c2:(p + 1) * c2, e * P2 + p] = wv_oi[e, :]
    b = np.repeat(np.asarray(bv, np.float32), P2)[None, :]      # col = e*P2 + p
    return W, b


def init_raw_params(key):
    """Synthetic parameters with the same layouts as the PyTorch module."""
    ks = jax.random.split(key, 6)
    p = {}
    p["w1"] = jax.random.normal(ks[0], (C1, IN_CHANNELS, 3, 3), jnp.float32) * 0.1
    p["b1"] = jax.random.normal(ks[1], (C1,), jnp.float32) * 0.01
    p["gamma1"] = jnp.ones((C1,), jnp.float32)
    p["beta1"] = jnp.zeros((C1,), jnp.float32)
    p["w2"] = jax.random.normal(ks[2], (C2, C1, 3, 3), jnp.float32) * 0.1
    p["b2"] = jax.random.normal(ks[3], (C2,), jnp.float32) * 0.01
    p["gamma2"] = jnp.ones((C2,), jnp.float32)
    p["beta2"] = jnp.zeros((C2,), jnp.float32)
    p["wv"] = jax.random.normal(ks[4], (EMBEDDING_DIM, C2, 1, 1), jnp.float32) * 0.1
    p["bv"] = jax.random.normal(ks[5], (EMBEDDING_DIM,), jnp.float32) * 0.01
    return p


def fold_params(raw):
    """One-time weight preprocessing (outside the jitted step)."""
    w1_hwio = np.transpose(np.asarray(raw["w1"]), (2, 3, 1, 0))   # (3,3,1,C1)
    w2_hwio = np.transpose(np.asarray(raw["w2"]), (2, 3, 1, 0))   # (3,3,C1,C2)
    wv_oi = np.asarray(raw["wv"])[:, :, 0, 0]                     # (E, C2)

    W1 = _conv_fold(w1_hwio * (1.0 / 255.0), IMAGE_SIZE, IMAGE_SIZE, 2)   # (256,1024)
    c1 = _conv1_offset(w1_hwio, np.asarray(raw["b1"]), IMAGE_SIZE, IMAGE_SIZE, 2)
    W2 = _conv_fold(w2_hwio, H1, H1, 2)                                    # (1024,512)
    # conv2 bias b2 intentionally dropped: absorbed exactly by train-mode BN.
    W3, b3 = _prevq_fold(wv_oi, np.asarray(raw["bv"]))                     # (512,256)

    # Pre-broadcast BN affine params to column width (col = p*C + c -> gamma[c])
    # and pack them with the conv1 offset into one slab per BN (fewer DMAs).
    gamma1_w = np.tile(np.asarray(raw["gamma1"], np.float32), P1)[None, :]   # (1,1024)
    beta1_w = np.tile(np.asarray(raw["beta1"], np.float32), P1)[None, :]
    slab1 = np.concatenate([c1, gamma1_w, beta1_w], axis=0)                  # (3,1024)

    gamma2_w = np.tile(np.asarray(raw["gamma2"], np.float32), P2)[None, :]   # (1,512)
    beta2_w = np.tile(np.asarray(raw["beta2"], np.float32), P2)[None, :]
    slab2 = np.concatenate([gamma2_w, beta2_w], axis=0)                      # (2,512)

    return dict(
        w1=jnp.asarray(W1, jnp.bfloat16),
        w2=jnp.asarray(W2, jnp.bfloat16),
        w3=jnp.asarray(W3, jnp.bfloat16),
        slab1=jnp.asarray(slab1, jnp.float32),
        slab2=jnp.asarray(slab2, jnp.float32),
        b3=jnp.asarray(b3, jnp.float32),
    )


# ------------------------------- forward pass --------------------------------
def encoder_forward(x, params):
    """x: (..., image_size, image_size) raw pixels -> (..., embedding_dim*eh*ew)."""
    batch_shape = x.shape[:-2]
    if not batch_shape:
        batch_shape = (1,)
    x2d = x.reshape(-1, IMAGE_SIZE * IMAGE_SIZE).astype(jnp.float32)
    n = x2d.shape[0]

    out2d = pl.pallas_call(
        encoder_kernel,
        out_shape=jax.ShapeDtypeStruct((n, LOUT), jnp.float32),
        in_specs=[_VMEM] * 7,
        out_specs=_VMEM,
    )(x2d, params["w1"], params["w2"], params["w3"],
      params["slab1"], params["slab2"], params["b3"])

    return out2d.reshape(*batch_shape, -1)


# --------------------------- pure-JAX reference ------------------------------
def reference_forward(x, raw):
    batch_shape = x.shape[:-2] or (1,)
    y = x.reshape(-1, IMAGE_SIZE, IMAGE_SIZE).astype(jnp.float32)
    y = y / 255.0 - 0.5                       # assumed pixel_normalization
    y = y[:, None]                            # NCHW, C=1
    convs = [(raw["w1"], raw["b1"], raw["gamma1"], raw["beta1"]),
             (raw["w2"], raw["b2"], raw["gamma2"], raw["beta2"])]
    for w, b, gamma, beta in convs:
        h = y.shape[2]
        out = -(-h // 2)
        pad = max((out - 1) * 2 + 3 - h, 0)
        y = jnp.pad(y, ((0, 0), (0, 0),
                        (pad // 2, pad - pad // 2), (pad // 2, pad - pad // 2)))
        y = jax.lax.conv_general_dilated(
            y, w, window_strides=(2, 2), padding="VALID",
            dimension_numbers=("NCHW", "OIHW", "NCHW")) + b[None, :, None, None]
        mean = jnp.mean(y, axis=(0, 2, 3), keepdims=True)
        var = jnp.mean((y - mean) ** 2, axis=(0, 2, 3), keepdims=True)
        y = (y - mean) * jax.lax.rsqrt(var + BN_EPS)
        y = y * gamma[None, :, None, None] + beta[None, :, None, None]
        y = jnp.maximum(y, 0.0)
    y = jax.lax.conv_general_dilated(
        y, raw["wv"], window_strides=(1, 1), padding="VALID",
        dimension_numbers=("NCHW", "OIHW", "NCHW")) + raw["bv"][None, :, None, None]
    return y.reshape(*batch_shape, -1)


# ----------------------------------- main -------------------------------------
if __name__ == "__main__":
    key = jax.random.PRNGKey(0)
    k_x, k_p = jax.random.split(key)

    # (batch, horizon, image_size, image_size) raw pixels in [0, 255]
    x = jax.random.uniform(k_x, (2, 3, IMAGE_SIZE, IMAGE_SIZE),
                           jnp.float32, 0.0, 255.0)
    raw = init_raw_params(k_p)
    folded = fold_params(raw)                 # one-time weight preprocessing

    fwd = jax.jit(encoder_forward)
    out = fwd(x, folded)
    jax.block_until_ready(out)

    expected = (2, 3, EMBEDDING_DIM * EMBED_IMAGE_SIZE * EMBED_IMAGE_SIZE)
    assert out.shape == expected, (out.shape, expected)
    assert bool(jnp.all(jnp.isfinite(out)))

    # correctness vs pure-JAX reference (loose tol: folded weights are bf16)
    ref = reference_forward(x, raw)
    max_err = float(jnp.max(jnp.abs(out - ref)))
    assert max_err < 0.1, f"max abs err vs reference: {max_err}"

    print("KERNEL_OK")
</pallas_src>

<mosaic_0001>
module attributes {stable_mosaic.version = 11 : i64} {
  func.func @encoder_kernel(%arg0: memref<6x256xf32, #tpu.memory_space<vmem>>, %arg1: memref<256x1024xbf16, #tpu.memory_space<vmem>>, %arg2: memref<1024x512xbf16, #tpu.memory_space<vmem>>, %arg3: memref<512x256xbf16, #tpu.memory_space<vmem>>, %arg4: memref<3x1024xf32, #tpu.memory_space<vmem>>, %arg5: memref<2x512xf32, #tpu.memory_space<vmem>>, %arg6: memref<1x256xf32, #tpu.memory_space<vmem>>, %arg7: memref<6x256xf32, #tpu.memory_space<vmem>>) attributes {dimension_semantics = [], scalar_prefetch = 0 : i64, scratch_operands = 0 : i64, tpu.core_type = #tpu.core_type<tc>} {
    %c0 = arith.constant 0 : index
    %c0_0 = arith.constant 0 : index
    %0 = vector.load %arg4[%c0, %c0_0] : memref<3x1024xf32, #tpu.memory_space<vmem>>, vector<3x1024xf32>
    %c0_1 = arith.constant 0 : index
    %c0_2 = arith.constant 0 : index
    %1 = vector.load %arg5[%c0_1, %c0_2] : memref<2x512xf32, #tpu.memory_space<vmem>>, vector<2x512xf32>
    %c0_3 = arith.constant 0 : index
    %c0_4 = arith.constant 0 : index
    %2 = vector.load %arg0[%c0_3, %c0_4] : memref<6x256xf32, #tpu.memory_space<vmem>>, vector<6x256xf32>
    %3 = arith.truncf %2 : vector<6x256xf32> to vector<6x256xbf16>
    %c0_5 = arith.constant 0 : index
    %c0_6 = arith.constant 0 : index
    %4 = vector.load %arg1[%c0_5, %c0_6] : memref<256x1024xbf16, #tpu.memory_space<vmem>>, vector<256x1024xbf16>
    %cst = arith.constant dense<0.000000e+00> : vector<6x1024xf32>
    %5 = tpu.matmul %3, %4, %cst {dimension_numbers = #tpu.dot_dimension_numbers<[1], [0], [0], [1], [0, 0, 1, 1], [], []>} : vector<6x256xbf16>, vector<256x1024xbf16>, vector<6x1024xf32> -> vector<6x1024xf32>
    %6 = vector.extract_strided_slice %0 {offsets = [0, 0], sizes = [1, 1024], strides = [1, 1]} : vector<3x1024xf32> to vector<1x1024xf32>
    %7 = vector.broadcast %6 : vector<1x1024xf32> to vector<6x1024xf32>
    %8 = arith.addf %5, %7 : vector<6x1024xf32>
    %9 = vector.extract_strided_slice %0 {offsets = [1, 0], sizes = [1, 1024], strides = [1, 1]} : vector<3x1024xf32> to vector<1x1024xf32>
    %10 = vector.extract_strided_slice %0 {offsets = [2, 0], sizes = [1, 1024], strides = [1, 1]} : vector<3x1024xf32> to vector<1x1024xf32>
    %cst_7 = arith.constant dense<0.000000e+00> : vector<1024xf32>
    %11 = vector.multi_reduction <add>, %8, %cst_7 [0] : vector<6x1024xf32> to vector<1024xf32>
    %12 = vector.shape_cast %11 : vector<1024xf32> to vector<1x1024xf32>
    %13 = arith.mulf %8, %8 : vector<6x1024xf32>
    %cst_8 = arith.constant dense<0.000000e+00> : vector<1024xf32>
    %14 = vector.multi_reduction <add>, %13, %cst_8 [0] : vector<6x1024xf32> to vector<1024xf32>
    %15 = vector.shape_cast %14 : vector<1024xf32> to vector<1x1024xf32>
    %16 = tpu.concatenate %12, %15 in 0 : vector<1x1024xf32>, vector<1x1024xf32> -> vector<2x1024xf32>
    %c16_i32 = arith.constant 16 : i32
    %17 = tpu.dynamic_rotate %16 by %c16_i32 dim 1 : vector<2x1024xf32>, i32 -> vector<2x1024xf32>
    %18 = arith.addf %16, %17 : vector<2x1024xf32>
    %c32_i32 = arith.constant 32 : i32
    %19 = tpu.dynamic_rotate %18 by %c32_i32 dim 1 : vector<2x1024xf32>, i32 -> vector<2x1024xf32>
    %20 = arith.addf %18, %19 : vector<2x1024xf32>
    %c64_i32 = arith.constant 64 : i32
    %21 = tpu.dynamic_rotate %20 by %c64_i32 dim 1 : vector<2x1024xf32>, i32 -> vector<2x1024xf32>
    %22 = arith.addf %20, %21 : vector<2x1024xf32>
    %c128_i32 = arith.constant 128 : i32
    %23 = tpu.dynamic_rotate %22 by %c128_i32 dim 1 : vector<2x1024xf32>, i32 -> vector<2x1024xf32>
    %24 = arith.addf %22, %23 : vector<2x1024xf32>
    %c256_i32 = arith.constant 256 : i32
    %25 = tpu.dynamic_rotate %24 by %c256_i32 dim 1 : vector<2x1024xf32>, i32 -> vector<2x1024xf32>
    %26 = arith.addf %24, %25 : vector<2x1024xf32>
    %c512_i32 = arith.constant 512 : i32
    %27 = tpu.dynamic_rotate %26 by %c512_i32 dim 1 : vector<2x1024xf32>, i32 -> vector<2x1024xf32>
    %28 = arith.addf %26, %27 : vector<2x1024xf32>
    %cst_9 = arith.constant 0.00260416674 : f32
    %29 = vector.broadcast %cst_9 : f32 to vector<2x1024xf32>
    %30 = arith.mulf %28, %29 : vector<2x1024xf32>
    %31 = vector.extract_strided_slice %30 {offsets = [0, 0], sizes = [1, 1024], strides = [1, 1]} : vector<2x1024xf32> to vector<1x1024xf32>
    %32 = vector.extract_strided_slice %30 {offsets = [1, 0], sizes = [1, 1024], strides = [1, 1]} : vector<2x1024xf32> to vector<1x1024xf32>
    %33 = arith.mulf %31, %31 : vector<1x1024xf32>
    %34 = arith.subf %32, %33 : vector<1x1024xf32>
    %cst_10 = arith.constant 0.000000e+00 : f32
    %35 = vector.broadcast %cst_10 : f32 to vector<1x1024xf32>
    %36 = arith.maximumf %34, %35 : vector<1x1024xf32>
    %cst_11 = arith.constant 9.99999974E-6 : f32
    %37 = vector.broadcast %cst_11 : f32 to vector<1x1024xf32>
    %38 = arith.addf %36, %37 : vector<1x1024xf32>
    %39 = math.rsqrt %38 : vector<1x1024xf32>
    %40 = arith.mulf %9, %39 : vector<1x1024xf32>
    %41 = arith.mulf %31, %40 : vector<1x1024xf32>
    %42 = arith.subf %10, %41 : vector<1x1024xf32>
    %43 = vector.broadcast %40 : vector<1x1024xf32> to vector<6x1024xf32>
    %44 = arith.mulf %8, %43 : vector<6x1024xf32>
    %45 = vector.broadcast %42 : vector<1x1024xf32> to vector<6x1024xf32>
    %46 = arith.addf %44, %45 : vector<6x1024xf32>
    %cst_12 = arith.constant 0.000000e+00 : f32
    %47 = vector.broadcast %cst_12 : f32 to vector<6x1024xf32>
    %48 = arith.maximumf %46, %47 : vector<6x1024xf32>
    %49 = arith.truncf %48 : vector<6x1024xf32> to vector<6x1024xbf16>
    %c0_13 = arith.constant 0 : index
    %c0_14 = arith.constant 0 : index
    %50 = vector.load %arg2[%c0_13, %c0_14] : memref<1024x512xbf16, #tpu.memory_space<vmem>>, vector<1024x512xbf16>
    %cst_15 = arith.constant dense<0.000000e+00> : vector<6x512xf32>
    %51 = tpu.matmul %49, %50, %cst_15 {dimension_numbers = #tpu.dot_dimension_numbers<[1], [0], [0], [1], [0, 0, 1, 1], [], []>} : vector<6x1024xbf16>, vector<1024x512xbf16>, vector<6x512xf32> -> vector<6x512xf32>
    %52 = vector.extract_strided_slice %1 {offsets = [0, 0], sizes = [1, 512], strides = [1, 1]} : vector<2x512xf32> to vector<1x512xf32>
    %53 = vector.extract_strided_slice %1 {offsets = [1, 0], sizes = [1, 512], strides = [1, 1]} : vector<2x512xf32> to vector<1x512xf32>
    %cst_16 = arith.constant dense<0.000000e+00> : vector<512xf32>
    %54 = vector.multi_reduction <add>, %51, %cst_16 [0] : vector<6x512xf32> to vector<512xf32>
    %55 = vector.shape_cast %54 : vector<512xf32> to vector<1x512xf32>
    %56 = arith.mulf %51, %51 : vector<6x512xf32>
    %cst_17 = arith.constant dense<0.000000e+00> : vector<512xf32>
    %57 = vector.multi_reduction <add>, %56, %cst_17 [0] : vector<6x512xf32> to vector<512xf32>
    %58 = vector.shape_cast %57 : vector<512xf32> to vector<1x512xf32>
    %59 = tpu.concatenate %55, %58 in 0 : vector<1x512xf32>, vector<1x512xf32> -> vector<2x512xf32>
    %c32_i32_18 = arith.constant 32 : i32
    %60 = tpu.dynamic_rotate %59 by %c32_i32_18 dim 1 : vector<2x512xf32>, i32 -> vector<2x512xf32>
    %61 = arith.addf %59, %60 : vector<2x512xf32>
    %c64_i32_19 = arith.constant 64 : i32
    %62 = tpu.dynamic_rotate %61 by %c64_i32_19 dim 1 : vector<2x512xf32>, i32 -> vector<2x512xf32>
    %63 = arith.addf %61, %62 : vector<2x512xf32>
    %c128_i32_20 = arith.constant 128 : i32
    %64 = tpu.dynamic_rotate %63 by %c128_i32_20 dim 1 : vector<2x512xf32>, i32 -> vector<2x512xf32>
    %65 = arith.addf %63, %64 : vector<2x512xf32>
    %c256_i32_21 = arith.constant 256 : i32
    %66 = tpu.dynamic_rotate %65 by %c256_i32_21 dim 1 : vector<2x512xf32>, i32 -> vector<2x512xf32>
    %67 = arith.addf %65, %66 : vector<2x512xf32>
    %cst_22 = arith.constant 0.010416667 : f32
    %68 = vector.broadcast %cst_22 : f32 to vector<2x512xf32>
    %69 = arith.mulf %67, %68 : vector<2x512xf32>
    %70 = vector.extract_strided_slice %69 {offsets = [0, 0], sizes = [1, 512], strides = [1, 1]} : vector<2x512xf32> to vector<1x512xf32>
    %71 = vector.extract_strided_slice %69 {offsets = [1, 0], sizes = [1, 512], strides = [1, 1]} : vector<2x512xf32> to vector<1x512xf32>
    %72 = arith.mulf %70, %70 : vector<1x512xf32>
    %73 = arith.subf %71, %72 : vector<1x512xf32>
    %cst_23 = arith.constant 0.000000e+00 : f32
    %74 = vector.broadcast %cst_23 : f32 to vector<1x512xf32>
    %75 = arith.maximumf %73, %74 : vector<1x512xf32>
    %cst_24 = arith.constant 9.99999974E-6 : f32
    %76 = vector.broadcast %cst_24 : f32 to vector<1x512xf32>
    %77 = arith.addf %75, %76 : vector<1x512xf32>
    %78 = math.rsqrt %77 : vector<1x512xf32>
    %79 = arith.mulf %52, %78 : vector<1x512xf32>
    %80 = arith.mulf %70, %79 : vector<1x512xf32>
    %81 = arith.subf %53, %80 : vector<1x512xf32>
    %82 = vector.broadcast %79 : vector<1x512xf32> to vector<6x512xf32>
    %83 = arith.mulf %51, %82 : vector<6x512xf32>
    %84 = vector.broadcast %81 : vector<1x512xf32> to vector<6x512xf32>
    %85 = arith.addf %83, %84 : vector<6x512xf32>
    %cst_25 = arith.constant 0.000000e+00 : f32
    %86 = vector.broadcast %cst_25 : f32 to vector<6x512xf32>
    %87 = arith.maximumf %85, %86 : vector<6x512xf32>
    %88 = arith.truncf %87 : vector<6x512xf32> to vector<6x512xbf16>
    %c0_26 = arith.constant 0 : index
    %c0_27 = arith.constant 0 : index
    %89 = vector.load %arg3[%c0_26, %c0_27] : memref<512x256xbf16, #tpu.memory_space<vmem>>, vector<512x256xbf16>
    %cst_28 = arith.constant dense<0.000000e+00> : vector<6x256xf32>
    %90 = tpu.matmul %88, %89, %cst_28 {dimension_numbers = #tpu.dot_dimension_numbers<[1], [0], [0], [1], [0, 0, 1, 1], [], []>} : vector<6x512xbf16>, vector<512x256xbf16>, vector<6x256xf32> -> vector<6x256xf32>
    %c0_29 = arith.constant 0 : index
    %c0_30 = arith.constant 0 : index
    %91 = vector.load %arg6[%c0_29, %c0_30] : memref<1x256xf32, #tpu.memory_space<vmem>>, vector<1x256xf32>
    %92 = vector.broadcast %91 : vector<1x256xf32> to vector<6x256xf32>
    %93 = arith.addf %90, %92 : vector<6x256xf32>
    %c0_31 = arith.constant 0 : index
    %c0_32 = arith.constant 0 : index
    %94 = vector.load %arg7[%c0_31, %c0_32] : memref<6x256xf32, #tpu.memory_space<vmem>>, vector<6x256xf32>
    tpu.vector_store %arg7[%c0_31, %c0_32], %93 {strides = array<i32>} : memref<6x256xf32, #tpu.memory_space<vmem>>, vector<6x256xf32>,
    return
  }
}

</mosaic_0001>

<llo_original>
// kernel: encoder_forward.1
$region0: #{encoder_forward.1}
  #allocation0 [shape = 'u32[]', space=smem, size = 0x4, offset = 0x4, fixed_abs, tag = 'smem constant byte address 0x4 - core index']
  #allocation1 [shape = 'u32[72,128]{1,0:T(1,128)}', space=vmem, size = 0x9000, scoped, tag = 'internal scratch']
  %s0 = inlined_call_operand.vmem [shape: f32[6,256], index: 0, kind: input, shape index: {}]
  %s1 = inlined_call_operand.hbm [shape: bf16[256,1024], index: 1, kind: input, shape index: {}]
  %s2 = inlined_call_operand.hbm [shape: bf16[1024,512], index: 2, kind: input, shape index: {}]
  %s3 = inlined_call_operand.hbm [shape: bf16[512,256], index: 3, kind: input, shape index: {}]
  %s4 = inlined_call_operand.vmem [shape: f32[3,1024], index: 4, kind: input, shape index: {}]
  %s5 = inlined_call_operand.vmem [shape: f32[2,512], index: 5, kind: input, shape index: {}]
  %s6 = inlined_call_operand.vmem [shape: f32[1,256], index: 6, kind: input, shape index: {}]
  %s7 = inlined_call_operand.vmem [shape: f32[6,256], index: 7, kind: output, shape index: {}]
  %s8 = sld [smem:[#allocation0]]
  $region50: #{encoder_forward.1} parent=0
    _
  %s10 = ssub.s32 1, %s8
  %s11 = scalar_select 0, %s10, %s8
  $region1: #{encoder_forward.1} parent=0
    #allocation2 [shape = 'u8[524288]{0}', space=vmem, size = 0x80000, scoped, tag = 'input window, operand 1, single buffered']
    #allocation3 [shape = 's32[1]{0}', space=sflag, size = 0x4, scoped, tag = 'scoped memory for encoder_forward.1']
    #allocation4 [shape = 'u8[1048576]{0}', space=vmem, size = 0x100000, scoped, tag = 'input window, operand 2, single buffered']
    #allocation5 [shape = 's32[1]{0}', space=sflag, size = 0x4, scoped, tag = 'scoped memory for encoder_forward.1']
    #allocation6 [shape = 'u8[262144]{0}', space=vmem, size = 0x40000, scoped, tag = 'input window, operand 3, single buffered']
    %12 = vsyncpa [#allocation3], 0
    %13 = vsyncpa [#allocation5], 0
    // Predicated region
    $region2: #{encoder_forward.1} parent=1 // pred_check
      _
    $region3: #{encoder_forward.1} parent=1 // pred_check_branch
      %15 = sbr.rel (0) target = $region5
    $region4: #{encoder_forward.1} parent=1 // pred_region
      _
    $region5: #{encoder_forward.1} parent=1 // pred_fallthru
      _
    // Predicated region
    $region6: #{encoder_forward.1} parent=1 // pred_check
      _
    $region7: #{encoder_forward.1} parent=1 // pred_check_branch
      %17 = sbr.rel (0) target = $region9
    $region8: #{encoder_forward.1} parent=1 // pred_region
      %19 = vsyncadd [#allocation3], 0
      %s20 = sshll.u32 %s1, 4
      %s21 = int_to_ptr.hbm [resolvable:$true] %s20
      %s22 = sshll.u32 [#allocation2], 4
      %s23 = int_to_ptr.vmem [resolvable:$true] %s22
      %28 = dma.hbm_to_vmem [thread:$0]  %s21, 16384, %s23, [#allocation3], 512, 512, 32
    $region9: #{encoder_forward.1} parent=1 // pred_fallthru
      _
    // Predicated region
    $region10: #{encoder_forward.1} parent=1 // pred_check
      _
    $region11: #{encoder_forward.1} parent=1 // pred_check_branch
      %30 = sbr.rel (0) target = $region13
    $region12: #{encoder_forward.1} parent=1 // pred_region
      %32 = vsyncadd [#allocation5], 0
      %s33 = sshll.u32 %s2, 4
      %s34 = int_to_ptr.hbm [resolvable:$true] %s33
      %s35 = sshll.u32 [#allocation4], 4
      %s36 = int_to_ptr.vmem [resolvable:$true] %s35
      %41 = dma.hbm_to_vmem [thread:$0]  %s34, 32768, %s36, [#allocation5], 256, 256, 16
    $region13: #{encoder_forward.1} parent=1 // pred_fallthru
      _
    // Predicated region
    $region14: #{encoder_forward.1} parent=1 // pred_check
      _
    $region15: #{encoder_forward.1} parent=1 // pred_check_branch
      %43 = sbr.rel (0) target = $region17
    $region16: #{encoder_forward.1} parent=1 // pred_region
      %45 = vsyncadd [#allocation5], 0
      %s46 = sshll.u32 %s3, 4
      %s47 = int_to_ptr.hbm [resolvable:$true] %s46
      %s48 = sshll.u32 [#allocation6], 4
      %s49 = int_to_ptr.vmem [resolvable:$true] %s48
      %54 = dma.hbm_to_vmem [thread:$0]  %s47, 8192, %s49, [#allocation5], 128, 128, 8
    $region17: #{encoder_forward.1} parent=1 // pred_fallthru
      _
    // Predicated region
    $region18: #{encoder_forward.1} parent=1 // pred_check
      _
    $region19: #{encoder_forward.1} parent=1 // pred_check_branch
      %56 = sbr.rel (0) target = $region21
    $region20: #{encoder_forward.1} parent=1 // pred_region
      _
    $region21: #{encoder_forward.1} parent=1 // pred_fallthru
      _
    // Predicated region
    $region22: #{encoder_forward.1} parent=1 // pred_check
      _
    $region23: #{encoder_forward.1} parent=1 // pred_check_branch
      %58 = sbr.rel (0) target = $region25
    $region24: #{encoder_forward.1} parent=1 // pred_region
      _
    $region25: #{encoder_forward.1} parent=1 // pred_fallthru
      _
    // Predicated region
    $region26: #{encoder_forward.1} parent=1 // pred_check
      _
    $region27: #{encoder_forward.1} parent=1 // pred_check_branch
      %60 = sbr.rel (0) target = $region29
    $region28: #{encoder_forward.1} parent=1 // pred_region
      _
    $region29: #{encoder_forward.1} parent=1 // pred_fallthru
      _
    // Predicated region
    $region30: #{encoder_forward.1} parent=1 // pred_check
      _
    $region31: #{encoder_forward.1} parent=1 // pred_check_branch
      %62 = sbr.rel (0) target = $region33
    $region32: #{encoder_forward.1} parent=1 // pred_region
      %64 = dma.done [#allocation3], 16384
    $region33: #{encoder_forward.1} parent=1 // pred_fallthru
      _
    // Predicated region
    $region34: #{encoder_forward.1} parent=1 // pred_check
      _
    $region35: #{encoder_forward.1} parent=1 // pred_check_branch
      %66 = sbr.rel (0) target = $region37
    $region36: #{encoder_forward.1} parent=1 // pred_region
      %68 = dma.done [#allocation5], 32768
    $region37: #{encoder_forward.1} parent=1 // pred_fallthru
      _
    // Predicated region
    $region38: #{encoder_forward.1} parent=1 // pred_check
      _
    $region39: #{encoder_forward.1} parent=1 // pred_check_branch
      %70 = sbr.rel (0) target = $region41
    $region40: #{encoder_forward.1} parent=1 // pred_region
      %72 = dma.done [#allocation5], 8192
    $region41: #{encoder_forward.1} parent=1 // pred_fallthru
      _
    %v73 = vld [vmem:[%s4] sm:$0x77]
    %v74 = vld [vmem:[%s4 + $0x8] sm:$0x77]
    %v75 = vld [vmem:[%s4 + $0x10] sm:$0x77]
    %v76 = vld [vmem:[%s4 + $0x18] sm:$0x77]
    %v77 = vld [vmem:[%s5] sm:$0xff]
    %v78 = vld [vmem:[%s0] sm:$0x3f]
    %v79 = vld [vmem:[%s0 + $0x8] sm:$0x3f]
    %v80 = vpack.c.bf16 %v78, %v78
    %v81 = vpack.c.bf16 %v79, %v79
    %v82 = vld [vmem:[#allocation2] sm:$0xff]
    %v83 = vld [vmem:[#allocation2 + $0x8] sm:$0xff]
    %v84 = vld [vmem:[#allocation2 + $0x10] sm:$0xff]
    %v85 = vld [vmem:[#allocation2 + $0x18] sm:$0xff]
    %v86 = vld [vmem:[#allocation2 + $0x20] sm:$0xff]
    %v87 = vld [vmem:[#allocation2 + $0x28] sm:$0xff]
    %v88 = vld [vmem:[#allocation2 + $0x30] sm:$0xff]
    %v89 = vld [vmem:[#allocation2 + $0x38] sm:$0xff]
    %v90 = vld [vmem:[#allocation2 + $0x40] sm:$0xff]
    %v91 = vld [vmem:[#allocation2 + $0x48] sm:$0xff]
    %v92 = vld [vmem:[#allocation2 + $0x50] sm:$0xff]
    %v93 = vld [vmem:[#allocation2 + $0x58] sm:$0xff]
    %v94 = vld [vmem:[#allocation2 + $0x60] sm:$0xff]
    %v95 = vld [vmem:[#allocation2 + $0x68] sm:$0xff]
    %v96 = vld [vmem:[#allocation2 + $0x70] sm:$0xff]
    %v97 = vld [vmem:[#allocation2 + $0x78] sm:$0xff]
    %v98 = vld [vmem:[#allocation2 + $0x80] sm:$0xff]
    %v99 = vld [vmem:[#allocation2 + $0x88] sm:$0xff]
    %v100 = vld [vmem:[#allocation2 + $0x90] sm:$0xff]
    %v101 = vld [vmem:[#allocation2 + $0x98] sm:$0xff]
    %v102 = vld [vmem:[#allocation2 + $0xa0] sm:$0xff]
    %v103 = vld [vmem:[#allocation2 + $0xa8] sm:$0xff]
    %v104 = vld [vmem:[#allocation2 + $0xb0] sm:$0xff]
    %v105 = vld [vmem:[#allocation2 + $0xb8] sm:$0xff]
    %v106 = vld [vmem:[#allocation2 + $0xc0] sm:$0xff]
    %v107 = vld [vmem:[#allocation2 + $0xc8] sm:$0xff]
    %v108 = vld [vmem:[#allocation2 + $0xd0] sm:$0xff]
    %v109 = vld [vmem:[#allocation2 + $0xd8] sm:$0xff]
    %v110 = vld [vmem:[#allocation2 + $0xe0] sm:$0xff]
    %v111 = vld [vmem:[#allocation2 + $0xe8] sm:$0xff]
    %v112 = vld [vmem:[#allocation2 + $0xf0] sm:$0xff]
    %v113 = vld [vmem:[#allocation2 + $0xf8] sm:$0xff]
    %v114 = vld [vmem:[#allocation2 + $0x100] sm:$0xff]
    %v115 = vld [vmem:[#allocation2 + $0x108] sm:$0xff]
    %v116 = vld [vmem:[#allocation2 + $0x110] sm:$0xff]
    %v117 = vld [vmem:[#allocation2 + $0x118] sm:$0xff]
    %v118 = vld [vmem:[#allocation2 + $0x120] sm:$0xff]
    %v119 = vld [vmem:[#allocation2 + $0x128] sm:$0xff]
    %v120 = vld [vmem:[#allocation2 + $0x130] sm:$0xff]
    %v121 = vld [vmem:[#allocation2 + $0x138] sm:$0xff]
    %v122 = vld [vmem:[#allocation2 + $0x140] sm:$0xff]
    %v123 = vld [vmem:[#allocation2 + $0x148] sm:$0xff]
    %v124 = vld [vmem:[#allocation2 + $0x150] sm:$0xff]
    %v125 = vld [vmem:[#allocation2 + $0x158] sm:$0xff]
    %v126 = vld [vmem:[#allocation2 + $0x160] sm:$0xff]
    %v127 = vld [vmem:[#allocation2 + $0x168] sm:$0xff]
    %v128 = vld [vmem:[#allocation2 + $0x170] sm:$0xff]
    %v129 = vld [vmem:[#allocation2 + $0x178] sm:$0xff]
    %v130 = vld [vmem:[#allocation2 + $0x180] sm:$0xff]
    %v131 = vld [vmem:[#allocation2 + $0x188] sm:$0xff]
    %v132 = vld [vmem:[#allocation2 + $0x190] sm:$0xff]
    %v133 = vld [vmem:[#allocation2 + $0x198] sm:$0xff]
    %v134 = vld [vmem:[#allocation2 + $0x1a0] sm:$0xff]
    %v135 = vld [vmem:[#allocation2 + $0x1a8] sm:$0xff]
    %v136 = vld [vmem:[#allocation2 + $0x1b0] sm:$0xff]
    %v137 = vld [vmem:[#allocation2 + $0x1b8] sm:$0xff]
    %v138 = vld [vmem:[#allocation2 + $0x1c0] sm:$0xff]
    %v139 = vld [vmem:[#allocation2 + $0x1c8] sm:$0xff]
    %v140 = vld [vmem:[#allocation2 + $0x1d0] sm:$0xff]
    %v141 = vld [vmem:[#allocation2 + $0x1d8] sm:$0xff]
    %v142 = vld [vmem:[#allocation2 + $0x1e0] sm:$0xff]
    %v143 = vld [vmem:[#allocation2 + $0x1e8] sm:$0xff]
    %v144 = vld [vmem:[#allocation2 + $0x1f0] sm:$0xff]
    %v145 = vld [vmem:[#allocation2 + $0x1f8] sm:$0xff]
    %v146 = vld [vmem:[#allocation2 + $0x200] sm:$0xff]
    %v147 = vld [vmem:[#allocation2 + $0x208] sm:$0xff]
    %v148 = vld [vmem:[#allocation2 + $0x210] sm:$0xff]
    %v149 = vld [vmem:[#allocation2 + $0x218] sm:$0xff]
    %v150 = vld [vmem:[#allocation2 + $0x220] sm:$0xff]
    %v151 = vld [vmem:[#allocation2 + $0x228] sm:$0xff]
    %v152 = vld [vmem:[#allocation2 + $0x230] sm:$0xff]
    %v153 = vld [vmem:[#allocation2 + $0x238] sm:$0xff]
    %v154 = vld [vmem:[#allocation2 + $0x240] sm:$0xff]
    %v155 = vld [vmem:[#allocation2 + $0x248] sm:$0xff]
    %v156 = vld [vmem:[#allocation2 + $0x250] sm:$0xff]
    %v157 = vld [vmem:[#allocation2 + $0x258] sm:$0xff]
    %v158 = vld [vmem:[#allocation2 + $0x260] sm:$0xff]
    %v159 = vld [vmem:[#allocation2 + $0x268] sm:$0xff]
    %v160 = vld [vmem:[#allocation2 + $0x270] sm:$0xff]
    %v161 = vld [vmem:[#allocation2 + $0x278] sm:$0xff]
    %v162 = vld [vmem:[#allocation2 + $0x280] sm:$0xff]
    %v163 = vld [vmem:[#allocation2 + $0x288] sm:$0xff]
    %v164 = vld [vmem:[#allocation2 + $0x290] sm:$0xff]
    %v165 = vld [vmem:[#allocation2 + $0x298] sm:$0xff]
    %v166 = vld [vmem:[#allocation2 + $0x2a0] sm:$0xff]
    %v167 = vld [vmem:[#allocation2 + $0x2a8] sm:$0xff]
    %v168 = vld [vmem:[#allocation2 + $0x2b0] sm:$0xff]
    %v169 = vld [vmem:[#allocation2 + $0x2b8] sm:$0xff]
    %v170 = vld [vmem:[#allocation2 + $0x2c0] sm:$0xff]
    %v171 = vld [vmem:[#allocation2 + $0x2c8] sm:$0xff]
    %v172 = vld [vmem:[#allocation2 + $0x2d0] sm:$0xff]
    %v173 = vld [vmem:[#allocation2 + $0x2d8] sm:$0xff]
    %v174 = vld [vmem:[#allocation2 + $0x2e0] sm:$0xff]
    %v175 = vld [vmem:[#allocation2 + $0x2e8] sm:$0xff]
    %v176 = vld [vmem:[#allocation2 + $0x2f0] sm:$0xff]
    %v177 = vld [vmem:[#allocation2 + $0x2f8] sm:$0xff]
    %v178 = vld [vmem:[#allocation2 + $0x300] sm:$0xff]
    %v179 = vld [vmem:[#allocation2 + $0x308] sm:$0xff]
    %v180 = vld [vmem:[#allocation2 + $0x310] sm:$0xff]
    %v181 = vld [vmem:[#allocation2 + $0x318] sm:$0xff]
    %v182 = vld [vmem:[#allocation2 + $0x320] sm:$0xff]
    %v183 = vld [vmem:[#allocation2 + $0x328] sm:$0xff]
    %v184 = vld [vmem:[#allocation2 + $0x330] sm:$0xff]
    %v185 = vld [vmem:[#allocation2 + $0x338] sm:$0xff]
    %v186 = vld [vmem:[#allocation2 + $0x340] sm:$0xff]
    %v187 = vld [vmem:[#allocation2 + $0x348] sm:$0xff]
    %v188 = vld [vmem:[#allocation2 + $0x350] sm:$0xff]
    %v189 = vld [vmem:[#allocation2 + $0x358] sm:$0xff]
    %v190 = vld [vmem:[#allocation2 + $0x360] sm:$0xff]
    %v191 = vld [vmem:[#allocation2 + $0x368] sm:$0xff]
    %v192 = vld [vmem:[#allocation2 + $0x370] sm:$0xff]
    %v193 = vld [vmem:[#allocation2 + $0x378] sm:$0xff]
    %v194 = vld [vmem:[#allocation2 + $0x380] sm:$0xff]
    %v195 = vld [vmem:[#allocation2 + $0x388] sm:$0xff]
    %v196 = vld [vmem:[#allocation2 + $0x390] sm:$0xff]
    %v197 = vld [vmem:[#allocation2 + $0x398] sm:$0xff]
    %v198 = vld [vmem:[#allocation2 + $0x3a0] sm:$0xff]
    %v199 = vld [vmem:[#allocation2 + $0x3a8] sm:$0xff]
    %v200 = vld [vmem:[#allocation2 + $0x3b0] sm:$0xff]
    %v201 = vld [vmem:[#allocation2 + $0x3b8] sm:$0xff]
    %v202 = vld [vmem:[#allocation2 + $0x3c0] sm:$0xff]
    %v203 = vld [vmem:[#allocation2 + $0x3c8] sm:$0xff]
    %v204 = vld [vmem:[#allocation2 + $0x3d0] sm:$0xff]
    %v205 = vld [vmem:[#allocation2 + $0x3d8] sm:$0xff]
    %v206 = vld [vmem:[#allocation2 + $0x3e0] sm:$0xff]
    %v207 = vld [vmem:[#allocation2 + $0x3e8] sm:$0xff]
    %v208 = vld [vmem:[#allocation2 + $0x3f0] sm:$0xff]
    %v209 = vld [vmem:[#allocation2 + $0x3f8] sm:$0xff]
    %v214 = vperm.slane %v73, 0
    %v215 = vperm.slane %v73, 4
    %v216 = vperm.slane %v74, 0
    %v217 = vperm.slane %v74, 4
    %v218 = vperm.slane %v75, 0
    %v219 = vperm.slane %v75, 4
    %v220 = vperm.slane %v76, 0
    %v221 = vperm.slane %v76, 4
    %v230 = vperm.slane %v214, 0
    %v231 = vperm.slane %v215, 0
    %v232 = vperm.slane %v216, 0
    %v233 = vperm.slane %v217, 0
    %v234 = vperm.slane %v218, 0
    %v235 = vperm.slane %v219, 0
    %v236 = vperm.slane %v220, 0
    %v237 = vperm.slane %v221, 0
    %v366 = vunpack.c.l.b16 %v82
    %v367 = vunpack.c.h.b16 %v82
    %v368 = vunpack.c.l.b16 %v83
    %v369 = vunpack.c.h.b16 %v83
    %v370 = vunpack.c.l.b16 %v84
    %v371 = vunpack.c.h.b16 %v84
    %v372 = vunpack.c.l.b16 %v85
    %v373 = vunpack.c.h.b16 %v85
    %v374 = vunpack.c.l.b16 %v86
    %v375 = vunpack.c.h.b16 %v86
    %v376 = vunpack.c.l.b16 %v87
    %v377 = vunpack.c.h.b16 %v87
    %v378 = vunpack.c.l.b16 %v88
    %v379 = vunpack.c.h.b16 %v88
    %v380 = vunpack.c.l.b16 %v89
    %v381 = vunpack.c.h.b16 %v89
    %v382 = vunpack.c.l.b16 %v90
    %v383 = vunpack.c.h.b16 %v90
    %v384 = vunpack.c.l.b16 %v91
    %v385 = vunpack.c.h.b16 %v91
    %v386 = vunpack.c.l.b16 %v92
    %v387 = vunpack.c.h.b16 %v92
    %v388 = vunpack.c.l.b16 %v93
    %v389 = vunpack.c.h.b16 %v93
    %v390 = vunpack.c.l.b16 %v94
    %v391 = vunpack.c.h.b16 %v94
    %v392 = vunpack.c.l.b16 %v95
    %v393 = vunpack.c.h.b16 %v95
    %v394 = vunpack.c.l.b16 %v96
    %v395 = vunpack.c.h.b16 %v96
    %v396 = vunpack.c.l.b16 %v97
    %v397 = vunpack.c.h.b16 %v97
    %v398 = vunpack.c.l.b16 %v98
    %v399 = vunpack.c.h.b16 %v98
    %v400 = vunpack.c.l.b16 %v99
    %v401 = vunpack.c.h.b16 %v99
    %v402 = vunpack.c.l.b16 %v100
    %v403 = vunpack.c.h.b16 %v100
    %v404 = vunpack.c.l.b16 %v101
    %v405 = vunpack.c.h.b16 %v101
    %v406 = vunpack.c.l.b16 %v102
    %v407 = vunpack.c.h.b16 %v102
    %v408 = vunpack.c.l.b16 %v103
    %v409 = vunpack.c.h.b16 %v103
    %v410 = vunpack.c.l.b16 %v104
    %v411 = vunpack.c.h.b16 %v104
    %v412 = vunpack.c.l.b16 %v105
    %v413 = vunpack.c.h.b16 %v105
    %v414 = vunpack.c.l.b16 %v106
    %v415 = vunpack.c.h.b16 %v106
    %v416 = vunpack.c.l.b16 %v107
    %v417 = vunpack.c.h.b16 %v107
    %v418 = vunpack.c.l.b16 %v108
    %v419 = vunpack.c.h.b16 %v108
    %v420 = vunpack.c.l.b16 %v109
    %v421 = vunpack.c.h.b16 %v109
    %v422 = vunpack.c.l.b16 %v110
    %v423 = vunpack.c.h.b16 %v110
    %v424 = vunpack.c.l.b16 %v111
    %v425 = vunpack.c.h.b16 %v111
    %v426 = vunpack.c.l.b16 %v112
    %v427 = vunpack.c.h.b16 %v112
    %v428 = vunpack.c.l.b16 %v113
    %v429 = vunpack.c.h.b16 %v113
    %v430 = vunpack.c.l.b16 %v114
    %v431 = vunpack.c.h.b16 %v114
    %v432 = vunpack.c.l.b16 %v115
    %v433 = vunpack.c.h.b16 %v115
    %v434 = vunpack.c.l.b16 %v116
    %v435 = vunpack.c.h.b16 %v116
    %v436 = vunpack.c.l.b16 %v117
    %v437 = vunpack.c.h.b16 %v117
    %v438 = vunpack.c.l.b16 %v118
    %v439 = vunpack.c.h.b16 %v118
    %v440 = vunpack.c.l.b16 %v119
    %v441 = vunpack.c.h.b16 %v119
    %v442 = vunpack.c.l.b16 %v120
    %v443 = vunpack.c.h.b16 %v120
    %v444 = vunpack.c.l.b16 %v121
    %v445 = vunpack.c.h.b16 %v121
    %v446 = vunpack.c.l.b16 %v122
    %v447 = vunpack.c.h.b16 %v122
    %v448 = vunpack.c.l.b16 %v123
    %v449 = vunpack.c.h.b16 %v123
    %v450 = vunpack.c.l.b16 %v124
    %v451 = vunpack.c.h.b16 %v124
    %v452 = vunpack.c.l.b16 %v125
    %v453 = vunpack.c.h.b16 %v125
    %v454 = vunpack.c.l.b16 %v126
    %v455 = vunpack.c.h.b16 %v126
    %v456 = vunpack.c.l.b16 %v127
    %v457 = vunpack.c.h.b16 %v127
    %v458 = vunpack.c.l.b16 %v128
    %v459 = vunpack.c.h.b16 %v128
    %v460 = vunpack.c.l.b16 %v129
    %v461 = vunpack.c.h.b16 %v129
    %v462 = vunpack.c.l.b16 %v130
    %v463 = vunpack.c.h.b16 %v130
    %v464 = vunpack.c.l.b16 %v131
    %v465 = vunpack.c.h.b16 %v131
    %v466 = vunpack.c.l.b16 %v132
    %v467 = vunpack.c.h.b16 %v132
    %v468 = vunpack.c.l.b16 %v133
    %v469 = vunpack.c.h.b16 %v133
    %v470 = vunpack.c.l.b16 %v134
    %v471 = vunpack.c.h.b16 %v134
    %v472 = vunpack.c.l.b16 %v135
    %v473 = vunpack.c.h.b16 %v135
    %v474 = vunpack.c.l.b16 %v136
    %v475 = vunpack.c.h.b16 %v136
    %v476 = vunpack.c.l.b16 %v137
    %v477 = vunpack.c.h.b16 %v137
    %v478 = vunpack.c.l.b16 %v138
    %v479 = vunpack.c.h.b16 %v138
    %v480 = vunpack.c.l.b16 %v139
    %v481 = vunpack.c.h.b16 %v139
    %v482 = vunpack.c.l.b16 %v140
    %v483 = vunpack.c.h.b16 %v140
    %v484 = vunpack.c.l.b16 %v141
    %v485 = vunpack.c.h.b16 %v141
    %v486 = vunpack.c.l.b16 %v142
    %v487 = vunpack.c.h.b16 %v142
    %v488 = vunpack.c.l.b16 %v143
    %v489 = vunpack.c.h.b16 %v143
    %v490 = vunpack.c.l.b16 %v144
    %v491 = vunpack.c.h.b16 %v144
    %v492 = vunpack.c.l.b16 %v145
    %v493 = vunpack.c.h.b16 %v145
    %v494 = vunpack.c.l.b16 %v146
    %v495 = vunpack.c.h.b16 %v146
    %v496 = vunpack.c.l.b16 %v147
    %v497 = vunpack.c.h.b16 %v147
    %v498 = vunpack.c.l.b16 %v148
    %v499 = vunpack.c.h.b16 %v148
    %v500 = vunpack.c.l.b16 %v149
    %v501 = vunpack.c.h.b16 %v149
    %v502 = vunpack.c.l.b16 %v150
    %v503 = vunpack.c.h.b16 %v150
    %v504 = vunpack.c.l.b16 %v151
    %v505 = vunpack.c.h.b16 %v151
    %v506 = vunpack.c.l.b16 %v152
    %v507 = vunpack.c.h.b16 %v152
    %v508 = vunpack.c.l.b16 %v153
    %v509 = vunpack.c.h.b16 %v153
    %v510 = vunpack.c.l.b16 %v154
    %v511 = vunpack.c.h.b16 %v154
    %v512 = vunpack.c.l.b16 %v155
    %v513 = vunpack.c.h.b16 %v155
    %v514 = vunpack.c.l.b16 %v156
    %v515 = vunpack.c.h.b16 %v156
    %v516 = vunpack.c.l.b16 %v157
    %v517 = vunpack.c.h.b16 %v157
    %v518 = vunpack.c.l.b16 %v158
    %v519 = vunpack.c.h.b16 %v158
    %v520 = vunpack.c.l.b16 %v159
    %v521 = vunpack.c.h.b16 %v159
    %v522 = vunpack.c.l.b16 %v160
    %v523 = vunpack.c.h.b16 %v160
    %v524 = vunpack.c.l.b16 %v161
    %v525 = vunpack.c.h.b16 %v161
    %v526 = vunpack.c.l.b16 %v162
    %v527 = vunpack.c.h.b16 %v162
    %v528 = vunpack.c.l.b16 %v163
    %v529 = vunpack.c.h.b16 %v163
    %v530 = vunpack.c.l.b16 %v164
    %v531 = vunpack.c.h.b16 %v164
    %v532 = vunpack.c.l.b16 %v165
    %v533 = vunpack.c.h.b16 %v165
    %v534 = vunpack.c.l.b16 %v166
    %v535 = vunpack.c.h.b16 %v166
    %v536 = vunpack.c.l.b16 %v167
    %v537 = vunpack.c.h.b16 %v167
    %v538 = vunpack.c.l.b16 %v168
    %v539 = vunpack.c.h.b16 %v168
    %v540 = vunpack.c.l.b16 %v169
    %v541 = vunpack.c.h.b16 %v169
    %v542 = vunpack.c.l.b16 %v170
    %v543 = vunpack.c.h.b16 %v170
    %v544 = vunpack.c.l.b16 %v171
    %v545 = vunpack.c.h.b16 %v171
    %v546 = vunpack.c.l.b16 %v172
    %v547 = vunpack.c.h.b16 %v172
    %v548 = vunpack.c.l.b16 %v173
    %v549 = vunpack.c.h.b16 %v173
    %v550 = vunpack.c.l.b16 %v174
    %v551 = vunpack.c.h.b16 %v174
    %v552 = vunpack.c.l.b16 %v175
    %v553 = vunpack.c.h.b16 %v175
    %v554 = vunpack.c.l.b16 %v176
    %v555 = vunpack.c.h.b16 %v176
    %v556 = vunpack.c.l.b16 %v177
    %v557 = vunpack.c.h.b16 %v177
    %v558 = vunpack.c.l.b16 %v178
    %v559 = vunpack.c.h.b16 %v178
    %v560 = vunpack.c.l.b16 %v179
    %v561 = vunpack.c.h.b16 %v179
    %v562 = vunpack.c.l.b16 %v180
    %v563 = vunpack.c.h.b16 %v180
    %v564 = vunpack.c.l.b16 %v181
    %v565 = vunpack.c.h.b16 %v181
    %v566 = vunpack.c.l.b16 %v182
    %v567 = vunpack.c.h.b16 %v182
    %v568 = vunpack.c.l.b16 %v183
    %v569 = vunpack.c.h.b16 %v183
    %v570 = vunpack.c.l.b16 %v184
    %v571 = vunpack.c.h.b16 %v184
    %v572 = vunpack.c.l.b16 %v185
    %v573 = vunpack.c.h.b16 %v185
    %v574 = vunpack.c.l.b16 %v186
    %v575 = vunpack.c.h.b16 %v186
    %v576 = vunpack.c.l.b16 %v187
    %v577 = vunpack.c.h.b16 %v187
    %v578 = vunpack.c.l.b16 %v188
    %v579 = vunpack.c.h.b16 %v188
    %v580 = vunpack.c.l.b16 %v189
    %v581 = vunpack.c.h.b16 %v189
    %v582 = vunpack.c.l.b16 %v190
    %v583 = vunpack.c.h.b16 %v190
    %v584 = vunpack.c.l.b16 %v191
    %v585 = vunpack.c.h.b16 %v191
    %v586 = vunpack.c.l.b16 %v192
    %v587 = vunpack.c.h.b16 %v192
    %v588 = vunpack.c.l.b16 %v193
    %v589 = vunpack.c.h.b16 %v193
    %v590 = vunpack.c.l.b16 %v194
    %v591 = vunpack.c.h.b16 %v194
    %v592 = vunpack.c.l.b16 %v195
    %v593 = vunpack.c.h.b16 %v195
    %v594 = vunpack.c.l.b16 %v196
    %v595 = vunpack.c.h.b16 %v196
    %v596 = vunpack.c.l.b16 %v197
    %v597 = vunpack.c.h.b16 %v197
    %v598 = vunpack.c.l.b16 %v198
    %v599 = vunpack.c.h.b16 %v198
    %v600 = vunpack.c.l.b16 %v199
    %v601 = vunpack.c.h.b16 %v199
    %v602 = vunpack.c.l.b16 %v200
    %v603 = vunpack.c.h.b16 %v200
    %v604 = vunpack.c.l.b16 %v201
    %v605 = vunpack.c.h.b16 %v201
    %v606 = vunpack.c.l.b16 %v202
    %v607 = vunpack.c.h.b16 %v202
    %v608 = vunpack.c.l.b16 %v203
    %v609 = vunpack.c.h.b16 %v203
    %v610 = vunpack.c.l.b16 %v204
    %v611 = vunpack.c.h.b16 %v204
    %v612 = vunpack.c.l.b16 %v205
    %v613 = vunpack.c.h.b16 %v205
    %v614 = vunpack.c.l.b16 %v206
    %v615 = vunpack.c.h.b16 %v206
    %v616 = vunpack.c.l.b16 %v207
    %v617 = vunpack.c.h.b16 %v207
    %v618 = vunpack.c.l.b16 %v208
    %v619 = vunpack.c.h.b16 %v208
    %v620 = vunpack.c.l.b16 %v209
    %v621 = vunpack.c.h.b16 %v209
    %v622 = vpack.c.b16 %v374, %v366
    %v623 = vpack.c.b16 %v375, %v367
    %v624 = vpack.c.b16 %v376, %v368
    %v625 = vpack.c.b16 %v377, %v369
    %v626 = vpack.c.b16 %v378, %v370
    %v627 = vpack.c.b16 %v379, %v371
    %v628 = vpack.c.b16 %v380, %v372
    %v629 = vpack.c.b16 %v381, %v373
    %v630 = vpack.c.b16 %v390, %v382
    %v631 = vpack.c.b16 %v391, %v383
    %v632 = vpack.c.b16 %v392, %v384
    %v633 = vpack.c.b16 %v393, %v385
    %v634 = vpack.c.b16 %v394, %v386
    %v635 = vpack.c.b16 %v395, %v387
    %v636 = vpack.c.b16 %v396, %v388
    %v637 = vpack.c.b16 %v397, %v389
    %v638 = vpack.c.b16 %v406, %v398
    %v639 = vpack.c.b16 %v407, %v399
    %v640 = vpack.c.b16 %v408, %v400
    %v641 = vpack.c.b16 %v409, %v401
    %v642 = vpack.c.b16 %v410, %v402
    %v643 = vpack.c.b16 %v411, %v403
    %v644 = vpack.c.b16 %v412, %v404
    %v645 = vpack.c.b16 %v413, %v405
    %v646 = vpack.c.b16 %v422, %v414
    %v647 = vpack.c.b16 %v423, %v415
    %v648 = vpack.c.b16 %v424, %v416
    %v649 = vpack.c.b16 %v425, %v417
    %v650 = vpack.c.b16 %v426, %v418
    %v651 = vpack.c.b16 %v427, %v419
    %v652 = vpack.c.b16 %v428, %v420
    %v653 = vpack.c.b16 %v429, %v421
    %v654 = vpack.c.b16 %v438, %v430
    %v655 = vpack.c.b16 %v439, %v431
    %v656 = vpack.c.b16 %v440, %v432
    %v657 = vpack.c.b16 %v441, %v433
    %v658 = vpack.c.b16 %v442, %v434
    %v659 = vpack.c.b16 %v443, %v435
    %v660 = vpack.c.b16 %v444, %v436
    %v661 = vpack.c.b16 %v445, %v437
    %v662 = vpack.c.b16 %v454, %v446
    %v663 = vpack.c.b16 %v455, %v447
    %v664 = vpack.c.b16 %v456, %v448
    %v665 = vpack.c.b16 %v457, %v449
    %v666 = vpack.c.b16 %v458, %v450
    %v667 = vpack.c.b16 %v459, %v451
    %v668 = vpack.c.b16 %v460, %v452
    %v669 = vpack.c.b16 %v461, %v453
    %v670 = vpack.c.b16 %v470, %v462
    %v671 = vpack.c.b16 %v471, %v463
    %v672 = vpack.c.b16 %v472, %v464
    %v673 = vpack.c.b16 %v473, %v465
    %v674 = vpack.c.b16 %v474, %v466
    %v675 = vpack.c.b16 %v475, %v467
    %v676 = vpack.c.b16 %v476, %v468
    %v677 = vpack.c.b16 %v477, %v469
    %v678 = vpack.c.b16 %v486, %v478
    %v679 = vpack.c.b16 %v487, %v479
    %v680 = vpack.c.b16 %v488, %v480
    %v681 = vpack.c.b16 %v489, %v481
    %v682 = vpack.c.b16 %v490, %v482
    %v683 = vpack.c.b16 %v491, %v483
    %v684 = vpack.c.b16 %v492, %v484
    %v685 = vpack.c.b16 %v493, %v485
    %v686 = vpack.c.b16 %v502, %v494
    %v687 = vpack.c.b16 %v503, %v495
    %v688 = vpack.c.b16 %v504, %v496
    %v689 = vpack.c.b16 %v505, %v497
    %v690 = vpack.c.b16 %v506, %v498
    %v691 = vpack.c.b16 %v507, %v499
    %v692 = vpack.c.b16 %v508, %v500
    %v693 = vpack.c.b16 %v509, %v501
    %v694 = vpack.c.b16 %v518, %v510
    %v695 = vpack.c.b16 %v519, %v511
    %v696 = vpack.c.b16 %v520, %v512
    %v697 = vpack.c.b16 %v521, %v513
    %v698 = vpack.c.b16 %v522, %v514
    %v699 = vpack.c.b16 %v523, %v515
    %v700 = vpack.c.b16 %v524, %v516
    %v701 = vpack.c.b16 %v525, %v517
    %v702 = vpack.c.b16 %v534, %v526
    %v703 = vpack.c.b16 %v535, %v527
    %v704 = vpack.c.b16 %v536, %v528
    %v705 = vpack.c.b16 %v537, %v529
    %v706 = vpack.c.b16 %v538, %v530
    %v707 = vpack.c.b16 %v539, %v531
    %v708 = vpack.c.b16 %v540, %v532
    %v709 = vpack.c.b16 %v541, %v533
    %v710 = vpack.c.b16 %v550, %v542
    %v711 = vpack.c.b16 %v551, %v543
    %v712 = vpack.c.b16 %v552, %v544
    %v713 = vpack.c.b16 %v553, %v545
    %v714 = vpack.c.b16 %v554, %v546
    %v715 = vpack.c.b16 %v555, %v547
    %v716 = vpack.c.b16 %v556, %v548
    %v717 = vpack.c.b16 %v557, %v549
    %v718 = vpack.c.b16 %v566, %v558
    %v719 = vpack.c.b16 %v567, %v559
    %v720 = vpack.c.b16 %v568, %v560
    %v721 = vpack.c.b16 %v569, %v561
    %v722 = vpack.c.b16 %v570, %v562
    %v723 = vpack.c.b16 %v571, %v563
    %v724 = vpack.c.b16 %v572, %v564
    %v725 = vpack.c.b16 %v573, %v565
    %v726 = vpack.c.b16 %v582, %v574
    %v727 = vpack.c.b16 %v583, %v575
    %v728 = vpack.c.b16 %v584, %v576
    %v729 = vpack.c.b16 %v585, %v577
    %v730 = vpack.c.b16 %v586, %v578
    %v731 = vpack.c.b16 %v587, %v579
    %v732 = vpack.c.b16 %v588, %v580
    %v733 = vpack.c.b16 %v589, %v581
    %v734 = vpack.c.b16 %v598, %v590
    %v735 = vpack.c.b16 %v599, %v591
    %v736 = vpack.c.b16 %v600, %v592
    %v737 = vpack.c.b16 %v601, %v593
    %v738 = vpack.c.b16 %v602, %v594
    %v739 = vpack.c.b16 %v603, %v595
    %v740 = vpack.c.b16 %v604, %v596
    %v741 = vpack.c.b16 %v605, %v597
    %v742 = vpack.c.b16 %v614, %v606
    %v743 = vpack.c.b16 %v615, %v607
    %v744 = vpack.c.b16 %v616, %v608
    %v745 = vpack.c.b16 %v617, %v609
    %v746 = vpack.c.b16 %v618, %v610
    %v747 = vpack.c.b16 %v619, %v611
    %v748 = vpack.c.b16 %v620, %v612
    %v749 = vpack.c.b16 %v621, %v613
    %878 = vmatpush.bf16.msra.mxu0 %v678
    %879 = vmatpush.bf16.msra.mxu0 %v670
    %880 = vmatpush.bf16.msra.mxu0 %v662
    %881 = vmatpush.bf16.msra.mxu0 %v654
    %882 = vmatpush.bf16.msra.mxu0 %v646
    %883 = vmatpush.bf16.msra.mxu0 %v638
    %884 = vmatpush.bf16.msra.mxu0 %v630
    %885 = vmatpush.bf16.msra.mxu0 %v622
    %886 = vmatmul.bf16.gmra.mxu0 %v80
    %v887 = vpop.f32.mrf.mxu0
    %v888 = vadd.f32 %v230, %v887
    %v889 = vpop.f32.mrf.mxu0
    %890 = vdwg.mxu0
    %891 = vmatpush.bf16.msra.mxu0 %v742
    %892 = vmatpush.bf16.msra.mxu0 %v734
    %893 = vmatpush.bf16.msra.mxu0 %v726
    %894 = vmatpush.bf16.msra.mxu0 %v718
    %895 = vmatpush.bf16.msra.mxu0 %v710
    %896 = vmatpush.bf16.msra.mxu0 %v702
    %897 = vmatpush.bf16.msra.mxu0 %v694
    %898 = vmatpush.bf16.msra.mxu0 %v686
    %899 = vmatmul.bf16.gmra.mxu0 %v81
    %v900 = vpop.f32.mrf.mxu0
    %v901 = vadd.f32 %v888, %v900
    %v902 = vpop.f32.mrf.mxu0
    %903 = vdwg.mxu0
    %904 = vmatpush.bf16.msra.mxu0 %v679
    %905 = vmatpush.bf16.msra.mxu0 %v671
    %906 = vmatpush.bf16.msra.mxu0 %v663
    %907 = vmatpush.bf16.msra.mxu0 %v655
    %908 = vmatpush.bf16.msra.mxu0 %v647
    %909 = vmatpush.bf16.msra.mxu0 %v639
    %910 = vmatpush.bf16.msra.mxu0 %v631
    %911 = vmatpush.bf16.msra.mxu0 %v623
    %912 = vmatmul.bf16.gmra.mxu0 %v80
    %v913 = vpop.f32.mrf.mxu0
    %v914 = vadd.f32 %v231, %v913
    %v915 = vpop.f32.mrf.mxu0
    %916 = vdwg.mxu0
    %917 = vmatpush.bf16.msra.mxu0 %v743
    %918 = vmatpush.bf16.msra.mxu0 %v735
    %919 = vmatpush.bf16.msra.mxu0 %v727
    %920 = vmatpush.bf16.msra.mxu0 %v719
    %921 = vmatpush.bf16.msra.mxu0 %v711
    %922 = vmatpush.bf16.msra.mxu0 %v703
    %923 = vmatpush.bf16.msra.mxu0 %v695
    %924 = vmatpush.bf16.msra.mxu0 %v687
    %925 = vmatmul.bf16.gmra.mxu0 %v81
    %v926 = vpop.f32.mrf.mxu0
    %v927 = vadd.f32 %v914, %v926
    %v928 = vpop.f32.mrf.mxu0
    %929 = vdwg.mxu0
    %930 = vmatpush.bf16.msra.mxu0 %v680
    %931 = vmatpush.bf16.msra.mxu0 %v672
    %932 = vmatpush.bf16.msra.mxu0 %v664
    %933 = vmatpush.bf16.msra.mxu0 %v656
    %934 = vmatpush.bf16.msra.mxu0 %v648
    %935 = vmatpush.bf16.msra.mxu0 %v640
    %936 = vmatpush.bf16.msra.mxu0 %v632
    %937 = vmatpush.bf16.msra.mxu0 %v624
    %938 = vmatmul.bf16.gmra.mxu0 %v80
    %v939 = vpop.f32.mrf.mxu0
    %v940 = vadd.f32 %v232, %v939
    %v941 = vpop.f32.mrf.mxu0
    %942 = vdwg.mxu0
    %943 = vmatpush.bf16.msra.mxu0 %v744
    %944 = vmatpush.bf16.msra.mxu0 %v736
    %945 = vmatpush.bf16.msra.mxu0 %v728
    %946 = vmatpush.bf16.msra.mxu0 %v720
    %947 = vmatpush.bf16.msra.mxu0 %v712
    %948 = vmatpush.bf16.msra.mxu0 %v704
    %949 = vmatpush.bf16.msra.mxu0 %v696
    %950 = vmatpush.bf16.msra.mxu0 %v688
    %951 = vmatmul.bf16.gmra.mxu0 %v81
    %v952 = vpop.f32.mrf.mxu0
    %v953 = vadd.f32 %v940, %v952
    %v954 = vpop.f32.mrf.mxu0
    %955 = vdwg.mxu0
    %956 = vmatpush.bf16.msra.mxu0 %v681
    %957 = vmatpush.bf16.msra.mxu0 %v673
    %958 = vmatpush.bf16.msra.mxu0 %v665
    %959 = vmatpush.bf16.msra.mxu0 %v657
    %960 = vmatpush.bf16.msra.mxu0 %v649
    %961 = vmatpush.bf16.msra.mxu0 %v641
    %962 = vmatpush.bf16.msra.mxu0 %v633
    %963 = vmatpush.bf16.msra.mxu0 %v625
    %964 = vmatmul.bf16.gmra.mxu0 %v80
    %v965 = vpop.f32.mrf.mxu0
    %v966 = vadd.f32 %v233, %v965
    %v967 = vpop.f32.mrf.mxu0
    %968 = vdwg.mxu0
    %969 = vmatpush.bf16.msra.mxu0 %v745
    %970 = vmatpush.bf16.msra.mxu0 %v737
    %971 = vmatpush.bf16.msra.mxu0 %v729
    %972 = vmatpush.bf16.msra.mxu0 %v721
    %973 = vmatpush.bf16.msra.mxu0 %v713
    %974 = vmatpush.bf16.msra.mxu0 %v705
    %975 = vmatpush.bf16.msra.mxu0 %v697
    %976 = vmatpush.bf16.msra.mxu0 %v689
    %977 = vmatmul.bf16.gmra.mxu0 %v81
    %v978 = vpop.f32.mrf.mxu0
    %v979 = vadd.f32 %v966, %v978
    %v980 = vpop.f32.mrf.mxu0
    %981 = vdwg.mxu0
    %982 = vmatpush.bf16.msra.mxu0 %v682
    %983 = vmatpush.bf16.msra.mxu0 %v674
    %984 = vmatpush.bf16.msra.mxu0 %v666
    %985 = vmatpush.bf16.msra.mxu0 %v658
    %986 = vmatpush.bf16.msra.mxu0 %v650
    %987 = vmatpush.bf16.msra.mxu0 %v642
    %988 = vmatpush.bf16.msra.mxu0 %v634
    %989 = vmatpush.bf16.msra.mxu0 %v626
    %990 = vmatmul.bf16.gmra.mxu0 %v80
    %v991 = vpop.f32.mrf.mxu0
    %v992 = vadd.f32 %v234, %v991
    %v993 = vpop.f32.mrf.mxu0
    %994 = vdwg.mxu0
    %995 = vmatpush.bf16.msra.mxu0 %v746
    %996 = vmatpush.bf16.msra.mxu0 %v738
    %997 = vmatpush.bf16.msra.mxu0 %v730
    %998 = vmatpush.bf16.msra.mxu0 %v722
    %999 = vmatpush.bf16.msra.mxu0 %v714
    %1000 = vmatpush.bf16.msra.mxu0 %v706
    %1001 = vmatpush.bf16.msra.mxu0 %v698
    %1002 = vmatpush.bf16.msra.mxu0 %v690
    %1003 = vmatmul.bf16.gmra.mxu0 %v81
    %v1004 = vpop.f32.mrf.mxu0
    %v1005 = vadd.f32 %v992, %v1004
    %v1006 = vpop.f32.mrf.mxu0
    %1007 = vdwg.mxu0
    %1008 = vmatpush.bf16.msra.mxu0 %v683
    %1009 = vmatpush.bf16.msra.mxu0 %v675
    %1010 = vmatpush.bf16.msra.mxu0 %v667
    %1011 = vmatpush.bf16.msra.mxu0 %v659
    %1012 = vmatpush.bf16.msra.mxu0 %v651
    %1013 = vmatpush.bf16.msra.mxu0 %v643
    %1014 = vmatpush.bf16.msra.mxu0 %v635
    %1015 = vmatpush.bf16.msra.mxu0 %v627
    %1016 = vmatmul.bf16.gmra.mxu0 %v80
    %v1017 = vpop.f32.mrf.mxu0
    %v1018 = vadd.f32 %v235, %v1017
    %v1019 = vpop.f32.mrf.mxu0
    %1020 = vdwg.mxu0
    %1021 = vmatpush.bf16.msra.mxu0 %v747
    %1022 = vmatpush.bf16.msra.mxu0 %v739
    %1023 = vmatpush.bf16.msra.mxu0 %v731
    %1024 = vmatpush.bf16.msra.mxu0 %v723
    %1025 = vmatpush.bf16.msra.mxu0 %v715
    %1026 = vmatpush.bf16.msra.mxu0 %v707
    %1027 = vmatpush.bf16.msra.mxu0 %v699
    %1028 = vmatpush.bf16.msra.mxu0 %v691
    %1029 = vmatmul.bf16.gmra.mxu0 %v81
    %v1030 = vpop.f32.mrf.mxu0
    %v1031 = vadd.f32 %v1018, %v1030
    %v1032 = vpop.f32.mrf.mxu0
    %1033 = vdwg.mxu0
    %1034 = vmatpush.bf16.msra.mxu0 %v684
    %1035 = vmatpush.bf16.msra.mxu0 %v676
    %1036 = vmatpush.bf16.msra.mxu0 %v668
    %1037 = vmatpush.bf16.msra.mxu0 %v660
    %1038 = vmatpush.bf16.msra.mxu0 %v652
    %1039 = vmatpush.bf16.msra.mxu0 %v644
    %1040 = vmatpush.bf16.msra.mxu0 %v636
    %1041 = vmatpush.bf16.msra.mxu0 %v628
    %1042 = vmatmul.bf16.gmra.mxu0 %v80
    %v1043 = vpop.f32.mrf.mxu0
    %v1044 = vadd.f32 %v236, %v1043
    %v1045 = vpop.f32.mrf.mxu0
    %1046 = vdwg.mxu0
    %1047 = vmatpush.bf16.msra.mxu0 %v748
    %1048 = vmatpush.bf16.msra.mxu0 %v740
    %1049 = vmatpush.bf16.msra.mxu0 %v732
    %1050 = vmatpush.bf16.msra.mxu0 %v724
    %1051 = vmatpush.bf16.msra.mxu0 %v716
    %1052 = vmatpush.bf16.msra.mxu0 %v708
    %1053 = vmatpush.bf16.msra.mxu0 %v700
    %1054 = vmatpush.bf16.msra.mxu0 %v692
    %1055 = vmatmul.bf16.gmra.mxu0 %v81
    %v1056 = vpop.f32.mrf.mxu0
    %v1057 = vadd.f32 %v1044, %v1056
    %v1058 = vpop.f32.mrf.mxu0
    %1059 = vdwg.mxu0
    %1060 = vmatpush.bf16.msra.mxu0 %v685
    %1061 = vmatpush.bf16.msra.mxu0 %v677
    %1062 = vmatpush.bf16.msra.mxu0 %v669
    %1063 = vmatpush.bf16.msra.mxu0 %v661
    %1064 = vmatpush.bf16.msra.mxu0 %v653
    %1065 = vmatpush.bf16.msra.mxu0 %v645
    %1066 = vmatpush.bf16.msra.mxu0 %v637
    %1067 = vmatpush.bf16.msra.mxu0 %v629
    %1068 = vmatmul.bf16.gmra.mxu0 %v80
    %v1069 = vpop.f32.mrf.mxu0
    %v1070 = vadd.f32 %v237, %v1069
    %v1071 = vpop.f32.mrf.mxu0
    %1072 = vdwg.mxu0
    %1073 = vmatpush.bf16.msra.mxu0 %v749
    %1074 = vmatpush.bf16.msra.mxu0 %v741
    %1075 = vmatpush.bf16.msra.mxu0 %v733
    %1076 = vmatpush.bf16.msra.mxu0 %v725
    %1077 = vmatpush.bf16.msra.mxu0 %v717
    %1078 = vmatpush.bf16.msra.mxu0 %v709
    %1079 = vmatpush.bf16.msra.mxu0 %v701
    %1080 = vmatpush.bf16.msra.mxu0 %v693
    %1081 = vmatmul.bf16.gmra.mxu0 %v81
    %v1082 = vpop.f32.mrf.mxu0
    %v1083 = vadd.f32 %v1070, %v1082
    %v1084 = vpop.f32.mrf.mxu0
    %1085 = vdwg.mxu0
    %vm1086 = vcmask 1045504
    %v1087 = vsel %vm1086, %v901, 0.0
    %v1088 = vrot.slane %v1087, 4
    %v1089 = vadd.f32 %v1087, %v1088
    %v1090 = vrot.slane %v1089, 2
    %v1091 = vadd.f32 %v1089, %v1090
    %v1092 = vrot.slane %v1091, 1
    %v1093 = vadd.f32 %v1091, %v1092
    %v1094 = vsel %vm1086, %v927, 0.0
    %v1095 = vrot.slane %v1094, 4
    %v1096 = vadd.f32 %v1094, %v1095
    %v1097 = vrot.slane %v1096, 2
    %v1098 = vadd.f32 %v1096, %v1097
    %v1099 = vrot.slane %v1098, 1
    %v1100 = vadd.f32 %v1098, %v1099
    %v1101 = vsel %vm1086, %v953, 0.0
    %v1102 = vrot.slane %v1101, 4
    %v1103 = vadd.f32 %v1101, %v1102
    %v1104 = vrot.slane %v1103, 2
    %v1105 = vadd.f32 %v1103, %v1104
    %v1106 = vrot.slane %v1105, 1
    %v1107 = vadd.f32 %v1105, %v1106
    %v1108 = vsel %vm1086, %v979, 0.0
    %v1109 = vrot.slane %v1108, 4
    %v1110 = vadd.f32 %v1108, %v1109
    %v1111 = vrot.slane %v1110, 2
    %v1112 = vadd.f32 %v1110, %v1111
    %v1113 = vrot.slane %v1112, 1
    %v1114 = vadd.f32 %v1112, %v1113
    %v1115 = vsel %vm1086, %v1005, 0.0
    %v1116 = vrot.slane %v1115, 4
    %v1117 = vadd.f32 %v1115, %v1116
    %v1118 = vrot.slane %v1117, 2
    %v1119 = vadd.f32 %v1117, %v1118
    %v1120 = vrot.slane %v1119, 1
    %v1121 = vadd.f32 %v1119, %v1120
    %v1122 = vsel %vm1086, %v1031, 0.0
    %v1123 = vrot.slane %v1122, 4
    %v1124 = vadd.f32 %v1122, %v1123
    %v1125 = vrot.slane %v1124, 2
    %v1126 = vadd.f32 %v1124, %v1125
    %v1127 = vrot.slane %v1126, 1
    %v1128 = vadd.f32 %v1126, %v1127
    %v1129 = vsel %vm1086, %v1057, 0.0
    %v1130 = vrot.slane %v1129, 4
    %v1131 = vadd.f32 %v1129, %v1130
    %v1132 = vrot.slane %v1131, 2
    %v1133 = vadd.f32 %v1131, %v1132
    %v1134 = vrot.slane %v1133, 1
    %v1135 = vadd.f32 %v1133, %v1134
    %v1136 = vsel %vm1086, %v1083, 0.0
    %v1137 = vrot.slane %v1136, 4
    %v1138 = vadd.f32 %v1136, %v1137
    %v1139 = vrot.slane %v1138, 2
    %v1140 = vadd.f32 %v1138, %v1139
    %v1141 = vrot.slane %v1140, 1
    %v1142 = vadd.f32 %v1140, %v1141
    %v1143 = vmul.f32 %v901, %v901
    %v1144 = vmul.f32 %v927, %v927
    %v1145 = vmul.f32 %v953, %v953
    %v1146 = vmul.f32 %v979, %v979
    %v1147 = vmul.f32 %v1005, %v1005
    %v1148 = vmul.f32 %v1031, %v1031
    %v1149 = vmul.f32 %v1057, %v1057
    %v1150 = vmul.f32 %v1083, %v1083
    %v1151 = vsel %vm1086, %v1143, 0.0
    %v1152 = vrot.slane %v1151, 4
    %v1153 = vadd.f32 %v1151, %v1152
    %v1154 = vrot.slane %v1153, 2
    %v1155 = vadd.f32 %v1153, %v1154
    %v1156 = vrot.slane %v1155, 1
    %v1157 = vadd.f32 %v1155, %v1156
    %v1158 = vsel %vm1086, %v1144, 0.0
    %v1159 = vrot.slane %v1158, 4
    %v1160 = vadd.f32 %v1158, %v1159
    %v1161 = vrot.slane %v1160, 2
    %v1162 = vadd.f32 %v1160, %v1161
    %v1163 = vrot.slane %v1162, 1
    %v1164 = vadd.f32 %v1162, %v1163
    %v1165 = vsel %vm1086, %v1145, 0.0
    %v1166 = vrot.slane %v1165, 4
    %v1167 = vadd.f32 %v1165, %v1166
    %v1168 = vrot.slane %v1167, 2
    %v1169 = vadd.f32 %v1167, %v1168
    %v1170 = vrot.slane %v1169, 1
    %v1171 = vadd.f32 %v1169, %v1170
    %v1172 = vsel %vm1086, %v1146, 0.0
    %v1173 = vrot.slane %v1172, 4
    %v1174 = vadd.f32 %v1172, %v1173
    %v1175 = vrot.slane %v1174, 2
    %v1176 = vadd.f32 %v1174, %v1175
    %v1177 = vrot.slane %v1176, 1
    %v1178 = vadd.f32 %v1176, %v1177
    %v1179 = vsel %vm1086, %v1147, 0.0
    %v1180 = vrot.slane %v1179, 4
    %v1181 = vadd.f32 %v1179, %v1180
    %v1182 = vrot.slane %v1181, 2
    %v1183 = vadd.f32 %v1181, %v1182
    %v1184 = vrot.slane %v1183, 1
    %v1185 = vadd.f32 %v1183, %v1184
    %v1186 = vsel %vm1086, %v1148, 0.0
    %v1187 = vrot.slane %v1186, 4
    %v1188 = vadd.f32 %v1186, %v1187
    %v1189 = vrot.slane %v1188, 2
    %v1190 = vadd.f32 %v1188, %v1189
    %v1191 = vrot.slane %v1190, 1
    %v1192 = vadd.f32 %v1190, %v1191
    %v1193 = vsel %vm1086, %v1149, 0.0
    %v1194 = vrot.slane %v1193, 4
    %v1195 = vadd.f32 %v1193, %v1194
    %v1196 = vrot.slane %v1195, 2
    %v1197 = vadd.f32 %v1195, %v1196
    %v1198 = vrot.slane %v1197, 1
    %v1199 = vadd.f32 %v1197, %v1198
    %v1200 = vsel %vm1086, %v1150, 0.0
    %v1201 = vrot.slane %v1200, 4
    %v1202 = vadd.f32 %v1200, %v1201
    %v1203 = vrot.slane %v1202, 2
    %v1204 = vadd.f32 %v1202, %v1203
    %v1205 = vrot.slane %v1204, 1
    %v1206 = vadd.f32 %v1204, %v1205
    %vm1207 = vcmask 1040384
    %v1208 = vsel %vm1207, %v1093, %v1157
    %v1209 = vsel %vm1207, %v1100, %v1164
    %v1210 = vsel %vm1207, %v1107, %v1171
    %v1211 = vsel %vm1207, %v1114, %v1178
    %v1212 = vsel %vm1207, %v1121, %v1185
    %v1213 = vsel %vm1207, %v1128, %v1192
    %v1214 = vsel %vm1207, %v1135, %v1199
    %v1215 = vsel %vm1207, %v1142, %v1206
    %1216 = vrot.lane.b32.xlu0 %v1208, 16
    %v1217 = vpop.permute.xlu0 %1216
    %1218 = vrot.lane.b32.xlu0 %v1209, 16
    %v1219 = vpop.permute.xlu0 %1218
    %1220 = vrot.lane.b32.xlu0 %v1210, 16
    %v1221 = vpop.permute.xlu0 %1220
    %1222 = vrot.lane.b32.xlu0 %v1211, 16
    %v1223 = vpop.permute.xlu0 %1222
    %1224 = vrot.lane.b32.xlu0 %v1212, 16
    %v1225 = vpop.permute.xlu0 %1224
    %1226 = vrot.lane.b32.xlu0 %v1213, 16
    %v1227 = vpop.permute.xlu0 %1226
    %1228 = vrot.lane.b32.xlu0 %v1214, 16
    %v1229 = vpop.permute.xlu0 %1228
    %1230 = vrot.lane.b32.xlu0 %v1215, 16
    %v1231 = vpop.permute.xlu0 %1230
    %v1232 = vlaneseq
    %v1233 = vand.u32 %v1232, 127
    %vm1234 = vcmp.lt.s32.totalorder %v1233, 16
    %v1235 = vsel %vm1234, %v1229, %v1231
    %v1236 = vsel %vm1234, %v1227, %v1229
    %v1237 = vsel %vm1234, %v1225, %v1227
    %v1238 = vsel %vm1234, %v1223, %v1225
    %v1239 = vsel %vm1234, %v1221, %v1223
    %v1240 = vsel %vm1234, %v1219, %v1221
    %v1241 = vsel %vm1234, %v1217, %v1219
    %v1242 = vsel %vm1234, %v1231, %v1217
    %v1243 = vadd.f32 %v1208, %v1242
    %v1244 = vadd.f32 %v1209, %v1241
    %v1245 = vadd.f32 %v1210, %v1240
    %v1246 = vadd.f32 %v1211, %v1239
    %v1247 = vadd.f32 %v1212, %v1238
    %v1248 = vadd.f32 %v1213, %v1237
    %v1249 = vadd.f32 %v1214, %v1236
    %v1250 = vadd.f32 %v1215, %v1235
    %1251 = vrot.lane.b32.xlu0 %v1243, 32
    %v1252 = vpop.permute.xlu0 %1251
    %1253 = vrot.lane.b32.xlu0 %v1244, 32
    %v1254 = vpop.permute.xlu0 %1253
    %1255 = vrot.lane.b32.xlu0 %v1245, 32
    %v1256 = vpop.permute.xlu0 %1255
    %1257 = vrot.lane.b32.xlu0 %v1246, 32
    %v1258 = vpop.permute.xlu0 %1257
    %1259 = vrot.lane.b32.xlu0 %v1247, 32
    %v1260 = vpop.permute.xlu0 %1259
    %1261 = vrot.lane.b32.xlu0 %v1248, 32
    %v1262 = vpop.permute.xlu0 %1261
    %1263 = vrot.lane.b32.xlu0 %v1249, 32
    %v1264 = vpop.permute.xlu0 %1263
    %1265 = vrot.lane.b32.xlu0 %v1250, 32
    %v1266 = vpop.permute.xlu0 %1265
    %vm1267 = vcmp.lt.s32.totalorder %v1233, 32
    %v1268 = vsel %vm1267, %v1264, %v1266
    %v1269 = vsel %vm1267, %v1262, %v1264
    %v1270 = vsel %vm1267, %v1260, %v1262
    %v1271 = vsel %vm1267, %v1258, %v1260
    %v1272 = vsel %vm1267, %v1256, %v1258
    %v1273 = vsel %vm1267, %v1254, %v1256
    %v1274 = vsel %vm1267, %v1252, %v1254
    %v1275 = vsel %vm1267, %v1266, %v1252
    %v1276 = vadd.f32 %v1243, %v1275
    %v1277 = vadd.f32 %v1244, %v1274
    %v1278 = vadd.f32 %v1245, %v1273
    %v1279 = vadd.f32 %v1246, %v1272
    %v1280 = vadd.f32 %v1247, %v1271
    %v1281 = vadd.f32 %v1248, %v1270
    %v1282 = vadd.f32 %v1249, %v1269
    %v1283 = vadd.f32 %v1250, %v1268
    %1284 = vrot.lane.b32.xlu0 %v1276, 64
    %v1285 = vpop.permute.xlu0 %1284
    %1286 = vrot.lane.b32.xlu0 %v1277, 64
    %v1287 = vpop.permute.xlu0 %1286
    %1288 = vrot.lane.b32.xlu0 %v1278, 64
    %v1289 = vpop.permute.xlu0 %1288
    %1290 = vrot.lane.b32.xlu0 %v1279, 64
    %v1291 = vpop.permute.xlu0 %1290
    %1292 = vrot.lane.b32.xlu0 %v1280, 64
    %v1293 = vpop.permute.xlu0 %1292
    %1294 = vrot.lane.b32.xlu0 %v1281, 64
    %v1295 = vpop.permute.xlu0 %1294
    %1296 = vrot.lane.b32.xlu0 %v1282, 64
    %v1297 = vpop.permute.xlu0 %1296
    %1298 = vrot.lane.b32.xlu0 %v1283, 64
    %v1299 = vpop.permute.xlu0 %1298
    %vm1300 = vcmp.lt.s32.totalorder %v1233, 64
    %v1301 = vsel %vm1300, %v1297, %v1299
    %v1302 = vsel %vm1300, %v1295, %v1297
    %v1303 = vsel %vm1300, %v1293, %v1295
    %v1304 = vsel %vm1300, %v1291, %v1293
    %v1305 = vsel %vm1300, %v1289, %v1291
    %v1306 = vsel %vm1300, %v1287, %v1289
    %v1307 = vsel %vm1300, %v1285, %v1287
    %v1308 = vsel %vm1300, %v1299, %v1285
    %v1309 = vadd.f32 %v1276, %v1308
    %v1310 = vadd.f32 %v1277, %v1307
    %v1311 = vadd.f32 %v1278, %v1306
    %v1312 = vadd.f32 %v1279, %v1305
    %v1313 = vadd.f32 %v1280, %v1304
    %v1314 = vadd.f32 %v1281, %v1303
    %v1315 = vadd.f32 %v1282, %v1302
    %v1316 = vadd.f32 %v1283, %v1301
    %v1317 = vadd.f32 %v1309, %v1316
    %v1318 = vadd.f32 %v1310, %v1309
    %v1319 = vadd.f32 %v1311, %v1310
    %v1320 = vadd.f32 %v1312, %v1311
    %v1321 = vadd.f32 %v1313, %v1312
    %v1322 = vadd.f32 %v1314, %v1313
    %v1323 = vadd.f32 %v1315, %v1314
    %v1324 = vadd.f32 %v1316, %v1315
    %v1325 = vadd.f32 %v1317, %v1323
    %v1326 = vadd.f32 %v1318, %v1324
    %v1327 = vadd.f32 %v1319, %v1317
    %v1328 = vadd.f32 %v1320, %v1318
    %v1329 = vadd.f32 %v1321, %v1319
    %v1330 = vadd.f32 %v1322, %v1320
    %v1331 = vadd.f32 %v1323, %v1321
    %v1332 = vadd.f32 %v1324, %v1322
    %v1333 = vadd.f32 %v1325, %v1329
    %v1334 = vadd.f32 %v1326, %v1330
    %v1335 = vadd.f32 %v1327, %v1331
    %v1336 = vadd.f32 %v1328, %v1332
    %v1337 = vmul.f32 %v1333, 0.0026041667
    %v1338 = vmul.f32 %v1334, 0.0026041667
    %v1339 = vmul.f32 %v1335, 0.0026041667
    %v1340 = vmul.f32 %v1336, 0.0026041667
    %v1341 = vmul.f32 %v1337, %v1337
    %v1342 = vmul.f32 %v1338, %v1338
    %v1343 = vmul.f32 %v1339, %v1339
    %v1344 = vmul.f32 %v1340, %v1340
    %v1349 = vrot.slane %v1341, 7
    %v1350 = vrot.slane %v1342, 7
    %v1351 = vrot.slane %v1343, 7
    %v1352 = vrot.slane %v1344, 7
    %v1357 = vsub.f32 %v1337, %v1349
    %v1358 = vsub.f32 %v1338, %v1350
    %v1359 = vsub.f32 %v1339, %v1351
    %v1360 = vsub.f32 %v1340, %v1352
    %v1361 = vmax.f32 %v1357, 0.0
    %v1362 = vmax.f32 %v1358, 0.0
    %v1363 = vmax.f32 %v1359, 0.0
    %v1364 = vmax.f32 %v1360, 0.0
    %v1365 = vadd.f32 %v1361, 1e-05
    %v1366 = vadd.f32 %v1362, 1e-05
    %v1367 = vadd.f32 %v1363, 1e-05
    %v1368 = vadd.f32 %v1364, 1e-05
    %v1369 = vrsqrt.pop %v1365
    %v1370 = vmul.f32 %v1369, %v1365
    %v1371 = vmul.f32 %v1370, %v1369
    %v1372 = vmul.f32 0.5, %v1371
    %v1373 = vsub.f32 1.5, %v1372
    %v1374 = vmul.f32 %v1369, %v1373
    %vm1375 = vweird.f32 %v1365
    %vm1376 = vweird.f32 %v1369
    %vm1377 = vmor %vm1375, %vm1376
    %v1378 = vsel %vm1377, %v1369, %v1374
    %v1379 = vrsqrt.pop %v1366
    %v1380 = vmul.f32 %v1379, %v1366
    %v1381 = vmul.f32 %v1380, %v1379
    %v1382 = vmul.f32 0.5, %v1381
    %v1383 = vsub.f32 1.5, %v1382
    %v1384 = vmul.f32 %v1379, %v1383
    %vm1385 = vweird.f32 %v1366
    %vm1386 = vweird.f32 %v1379
    %vm1387 = vmor %vm1385, %vm1386
    %v1388 = vsel %vm1387, %v1379, %v1384
    %v1389 = vrsqrt.pop %v1367
    %v1390 = vmul.f32 %v1389, %v1367
    %v1391 = vmul.f32 %v1390, %v1389
    %v1392 = vmul.f32 0.5, %v1391
    %v1393 = vsub.f32 1.5, %v1392
    %v1394 = vmul.f32 %v1389, %v1393
    %vm1395 = vweird.f32 %v1367
    %vm1396 = vweird.f32 %v1389
    %vm1397 = vmor %vm1395, %vm1396
    %v1398 = vsel %vm1397, %v1389, %v1394
    %v1399 = vrsqrt.pop %v1368
    %v1400 = vmul.f32 %v1399, %v1368
    %v1401 = vmul.f32 %v1400, %v1399
    %v1402 = vmul.f32 0.5, %v1401
    %v1403 = vsub.f32 1.5, %v1402
    %v1404 = vmul.f32 %v1399, %v1403
    %vm1405 = vweird.f32 %v1368
    %vm1406 = vweird.f32 %v1399
    %vm1407 = vmor %vm1405, %vm1406
    %v1408 = vsel %vm1407, %v1399, %v1404
    %v1413 = vrot.slane %v1388, 4
    %v1414 = vrot.slane %v1408, 4
    %vm1415 = vcmask 1043456
    %v1416 = vsel %vm1415, %v1378, %v1413
    %v1417 = vsel %vm1415, %v1398, %v1414
    %v1420 = vmul.f32 %v73, %v1416
    %v1421 = vmul.f32 %v74, %v1417
    %v1422 = vmul.f32 %v75, %v1416
    %v1423 = vmul.f32 %v76, %v1417
    %v1428 = vperm.slane %v1420, 1
    %v1429 = vperm.slane %v1420, 5
    %v1430 = vperm.slane %v1421, 1
    %v1431 = vperm.slane %v1421, 5
    %v1432 = vperm.slane %v1422, 1
    %v1433 = vperm.slane %v1422, 5
    %v1434 = vperm.slane %v1423, 1
    %v1435 = vperm.slane %v1423, 5
    %v1444 = vmul.f32 %v1337, %v1428
    %v1445 = vmul.f32 %v1338, %v1429
    %v1446 = vmul.f32 %v1339, %v1430
    %v1447 = vmul.f32 %v1340, %v1431
    %v1448 = vmul.f32 %v1337, %v1432
    %v1449 = vmul.f32 %v1338, %v1433
    %v1450 = vmul.f32 %v1339, %v1434
    %v1451 = vmul.f32 %v1340, %v1435
    %v1460 = vrot.slane %v1445, 4
    %v1461 = vrot.slane %v1447, 4
    %v1462 = vrot.slane %v1449, 4
    %v1463 = vrot.slane %v1451, 4
    %v1464 = vsel %vm1415, %v1444, %v1460
    %v1465 = vsel %vm1415, %v1446, %v1461
    %v1466 = vsel %vm1415, %v1448, %v1462
    %v1467 = vsel %vm1415, %v1450, %v1463
    %v1468 = vrot.slane %v1464, 6
    %v1469 = vrot.slane %v1465, 6
    %v1470 = vrot.slane %v1466, 6
    %v1471 = vrot.slane %v1467, 6
    %v1476 = vsub.f32 %v73, %v1468
    %v1477 = vsub.f32 %v74, %v1469
    %v1478 = vsub.f32 %v75, %v1470
    %v1479 = vsub.f32 %v76, %v1471
    %v1480 = vperm.slane %v1428, 1
    %v1481 = vperm.slane %v1429, 1
    %v1482 = vperm.slane %v1430, 1
    %v1483 = vperm.slane %v1431, 1
    %v1484 = vperm.slane %v1432, 1
    %v1485 = vperm.slane %v1433, 1
    %v1486 = vperm.slane %v1434, 1
    %v1487 = vperm.slane %v1435, 1
    %v1488 = vmul.f32 %v901, %v1480
    %v1489 = vmul.f32 %v927, %v1481
    %v1490 = vmul.f32 %v953, %v1482
    %v1491 = vmul.f32 %v979, %v1483
    %v1492 = vmul.f32 %v1005, %v1484
    %v1493 = vmul.f32 %v1031, %v1485
    %v1494 = vmul.f32 %v1057, %v1486
    %v1495 = vmul.f32 %v1083, %v1487
    %v1500 = vperm.slane %v1476, 2
    %v1501 = vperm.slane %v1476, 6
    %v1502 = vperm.slane %v1477, 2
    %v1503 = vperm.slane %v1477, 6
    %v1504 = vperm.slane %v1478, 2
    %v1505 = vperm.slane %v1478, 6
    %v1506 = vperm.slane %v1479, 2
    %v1507 = vperm.slane %v1479, 6
    %v1516 = vperm.slane %v1500, 2
    %v1517 = vperm.slane %v1501, 2
    %v1518 = vperm.slane %v1502, 2
    %v1519 = vperm.slane %v1503, 2
    %v1520 = vperm.slane %v1504, 2
    %v1521 = vperm.slane %v1505, 2
    %v1522 = vperm.slane %v1506, 2
    %v1523 = vperm.slane %v1507, 2
    %v1524 = vadd.f32 %v1488, %v1516
    %v1525 = vadd.f32 %v1489, %v1517
    %v1526 = vadd.f32 %v1490, %v1518
    %v1527 = vadd.f32 %v1491, %v1519
    %v1528 = vadd.f32 %v1492, %v1520
    %v1529 = vadd.f32 %v1493, %v1521
    %v1530 = vadd.f32 %v1494, %v1522
    %v1531 = vadd.f32 %v1495, %v1523
    %v1532 = vmax.f32 %v1524, 0.0
    %v1533 = vmax.f32 %v1525, 0.0
    %v1534 = vmax.f32 %v1526, 0.0
    %v1535 = vmax.f32 %v1527, 0.0
    %v1536 = vmax.f32 %v1528, 0.0
    %v1537 = vmax.f32 %v1529, 0.0
    %v1538 = vmax.f32 %v1530, 0.0
    %v1539 = vmax.f32 %v1531, 0.0
    %v1540 = vpack.c.bf16 %v1532, %v1532
    %v1541 = vpack.c.bf16 %v1533, %v1533
    %v1542 = vpack.c.bf16 %v1534, %v1534
    %v1543 = vpack.c.bf16 %v1535, %v1535
    %v1544 = vpack.c.bf16 %v1536, %v1536
    %v1545 = vpack.c.bf16 %v1537, %v1537
    %v1546 = vpack.c.bf16 %v1538, %v1538
    %v1547 = vpack.c.bf16 %v1539, %v1539
    %v1548 = vld [vmem:[#allocation4] sm:$0xff]
    %v1549 = vld [vmem:[#allocation4 + $0x8] sm:$0xff]
    %v1550 = vld [vmem:[#allocation4 + $0x10] sm:$0xff]
    %v1551 = vld [vmem:[#allocation4 + $0x18] sm:$0xff]
    %v1552 = vld [vmem:[#allocation4 + $0x20] sm:$0xff]
    %v1553 = vld [vmem:[#allocation4 + $0x28] sm:$0xff]
    %v1554 = vld [vmem:[#allocation4 + $0x30] sm:$0xff]
    %v1555 = vld [vmem:[#allocation4 + $0x38] sm:$0xff]
    %v1556 = vld [vmem:[#allocation4 + $0x40] sm:$0xff]
    %v1557 = vld [vmem:[#allocation4 + $0x48] sm:$0xff]
    %v1558 = vld [vmem:[#allocation4 + $0x50] sm:$0xff]
    %v1559 = vld [vmem:[#allocation4 + $0x58] sm:$0xff]
    %v1560 = vld [vmem:[#allocation4 + $0x60] sm:$0xff]
    %v1561 = vld [vmem:[#allocation4 + $0x68] sm:$0xff]
    %v1562 = vld [vmem:[#allocation4 + $0x70] sm:$0xff]
    %v1563 = vld [vmem:[#allocation4 + $0x78] sm:$0xff]
    %v1564 = vld [vmem:[#allocation4 + $0x80] sm:$0xff]
    %v1565 = vld [vmem:[#allocation4 + $0x88] sm:$0xff]
    %v1566 = vld [vmem:[#allocation4 + $0x90] sm:$0xff]
    %v1567 = vld [vmem:[#allocation4 + $0x98] sm:$0xff]
    %v1568 = vld [vmem:[#allocation4 + $0xa0] sm:$0xff]
    %v1569 = vld [vmem:[#allocation4 + $0xa8] sm:$0xff]
    %v1570 = vld [vmem:[#allocation4 + $0xb0] sm:$0xff]
    %v1571 = vld [vmem:[#allocation4 + $0xb8] sm:$0xff]
    %v1572 = vld [vmem:[#allocation4 + $0xc0] sm:$0xff]
    %v1573 = vld [vmem:[#allocation4 + $0xc8] sm:$0xff]
    %v1574 = vld [vmem:[#allocation4 + $0xd0] sm:$0xff]
    %v1575 = vld [vmem:[#allocation4 + $0xd8] sm:$0xff]
    %v1576 = vld [vmem:[#allocation4 + $0xe0] sm:$0xff]
    %v1577 = vld [vmem:[#allocation4 + $0xe8] sm:$0xff]
    %v1578 = vld [vmem:[#allocation4 + $0xf0] sm:$0xff]
    %v1579 = vld [vmem:[#allocation4 + $0xf8] sm:$0xff]
    %v1580 = vld [vmem:[#allocation4 + $0x100] sm:$0xff]
    %v1581 = vld [vmem:[#allocation4 + $0x108] sm:$0xff]
    %v1582 = vld [vmem:[#allocation4 + $0x110] sm:$0xff]
    %v1583 = vld [vmem:[#allocation4 + $0x118] sm:$0xff]
    %v1584 = vld [vmem:[#allocation4 + $0x120] sm:$0xff]
    %v1585 = vld [vmem:[#allocation4 + $0x128] sm:$0xff]
    %v1586 = vld [vmem:[#allocation4 + $0x130] sm:$0xff]
    %v1587 = vld [vmem:[#allocation4 + $0x138] sm:$0xff]
    %v1588 = vld [vmem:[#allocation4 + $0x140] sm:$0xff]
    %v1589 = vld [vmem:[#allocation4 + $0x148] sm:$0xff]
    %v1590 = vld [vmem:[#allocation4 + $0x150] sm:$0xff]
    %v1591 = vld [vmem:[#allocation4 + $0x158] sm:$0xff]
    %v1592 = vld [vmem:[#allocation4 + $0x160] sm:$0xff]
    %v1593 = vld [vmem:[#allocation4 + $0x168] sm:$0xff]
    %v1594 = vld [vmem:[#allocation4 + $0x170] sm:$0xff]
    %v1595 = vld [vmem:[#allocation4 + $0x178] sm:$0xff]
    %v1596 = vld [vmem:[#allocation4 + $0x180] sm:$0xff]
    %v1597 = vld [vmem:[#allocation4 + $0x188] sm:$0xff]
    %v1598 = vld [vmem:[#allocation4 + $0x190] sm:$0xff]
    %v1599 = vld [vmem:[#allocation4 + $0x198] sm:$0xff]
    %v1600 = vld [vmem:[#allocation4 + $0x1a0] sm:$0xff]
    %v1601 = vld [vmem:[#allocation4 + $0x1a8] sm:$0xff]
    %v1602 = vld [vmem:[#allocation4 + $0x1b0] sm:$0xff]
    %v1603 = vld [vmem:[#allocation4 + $0x1b8] sm:$0xff]
    %v1604 = vld [vmem:[#allocation4 + $0x1c0] sm:$0xff]
    %v1605 = vld [vmem:[#allocation4 + $0x1c8] sm:$0xff]
    %v1606 = vld [vmem:[#allocation4 + $0x1d0] sm:$0xff]
    %v1607 = vld [vmem:[#allocation4 + $0x1d8] sm:$0xff]
    %v1608 = vld [vmem:[#allocation4 + $0x1e0] sm:$0xff]
    %v1609 = vld [vmem:[#allocation4 + $0x1e8] sm:$0xff]
    %v1610 = vld [vmem:[#allocation4 + $0x1f0] sm:$0xff]
    %v1611 = vld [vmem:[#allocation4 + $0x1f8] sm:$0xff]
    %v1612 = vld [vmem:[#allocation4 + $0x200] sm:$0xff]
    %v1613 = vld [vmem:[#allocation4 + $0x208] sm:$0xff]
    %v1614 = vld [vmem:[#allocation4 + $0x210] sm:$0xff]
    %v1615 = vld [vmem:[#allocation4 + $0x218] sm:$0xff]
    %v1616 = vld [vmem:[#allocation4 + $0x220] sm:$0xff]
    %v1617 = vld [vmem:[#allocation4 + $0x228] sm:$0xff]
    %v1618 = vld [vmem:[#allocation4 + $0x230] sm:$0xff]
    %v1619 = vld [vmem:[#allocation4 + $0x238] sm:$0xff]
    %v1620 = vld [vmem:[#allocation4 + $0x240] sm:$0xff]
    %v1621 = vld [vmem:[#allocation4 + $0x248] sm:$0xff]
    %v1622 = vld [vmem:[#allocation4 + $0x250] sm:$0xff]
    %v1623 = vld [vmem:[#allocation4 + $0x258] sm:$0xff]
    %v1624 = vld [vmem:[#allocation4 + $0x260] sm:$0xff]
    %v1625 = vld [vmem:[#allocation4 + $0x268] sm:$0xff]
    %v1626 = vld [vmem:[#allocation4 + $0x270] sm:$0xff]
    %v1627 = vld [vmem:[#allocation4 + $0x278] sm:$0xff]
    %v1628 = vld [vmem:[#allocation4 + $0x280] sm:$0xff]
    %v1629 = vld [vmem:[#allocation4 + $0x288] sm:$0xff]
    %v1630 = vld [vmem:[#allocation4 + $0x290] sm:$0xff]
    %v1631 = vld [vmem:[#allocation4 + $0x298] sm:$0xff]
    %v1632 = vld [vmem:[#allocation4 + $0x2a0] sm:$0xff]
    %v1633 = vld [vmem:[#allocation4 + $0x2a8] sm:$0xff]
    %v1634 = vld [vmem:[#allocation4 + $0x2b0] sm:$0xff]
    %v1635 = vld [vmem:[#allocation4 + $0x2b8] sm:$0xff]
    %v1636 = vld [vmem:[#allocation4 + $0x2c0] sm:$0xff]
    %v1637 = vld [vmem:[#allocation4 + $0x2c8] sm:$0xff]
    %v1638 = vld [vmem:[#allocation4 + $0x2d0] sm:$0xff]
    %v1639 = vld [vmem:[#allocation4 + $0x2d8] sm:$0xff]
    %v1640 = vld [vmem:[#allocation4 + $0x2e0] sm:$0xff]
    %v1641 = vld [vmem:[#allocation4 + $0x2e8] sm:$0xff]
    %v1642 = vld [vmem:[#allocation4 + $0x2f0] sm:$0xff]
    %v1643 = vld [vmem:[#allocation4 + $0x2f8] sm:$0xff]
    %v1644 = vld [vmem:[#allocation4 + $0x300] sm:$0xff]
    %v1645 = vld [vmem:[#allocation4 + $0x308] sm:$0xff]
    %v1646 = vld [vmem:[#allocation4 + $0x310] sm:$0xff]
    %v1647 = vld [vmem:[#allocation4 + $0x318] sm:$0xff]
    %v1648 = vld [vmem:[#allocation4 + $0x320] sm:$0xff]
    %v1649 = vld [vmem:[#allocation4 + $0x328] sm:$0xff]
    %v1650 = vld [vmem:[#allocation4 + $0x330] sm:$0xff]
    %v1651 = vld [vmem:[#allocation4 + $0x338] sm:$0xff]
    %v1652 = vld [vmem:[#allocation4 + $0x340] sm:$0xff]
    %v1653 = vld [vmem:[#allocation4 + $0x348] sm:$0xff]
    %v1654 = vld [vmem:[#allocation4 + $0x350] sm:$0xff]
    %v1655 = vld [vmem:[#allocation4 + $0x358] sm:$0xff]
    %v1656 = vld [vmem:[#allocation4 + $0x360] sm:$0xff]
    %v1657 = vld [vmem:[#allocation4 + $0x368] sm:$0xff]
    %v1658 = vld [vmem:[#allocation4 + $0x370] sm:$0xff]
    %v1659 = vld [vmem:[#allocation4 + $0x378] sm:$0xff]
    %v1660 = vld [vmem:[#allocation4 + $0x380] sm:$0xff]
    %v1661 = vld [vmem:[#allocation4 + $0x388] sm:$0xff]
    %v1662 = vld [vmem:[#allocation4 + $0x390] sm:$0xff]
    %v1663 = vld [vmem:[#allocation4 + $0x398] sm:$0xff]
    %v1664 = vld [vmem:[#allocation4 + $0x3a0] sm:$0xff]
    %v1665 = vld [vmem:[#allocation4 + $0x3a8] sm:$0xff]
    %v1666 = vld [vmem:[#allocation4 + $0x3b0] sm:$0xff]
    %v1667 = vld [vmem:[#allocation4 + $0x3b8] sm:$0xff]
    %v1668 = vld [vmem:[#allocation4 + $0x3c0] sm:$0xff]
    %v1669 = vld [vmem:[#allocation4 + $0x3c8] sm:$0xff]
    %v1670 = vld [vmem:[#allocation4 + $0x3d0] sm:$0xff]
    %v1671 = vld [vmem:[#allocation4 + $0x3d8] sm:$0xff]
    %v1672 = vld [vmem:[#allocation4 + $0x3e0] sm:$0xff]
    %v1673 = vld [vmem:[#allocation4 + $0x3e8] sm:$0xff]
    %v1674 = vld [vmem:[#allocation4 + $0x3f0] sm:$0xff]
    %v1675 = vld [vmem:[#allocation4 + $0x3f8] sm:$0xff]
    %v1676 = vld [vmem:[#allocation4 + $0x400] sm:$0xff]
    %v1677 = vld [vmem:[#allocation4 + $0x408] sm:$0xff]
    %v1678 = vld [vmem:[#allocation4 + $0x410] sm:$0xff]
    %v1679 = vld [vmem:[#allocation4 + $0x418] sm:$0xff]
    %v1680 = vld [vmem:[#allocation4 + $0x420] sm:$0xff]
    %v1681 = vld [vmem:[#allocation4 + $0x428] sm:$0xff]
    %v1682 = vld [vmem:[#allocation4 + $0x430] sm:$0xff]
    %v1683 = vld [vmem:[#allocation4 + $0x438] sm:$0xff]
    %v1684 = vld [vmem:[#allocation4 + $0x440] sm:$0xff]
    %v1685 = vld [vmem:[#allocation4 + $0x448] sm:$0xff]
    %v1686 = vld [vmem:[#allocation4 + $0x450] sm:$0xff]
    %v1687 = vld [vmem:[#allocation4 + $0x458] sm:$0xff]
    %v1688 = vld [vmem:[#allocation4 + $0x460] sm:$0xff]
    %v1689 = vld [vmem:[#allocation4 + $0x468] sm:$0xff]
    %v1690 = vld [vmem:[#allocation4 + $0x470] sm:$0xff]
    %v1691 = vld [vmem:[#allocation4 + $0x478] sm:$0xff]
    %v1692 = vld [vmem:[#allocation4 + $0x480] sm:$0xff]
    %v1693 = vld [vmem:[#allocation4 + $0x488] sm:$0xff]
    %v1694 = vld [vmem:[#allocation4 + $0x490] sm:$0xff]
    %v1695 = vld [vmem:[#allocation4 + $0x498] sm:$0xff]
    %v1696 = vld [vmem:[#allocation4 + $0x4a0] sm:$0xff]
    %v1697 = vld [vmem:[#allocation4 + $0x4a8] sm:$0xff]
    %v1698 = vld [vmem:[#allocation4 + $0x4b0] sm:$0xff]
    %v1699 = vld [vmem:[#allocation4 + $0x4b8] sm:$0xff]
    %v1700 = vld [vmem:[#allocation4 + $0x4c0] sm:$0xff]
    %v1701 = vld [vmem:[#allocation4 + $0x4c8] sm:$0xff]
    %v1702 = vld [vmem:[#allocation4 + $0x4d0] sm:$0xff]
    %v1703 = vld [vmem:[#allocation4 + $0x4d8] sm:$0xff]
    %v1704 = vld [vmem:[#allocation4 + $0x4e0] sm:$0xff]
    %v1705 = vld [vmem:[#allocation4 + $0x4e8] sm:$0xff]
    %v1706 = vld [vmem:[#allocation4 + $0x4f0] sm:$0xff]
    %v1707 = vld [vmem:[#allocation4 + $0x4f8] sm:$0xff]
    %v1708 = vld [vmem:[#allocation4 + $0x500] sm:$0xff]
    %v1709 = vld [vmem:[#allocation4 + $0x508] sm:$0xff]
    %v1710 = vld [vmem:[#allocation4 + $0x510] sm:$0xff]
    %v1711 = vld [vmem:[#allocation4 + $0x518] sm:$0xff]
    %v1712 = vld [vmem:[#allocation4 + $0x520] sm:$0xff]
    %v1713 = vld [vmem:[#allocation4 + $0x528] sm:$0xff]
    %v1714 = vld [vmem:[#allocation4 + $0x530] sm:$0xff]
    %v1715 = vld [vmem:[#allocation4 + $0x538] sm:$0xff]
    %v1716 = vld [vmem:[#allocation4 + $0x540] sm:$0xff]
    %v1717 = vld [vmem:[#allocation4 + $0x548] sm:$0xff]
    %v1718 = vld [vmem:[#allocation4 + $0x550] sm:$0xff]
    %v1719 = vld [vmem:[#allocation4 + $0x558] sm:$0xff]
    %v1720 = vld [vmem:[#allocation4 + $0x560] sm:$0xff]
    %v1721 = vld [vmem:[#allocation4 + $0x568] sm:$0xff]
    %v1722 = vld [vmem:[#allocation4 + $0x570] sm:$0xff]
    %v1723 = vld [vmem:[#allocation4 + $0x578] sm:$0xff]
    %v1724 = vld [vmem:[#allocation4 + $0x580] sm:$0xff]
    %v1725 = vld [vmem:[#allocation4 + $0x588] sm:$0xff]
    %v1726 = vld [vmem:[#allocation4 + $0x590] sm:$0xff]
    %v1727 = vld [vmem:[#allocation4 + $0x598] sm:$0xff]
    %v1728 = vld [vmem:[#allocation4 + $0x5a0] sm:$0xff]
    %v1729 = vld [vmem:[#allocation4 + $0x5a8] sm:$0xff]
    %v1730 = vld [vmem:[#allocation4 + $0x5b0] sm:$0xff]
    %v1731 = vld [vmem:[#allocation4 + $0x5b8] sm:$0xff]
    %v1732 = vld [vmem:[#allocation4 + $0x5c0] sm:$0xff]
    %v1733 = vld [vmem:[#allocation4 + $0x5c8] sm:$0xff]
    %v1734 = vld [vmem:[#allocation4 + $0x5d0] sm:$0xff]
    %v1735 = vld [vmem:[#allocation4 + $0x5d8] sm:$0xff]
    %v1736 = vld [vmem:[#allocation4 + $0x5e0] sm:$0xff]
    %v1737 = vld [vmem:[#allocation4 + $0x5e8] sm:$0xff]
    %v1738 = vld [vmem:[#allocation4 + $0x5f0] sm:$0xff]
    %v1739 = vld [vmem:[#allocation4 + $0x5f8] sm:$0xff]
    %v1740 = vld [vmem:[#allocation4 + $0x600] sm:$0xff]
    %v1741 = vld [vmem:[#allocation4 + $0x608] sm:$0xff]
    %v1742 = vld [vmem:[#allocation4 + $0x610] sm:$0xff]
    %v1743 = vld [vmem:[#allocation4 + $0x618] sm:$0xff]
    %v1744 = vld [vmem:[#allocation4 + $0x620] sm:$0xff]
    %v1745 = vld [vmem:[#allocation4 + $0x628] sm:$0xff]
    %v1746 = vld [vmem:[#allocation4 + $0x630] sm:$0xff]
    %v1747 = vld [vmem:[#allocation4 + $0x638] sm:$0xff]
    %v1748 = vld [vmem:[#allocation4 + $0x640] sm:$0xff]
    %v1749 = vld [vmem:[#allocation4 + $0x648] sm:$0xff]
    %v1750 = vld [vmem:[#allocation4 + $0x650] sm:$0xff]
    %v1751 = vld [vmem:[#allocation4 + $0x658] sm:$0xff]
    %v1752 = vld [vmem:[#allocation4 + $0x660] sm:$0xff]
    %v1753 = vld [vmem:[#allocation4 + $0x668] sm:$0xff]
    %v1754 = vld [vmem:[#allocation4 + $0x670] sm:$0xff]
    %v1755 = vld [vmem:[#allocation4 + $0x678] sm:$0xff]
    %v1756 = vld [vmem:[#allocation4 + $0x680] sm:$0xff]
    %v1757 = vld [vmem:[#allocation4 + $0x688] sm:$0xff]
    %v1758 = vld [vmem:[#allocation4 + $0x690] sm:$0xff]
    %v1759 = vld [vmem:[#allocation4 + $0x698] sm:$0xff]
    %v1760 = vld [vmem:[#allocation4 + $0x6a0] sm:$0xff]
    %v1761 = vld [vmem:[#allocation4 + $0x6a8] sm:$0xff]
    %v1762 = vld [vmem:[#allocation4 + $0x6b0] sm:$0xff]
    %v1763 = vld [vmem:[#allocation4 + $0x6b8] sm:$0xff]
    %v1764 = vld [vmem:[#allocation4 + $0x6c0] sm:$0xff]
    %v1765 = vld [vmem:[#allocation4 + $0x6c8] sm:$0xff]
    %v1766 = vld [vmem:[#allocation4 + $0x6d0] sm:$0xff]
    %v1767 = vld [vmem:[#allocation4 + $0x6d8] sm:$0xff]
    %v1768 = vld [vmem:[#allocation4 + $0x6e0] sm:$0xff]
    %v1769 = vld [vmem:[#allocation4 + $0x6e8] sm:$0xff]
    %v1770 = vld [vmem:[#allocation4 + $0x6f0] sm:$0xff]
    %v1771 = vld [vmem:[#allocation4 + $0x6f8] sm:$0xff]
    %v1772 = vld [vmem:[#allocation4 + $0x700] sm:$0xff]
    %v1773 = vld [vmem:[#allocation4 + $0x708] sm:$0xff]
    %v1774 = vld [vmem:[#allocation4 + $0x710] sm:$0xff]
    %v1775 = vld [vmem:[#allocation4 + $0x718] sm:$0xff]
    %v1776 = vld [vmem:[#allocation4 + $0x720] sm:$0xff]
    %v1777 = vld [vmem:[#allocation4 + $0x728] sm:$0xff]
    %v1778 = vld [vmem:[#allocation4 + $0x730] sm:$0xff]
    %v1779 = vld [vmem:[#allocation4 + $0x738] sm:$0xff]
    %v1780 = vld [vmem:[#allocation4 + $0x740] sm:$0xff]
    %v1781 = vld [vmem:[#allocation4 + $0x748] sm:$0xff]
    %v1782 = vld [vmem:[#allocation4 + $0x750] sm:$0xff]
    %v1783 = vld [vmem:[#allocation4 + $0x758] sm:$0xff]
    %v1784 = vld [vmem:[#allocation4 + $0x760] sm:$0xff]
    %v1785 = vld [vmem:[#allocation4 + $0x768] sm:$0xff]
    %v1786 = vld [vmem:[#allocation4 + $0x770] sm:$0xff]
    %v1787 = vld [vmem:[#allocation4 + $0x778] sm:$0xff]
    %v1788 = vld [vmem:[#allocation4 + $0x780] sm:$0xff]
    %v1789 = vld [vmem:[#allocation4 + $0x788] sm:$0xff]
    %v1790 = vld [vmem:[#allocation4 + $0x790] sm:$0xff]
    %v1791 = vld [vmem:[#allocation4 + $0x798] sm:$0xff]
    %v1792 = vld [vmem:[#allocation4 + $0x7a0] sm:$0xff]
    %v1793 = vld [vmem:[#allocation4 + $0x7a8] sm:$0xff]
    %v1794 = vld [vmem:[#allocation4 + $0x7b0] sm:$0xff]
    %v1795 = vld [vmem:[#allocation4 + $0x7b8] sm:$0xff]
    %v1796 = vld [vmem:[#allocation4 + $0x7c0] sm:$0xff]
    %v1797 = vld [vmem:[#allocation4 + $0x7c8] sm:$0xff]
    %v1798 = vld [vmem:[#allocation4 + $0x7d0] sm:$0xff]
    %v1799 = vld [vmem:[#allocation4 + $0x7d8] sm:$0xff]
    %v1800 = vld [vmem:[#allocation4 + $0x7e0] sm:$0xff]
    %v1801 = vld [vmem:[#allocation4 + $0x7e8] sm:$0xff]
    %v1802 = vld [vmem:[#allocation4 + $0x7f0] sm:$0xff]
    %v1803 = vld [vmem:[#allocation4 + $0x7f8] sm:$0xff]
    %v2060 = vunpack.c.l.b16 %v1548
    %v2061 = vunpack.c.h.b16 %v1548
    %v2062 = vunpack.c.l.b16 %v1549
    %v2063 = vunpack.c.h.b16 %v1549
    %v2064 = vunpack.c.l.b16 %v1550
    %v2065 = vunpack.c.h.b16 %v1550
    %v2066 = vunpack.c.l.b16 %v1551
    %v2067 = vunpack.c.h.b16 %v1551
    %v2068 = vunpack.c.l.b16 %v1552
    %v2069 = vunpack.c.h.b16 %v1552
    %v2070 = vunpack.c.l.b16 %v1553
    %v2071 = vunpack.c.h.b16 %v1553
    %v2072 = vunpack.c.l.b16 %v1554
    %v2073 = vunpack.c.h.b16 %v1554
    %v2074 = vunpack.c.l.b16 %v1555
    %v2075 = vunpack.c.h.b16 %v1555
    %v2076 = vunpack.c.l.b16 %v1556
    %v2077 = vunpack.c.h.b16 %v1556
    %v2078 = vunpack.c.l.b16 %v1557
    %v2079 = vunpack.c.h.b16 %v1557
    %v2080 = vunpack.c.l.b16 %v1558
    %v2081 = vunpack.c.h.b16 %v1558
    %v2082 = vunpack.c.l.b16 %v1559
    %v2083 = vunpack.c.h.b16 %v1559
    %v2084 = vunpack.c.l.b16 %v1560
    %v2085 = vunpack.c.h.b16 %v1560
    %v2086 = vunpack.c.l.b16 %v1561
    %v2087 = vunpack.c.h.b16 %v1561
    %v2088 = vunpack.c.l.b16 %v1562
    %v2089 = vunpack.c.h.b16 %v1562
    %v2090 = vunpack.c.l.b16 %v1563
    %v2091 = vunpack.c.h.b16 %v1563
    %v2092 = vunpack.c.l.b16 %v1564
    %v2093 = vunpack.c.h.b16 %v1564
    %v2094 = vunpack.c.l.b16 %v1565
    %v2095 = vunpack.c.h.b16 %v1565
    %v2096 = vunpack.c.l.b16 %v1566
    %v2097 = vunpack.c.h.b16 %v1566
    %v2098 = vunpack.c.l.b16 %v1567
    %v2099 = vunpack.c.h.b16 %v1567
    %v2100 = vunpack.c.l.b16 %v1568
    %v2101 = vunpack.c.h.b16 %v1568
    %v2102 = vunpack.c.l.b16 %v1569
    %v2103 = vunpack.c.h.b16 %v1569
    %v2104 = vunpack.c.l.b16 %v1570
    %v2105 = vunpack.c.h.b16 %v1570
    %v2106 = vunpack.c.l.b16 %v1571
    %v2107 = vunpack.c.h.b16 %v1571
    %v2108 = vunpack.c.l.b16 %v1572
    %v2109 = vunpack.c.h.b16 %v1572
    %v2110 = vunpack.c.l.b16 %v1573
    %v2111 = vunpack.c.h.b16 %v1573
    %v2112 = vunpack.c.l.b16 %v1574
    %v2113 = vunpack.c.h.b16 %v1574
    %v2114 = vunpack.c.l.b16 %v1575
    %v2115 = vunpack.c.h.b16 %v1575
    %v2116 = vunpack.c.l.b16 %v1576
    %v2117 = vunpack.c.h.b16 %v1576
    %v2118 = vunpack.c.l.b16 %v1577
    %v2119 = vunpack.c.h.b16 %v1577
    %v2120 = vunpack.c.l.b16 %v1578
    %v2121 = vunpack.c.h.b16 %v1578
    %v2122 = vunpack.c.l.b16 %v1579
    %v2123 = vunpack.c.h.b16 %v1579
    %v2124 = vunpack.c.l.b16 %v1580
    %v2125 = vunpack.c.h.b16 %v1580
    %v2126 = vunpack.c.l.b16 %v1581
    %v2127 = vunpack.c.h.b16 %v1581
    %v2128 = vunpack.c.l.b16 %v1582
    %v2129 = vunpack.c.h.b16 %v1582
    %v2130 = vunpack.c.l.b16 %v1583
    %v2131 = vunpack.c.h.b16 %v1583
    %v2132 = vunpack.c.l.b16 %v1584
    %v2133 = vunpack.c.h.b16 %v1584
    %v2134 = vunpack.c.l.b16 %v1585
    %v2135 = vunpack.c.h.b16 %v1585
    %v2136 = vunpack.c.l.b16 %v1586
    %v2137 = vunpack.c.h.b16 %v1586
    %v2138 = vunpack.c.l.b16 %v1587
    %v2139 = vunpack.c.h.b16 %v1587
    %v2140 = vunpack.c.l.b16 %v1588
    %v2141 = vunpack.c.h.b16 %v1588
    %v2142 = vunpack.c.l.b16 %v1589
    %v2143 = vunpack.c.h.b16 %v1589
    %v2144 = vunpack.c.l.b16 %v1590
    %v2145 = vunpack.c.h.b16 %v1590
    %v2146 = vunpack.c.l.b16 %v1591
    %v2147 = vunpack.c.h.b16 %v1591
    %v2148 = vunpack.c.l.b16 %v1592
    %v2149 = vunpack.c.h.b16 %v1592
    %v2150 = vunpack.c.l.b16 %v1593
    %v2151 = vunpack.c.h.b16 %v1593
    %v2152 = vunpack.c.l.b16 %v1594
    %v2153 = vunpack.c.h.b16 %v1594
    %v2154 = vunpack.c.l.b16 %v1595
    %v2155 = vunpack.c.h.b16 %v1595
    %v2156 = vunpack.c.l.b16 %v1596
    %v2157 = vunpack.c.h.b16 %v1596
    %v2158 = vunpack.c.l.b16 %v1597
    %v2159 = vunpack.c.h.b16 %v1597
    %v2160 = vunpack.c.l.b16 %v1598
    %v2161 = vunpack.c.h.b16 %v1598
    %v2162 = vunpack.c.l.b16 %v1599
    %v2163 = vunpack.c.h.b16 %v1599
    %v2164 = vunpack.c.l.b16 %v1600
    %v2165 = vunpack.c.h.b16 %v1600
    %v2166 = vunpack.c.l.b16 %v1601
    %v2167 = vunpack.c.h.b16 %v1601
    %v2168 = vunpack.c.l.b16 %v1602
    %v2169 = vunpack.c.h.b16 %v1602
    %v2170 = vunpack.c.l.b16 %v1603
    %v2171 = vunpack.c.h.b16 %v1603
    %v2172 = vunpack.c.l.b16 %v1604
    %v2173 = vunpack.c.h.b16 %v1604
    %v2174 = vunpack.c.l.b16 %v1605
    %v2175 = vunpack.c.h.b16 %v1605
    %v2176 = vunpack.c.l.b16 %v1606
    %v2177 = vunpack.c.h.b16 %v1606
    %v2178 = vunpack.c.l.b16 %v1607
    %v2179 = vunpack.c.h.b16 %v1607
    %v2180 = vunpack.c.l.b16 %v1608
    %v2181 = vunpack.c.h.b16 %v1608
    %v2182 = vunpack.c.l.b16 %v1609
    %v2183 = vunpack.c.h.b16 %v1609
    %v2184 = vunpack.c.l.b16 %v1610
    %v2185 = vunpack.c.h.b16 %v1610
    %v2186 = vunpack.c.l.b16 %v1611
    %v2187 = vunpack.c.h.b16 %v1611
    %v2188 = vunpack.c.l.b16 %v1612
    %v2189 = vunpack.c.h.b16 %v1612
    %v2190 = vunpack.c.l.b16 %v1613
    %v2191 = vunpack.c.h.b16 %v1613
    %v2192 = vunpack.c.l.b16 %v1614
    %v2193 = vunpack.c.h.b16 %v1614
    %v2194 = vunpack.c.l.b16 %v1615
    %v2195 = vunpack.c.h.b16 %v1615
    %v2196 = vunpack.c.l.b16 %v1616
    %v2197 = vunpack.c.h.b16 %v1616
    %v2198 = vunpack.c.l.b16 %v1617
    %v2199 = vunpack.c.h.b16 %v1617
    %v2200 = vunpack.c.l.b16 %v1618
    %v2201 = vunpack.c.h.b16 %v1618
    %v2202 = vunpack.c.l.b16 %v1619
    %v2203 = vunpack.c.h.b16 %v1619
    %v2204 = vunpack.c.l.b16 %v1620
    %v2205 = vunpack.c.h.b16 %v1620
    %v2206 = vunpack.c.l.b16 %v1621
    %v2207 = vunpack.c.h.b16 %v1621
    %v2208 = vunpack.c.l.b16 %v1622
    %v2209 = vunpack.c.h.b16 %v1622
    %v2210 = vunpack.c.l.b16 %v1623
    %v2211 = vunpack.c.h.b16 %v1623
    %v2212 = vunpack.c.l.b16 %v1624
    %v2213 = vunpack.c.h.b16 %v1624
    %v2214 = vunpack.c.l.b16 %v1625
    %v2215 = vunpack.c.h.b16 %v1625
    %v2216 = vunpack.c.l.b16 %v1626
    %v2217 = vunpack.c.h.b16 %v1626
    %v2218 = vunpack.c.l.b16 %v1627
    %v2219 = vunpack.c.h.b16 %v1627
    %v2220 = vunpack.c.l.b16 %v1628
    %v2221 = vunpack.c.h.b16 %v1628
    %v2222 = vunpack.c.l.b16 %v1629
    %v2223 = vunpack.c.h.b16 %v1629
    %v2224 = vunpack.c.l.b16 %v1630
    %v2225 = vunpack.c.h.b16 %v1630
    %v2226 = vunpack.c.l.b16 %v1631
    %v2227 = vunpack.c.h.b16 %v1631
    %v2228 = vunpack.c.l.b16 %v1632
    %v2229 = vunpack.c.h.b16 %v1632
    %v2230 = vunpack.c.l.b16 %v1633
    %v2231 = vunpack.c.h.b16 %v1633
    %v2232 = vunpack.c.l.b16 %v1634
    %v2233 = vunpack.c.h.b16 %v1634
    %v2234 = vunpack.c.l.b16 %v1635
    %v2235 = vunpack.c.h.b16 %v1635
    %v2236 = vunpack.c.l.b16 %v1636
    %v2237 = vunpack.c.h.b16 %v1636
    %v2238 = vunpack.c.l.b16 %v1637
    %v2239 = vunpack.c.h.b16 %v1637
    %v2240 = vunpack.c.l.b16 %v1638
    %v2241 = vunpack.c.h.b16 %v1638
    %v2242 = vunpack.c.l.b16 %v1639
    %v2243 = vunpack.c.h.b16 %v1639
    %v2244 = vunpack.c.l.b16 %v1640
    %v2245 = vunpack.c.h.b16 %v1640
    %v2246 = vunpack.c.l.b16 %v1641
    %v2247 = vunpack.c.h.b16 %v1641
    %v2248 = vunpack.c.l.b16 %v1642
    %v2249 = vunpack.c.h.b16 %v1642
    %v2250 = vunpack.c.l.b16 %v1643
    %v2251 = vunpack.c.h.b16 %v1643
    %v2252 = vunpack.c.l.b16 %v1644
    %v2253 = vunpack.c.h.b16 %v1644
    %v2254 = vunpack.c.l.b16 %v1645
    %v2255 = vunpack.c.h.b16 %v1645
    %v2256 = vunpack.c.l.b16 %v1646
    %v2257 = vunpack.c.h.b16 %v1646
    %v2258 = vunpack.c.l.b16 %v1647
    %v2259 = vunpack.c.h.b16 %v1647
    %v2260 = vunpack.c.l.b16 %v1648
    %v2261 = vunpack.c.h.b16 %v1648
    %v2262 = vunpack.c.l.b16 %v1649
    %v2263 = vunpack.c.h.b16 %v1649
    %v2264 = vunpack.c.l.b16 %v1650
    %v2265 = vunpack.c.h.b16 %v1650
    %v2266 = vunpack.c.l.b16 %v1651
    %v2267 = vunpack.c.h.b16 %v1651
    %v2268 = vunpack.c.l.b16 %v1652
    %v2269 = vunpack.c.h.b16 %v1652
    %v2270 = vunpack.c.l.b16 %v1653
    %v2271 = vunpack.c.h.b16 %v1653
    %v2272 = vunpack.c.l.b16 %v1654
    %v2273 = vunpack.c.h.b16 %v1654
    %v2274 = vunpack.c.l.b16 %v1655
    %v2275 = vunpack.c.h.b16 %v1655
    %v2276 = vunpack.c.l.b16 %v1656
    %v2277 = vunpack.c.h.b16 %v1656
    %v2278 = vunpack.c.l.b16 %v1657
    %v2279 = vunpack.c.h.b16 %v1657
    %v2280 = vunpack.c.l.b16 %v1658
    %v2281 = vunpack.c.h.b16 %v1658
    %v2282 = vunpack.c.l.b16 %v1659
    %v2283 = vunpack.c.h.b16 %v1659
    %v2284 = vunpack.c.l.b16 %v1660
    %v2285 = vunpack.c.h.b16 %v1660
    %v2286 = vunpack.c.l.b16 %v1661
    %v2287 = vunpack.c.h.b16 %v1661
    %v2288 = vunpack.c.l.b16 %v1662
    %v2289 = vunpack.c.h.b16 %v1662
    %v2290 = vunpack.c.l.b16 %v1663
    %v2291 = vunpack.c.h.b16 %v1663
    %v2292 = vunpack.c.l.b16 %v1664
    %v2293 = vunpack.c.h.b16 %v1664
    %v2294 = vunpack.c.l.b16 %v1665
    %v2295 = vunpack.c.h.b16 %v1665
    %v2296 = vunpack.c.l.b16 %v1666
    %v2297 = vunpack.c.h.b16 %v1666
    %v2298 = vunpack.c.l.b16 %v1667
    %v2299 = vunpack.c.h.b16 %v1667
    %v2300 = vunpack.c.l.b16 %v1668
    %v2301 = vunpack.c.h.b16 %v1668
    %v2302 = vunpack.c.l.b16 %v1669
    %v2303 = vunpack.c.h.b16 %v1669
    %v2304 = vunpack.c.l.b16 %v1670
    %v2305 = vunpack.c.h.b16 %v1670
    %v2306 = vunpack.c.l.b16 %v1671
    %v2307 = vunpack.c.h.b16 %v1671
    %v2308 = vunpack.c.l.b16 %v1672
    %v2309 = vunpack.c.h.b16 %v1672
    %v2310 = vunpack.c.l.b16 %v1673
    %v2311 = vunpack.c.h.b16 %v1673
    %v2312 = vunpack.c.l.b16 %v1674
    %v2313 = vunpack.c.h.b16 %v1674
    %v2314 = vunpack.c.l.b16 %v1675
    %v2315 = vunpack.c.h.b16 %v1675
    %v2316 = vunpack.c.l.b16 %v1676
    %v2317 = vunpack.c.h.b16 %v1676
    %v2318 = vunpack.c.l.b16 %v1677
    %v2319 = vunpack.c.h.b16 %v1677
    %v2320 = vunpack.c.l.b16 %v1678
    %v2321 = vunpack.c.h.b16 %v1678
    %v2322 = vunpack.c.l.b16 %v1679
    %v2323 = vunpack.c.h.b16 %v1679
    %v2324 = vunpack.c.l.b16 %v1680
    %v2325 = vunpack.c.h.b16 %v1680
    %v2326 = vunpack.c.l.b16 %v1681
    %v2327 = vunpack.c.h.b16 %v1681
    %v2328 = vunpack.c.l.b16 %v1682
    %v2329 = vunpack.c.h.b16 %v1682
    %v2330 = vunpack.c.l.b16 %v1683
    %v2331 = vunpack.c.h.b16 %v1683
    %v2332 = vunpack.c.l.b16 %v1684
    %v2333 = vunpack.c.h.b16 %v1684
    %v2334 = vunpack.c.l.b16 %v1685
    %v2335 = vunpack.c.h.b16 %v1685
    %v2336 = vunpack.c.l.b16 %v1686
    %v2337 = vunpack.c.h.b16 %v1686
    %v2338 = vunpack.c.l.b16 %v1687
    %v2339 = vunpack.c.h.b16 %v1687
    %v2340 = vunpack.c.l.b16 %v1688
    %v2341 = vunpack.c.h.b16 %v1688
    %v2342 = vunpack.c.l.b16 %v1689
    %v2343 = vunpack.c.h.b16 %v1689
    %v2344 = vunpack.c.l.b16 %v1690
    %v2345 = vunpack.c.h.b16 %v1690
    %v2346 = vunpack.c.l.b16 %v1691
    %v2347 = vunpack.c.h.b16 %v1691
    %v2348 = vunpack.c.l.b16 %v1692
    %v2349 = vunpack.c.h.b16 %v1692
    %v2350 = vunpack.c.l.b16 %v1693
    %v2351 = vunpack.c.h.b16 %v1693
    %v2352 = vunpack.c.l.b16 %v1694
    %v2353 = vunpack.c.h.b16 %v1694
    %v2354 = vunpack.c.l.b16 %v1695
    %v2355 = vunpack.c.h.b16 %v1695
    %v2356 = vunpack.c.l.b16 %v1696
    %v2357 = vunpack.c.h.b16 %v1696
    %v2358 = vunpack.c.l.b16 %v1697
    %v2359 = vunpack.c.h.b16 %v1697
    %v2360 = vunpack.c.l.b16 %v1698
    %v2361 = vunpack.c.h.b16 %v1698
    %v2362 = vunpack.c.l.b16 %v1699
    %v2363 = vunpack.c.h.b16 %v1699
    %v2364 = vunpack.c.l.b16 %v1700
    %v2365 = vunpack.c.h.b16 %v1700
    %v2366 = vunpack.c.l.b16 %v1701
    %v2367 = vunpack.c.h.b16 %v1701
    %v2368 = vunpack.c.l.b16 %v1702
    %v2369 = vunpack.c.h.b16 %v1702
    %v2370 = vunpack.c.l.b16 %v1703
    %v2371 = vunpack.c.h.b16 %v1703
    %v2372 = vunpack.c.l.b16 %v1704
    %v2373 = vunpack.c.h.b16 %v1704
    %v2374 = vunpack.c.l.b16 %v1705
    %v2375 = vunpack.c.h.b16 %v1705
    %v2376 = vunpack.c.l.b16 %v1706
    %v2377 = vunpack.c.h.b16 %v1706
    %v2378 = vunpack.c.l.b16 %v1707
    %v2379 = vunpack.c.h.b16 %v1707
    %v2380 = vunpack.c.l.b16 %v1708
    %v2381 = vunpack.c.h.b16 %v1708
    %v2382 = vunpack.c.l.b16 %v1709
    %v2383 = vunpack.c.h.b16 %v1709
    %v2384 = vunpack.c.l.b16 %v1710
    %v2385 = vunpack.c.h.b16 %v1710
    %v2386 = vunpack.c.l.b16 %v1711
    %v2387 = vunpack.c.h.b16 %v1711
    %v2388 = vunpack.c.l.b16 %v1712
    %v2389 = vunpack.c.h.b16 %v1712
    %v2390 = vunpack.c.l.b16 %v1713
    %v2391 = vunpack.c.h.b16 %v1713
    %v2392 = vunpack.c.l.b16 %v1714
    %v2393 = vunpack.c.h.b16 %v1714
    %v2394 = vunpack.c.l.b16 %v1715
    %v2395 = vunpack.c.h.b16 %v1715
    %v2396 = vunpack.c.l.b16 %v1716
    %v2397 = vunpack.c.h.b16 %v1716
    %v2398 = vunpack.c.l.b16 %v1717
    %v2399 = vunpack.c.h.b16 %v1717
    %v2400 = vunpack.c.l.b16 %v1718
    %v2401 = vunpack.c.h.b16 %v1718
    %v2402 = vunpack.c.l.b16 %v1719
    %v2403 = vunpack.c.h.b16 %v1719
    %v2404 = vunpack.c.l.b16 %v1720
    %v2405 = vunpack.c.h.b16 %v1720
    %v2406 = vunpack.c.l.b16 %v1721
    %v2407 = vunpack.c.h.b16 %v1721
    %v2408 = vunpack.c.l.b16 %v1722
    %v2409 = vunpack.c.h.b16 %v1722
    %v2410 = vunpack.c.l.b16 %v1723
    %v2411 = vunpack.c.h.b16 %v1723
    %v2412 = vunpack.c.l.b16 %v1724
    %v2413 = vunpack.c.h.b16 %v1724
    %v2414 = vunpack.c.l.b16 %v1725
    %v2415 = vunpack.c.h.b16 %v1725
    %v2416 = vunpack.c.l.b16 %v1726
    %v2417 = vunpack.c.h.b16 %v1726
    %v2418 = vunpack.c.l.b16 %v1727
    %v2419 = vunpack.c.h.b16 %v1727
    %v2420 = vunpack.c.l.b16 %v1728
    %v2421 = vunpack.c.h.b16 %v1728
    %v2422 = vunpack.c.l.b16 %v1729
    %v2423 = vunpack.c.h.b16 %v1729
    %v2424 = vunpack.c.l.b16 %v1730
    %v2425 = vunpack.c.h.b16 %v1730
    %v2426 = vunpack.c.l.b16 %v1731
    %v2427 = vunpack.c.h.b16 %v1731
    %v2428 = vunpack.c.l.b16 %v1732
    %v2429 = vunpack.c.h.b16 %v1732
    %v2430 = vunpack.c.l.b16 %v1733
    %v2431 = vunpack.c.h.b16 %v1733
    %v2432 = vunpack.c.l.b16 %v1734
    %v2433 = vunpack.c.h.b16 %v1734
    %v2434 = vunpack.c.l.b16 %v1735
    %v2435 = vunpack.c.h.b16 %v1735
    %v2436 = vunpack.c.l.b16 %v1736
    %v2437 = vunpack.c.h.b16 %v1736
    %v2438 = vunpack.c.l.b16 %v1737
    %v2439 = vunpack.c.h.b16 %v1737
    %v2440 = vunpack.c.l.b16 %v1738
    %v2441 = vunpack.c.h.b16 %v1738
    %v2442 = vunpack.c.l.b16 %v1739
    %v2443 = vunpack.c.h.b16 %v1739
    %v2444 = vunpack.c.l.b16 %v1740
    %v2445 = vunpack.c.h.b16 %v1740
    %v2446 = vunpack.c.l.b16 %v1741
    %v2447 = vunpack.c.h.b16 %v1741
    %v2448 = vunpack.c.l.b16 %v1742
    %v2449 = vunpack.c.h.b16 %v1742
    %v2450 = vunpack.c.l.b16 %v1743
    %v2451 = vunpack.c.h.b16 %v1743
    %v2452 = vunpack.c.l.b16 %v1744
    %v2453 = vunpack.c.h.b16 %v1744
    %v2454 = vunpack.c.l.b16 %v1745
    %v2455 = vunpack.c.h.b16 %v1745
    %v2456 = vunpack.c.l.b16 %v1746
    %v2457 = vunpack.c.h.b16 %v1746
    %v2458 = vunpack.c.l.b16 %v1747
    %v2459 = vunpack.c.h.b16 %v1747
    %v2460 = vunpack.c.l.b16 %v1748
    %v2461 = vunpack.c.h.b16 %v1748
    %v2462 = vunpack.c.l.b16 %v1749
    %v2463 = vunpack.c.h.b16 %v1749
    %v2464 = vunpack.c.l.b16 %v1750
    %v2465 = vunpack.c.h.b16 %v1750
    %v2466 = vunpack.c.l.b16 %v1751
    %v2467 = vunpack.c.h.b16 %v1751
    %v2468 = vunpack.c.l.b16 %v1752
    %v2469 = vunpack.c.h.b16 %v1752
    %v2470 = vunpack.c.l.b16 %v1753
    %v2471 = vunpack.c.h.b16 %v1753
    %v2472 = vunpack.c.l.b16 %v1754
    %v2473 = vunpack.c.h.b16 %v1754
    %v2474 = vunpack.c.l.b16 %v1755
    %v2475 = vunpack.c.h.b16 %v1755
    %v2476 = vunpack.c.l.b16 %v1756
    %v2477 = vunpack.c.h.b16 %v1756
    %v2478 = vunpack.c.l.b16 %v1757
    %v2479 = vunpack.c.h.b16 %v1757
    %v2480 = vunpack.c.l.b16 %v1758
    %v2481 = vunpack.c.h.b16 %v1758
    %v2482 = vunpack.c.l.b16 %v1759
    %v2483 = vunpack.c.h.b16 %v1759
    %v2484 = vunpack.c.l.b16 %v1760
    %v2485 = vunpack.c.h.b16 %v1760
    %v2486 = vunpack.c.l.b16 %v1761
    %v2487 = vunpack.c.h.b16 %v1761
    %v2488 = vunpack.c.l.b16 %v1762
    %v2489 = vunpack.c.h.b16 %v1762
    %v2490 = vunpack.c.l.b16 %v1763
    %v2491 = vunpack.c.h.b16 %v1763
    %v2492 = vunpack.c.l.b16 %v1764
    %v2493 = vunpack.c.h.b16 %v1764
    %v2494 = vunpack.c.l.b16 %v1765
    %v2495 = vunpack.c.h.b16 %v1765
    %v2496 = vunpack.c.l.b16 %v1766
    %v2497 = vunpack.c.h.b16 %v1766
    %v2498 = vunpack.c.l.b16 %v1767
    %v2499 = vunpack.c.h.b16 %v1767
    %v2500 = vunpack.c.l.b16 %v1768
    %v2501 = vunpack.c.h.b16 %v1768
    %v2502 = vunpack.c.l.b16 %v1769
    %v2503 = vunpack.c.h.b16 %v1769
    %v2504 = vunpack.c.l.b16 %v1770
    %v2505 = vunpack.c.h.b16 %v1770
    %v2506 = vunpack.c.l.b16 %v1771
    %v2507 = vunpack.c.h.b16 %v1771
    %v2508 = vunpack.c.l.b16 %v1772
    %v2509 = vunpack.c.h.b16 %v1772
    %v2510 = vunpack.c.l.b16 %v1773
    %v2511 = vunpack.c.h.b16 %v1773
    %v2512 = vunpack.c.l.b16 %v1774
    %v2513 = vunpack.c.h.b16 %v1774
    %v2514 = vunpack.c.l.b16 %v1775
    %v2515 = vunpack.c.h.b16 %v1775
    %v2516 = vunpack.c.l.b16 %v1776
    %v2517 = vunpack.c.h.b16 %v1776
    %v2518 = vunpack.c.l.b16 %v1777
    %v2519 = vunpack.c.h.b16 %v1777
    %v2520 = vunpack.c.l.b16 %v1778
    %v2521 = vunpack.c.h.b16 %v1778
    %v2522 = vunpack.c.l.b16 %v1779
    %v2523 = vunpack.c.h.b16 %v1779
    %v2524 = vunpack.c.l.b16 %v1780
    %v2525 = vunpack.c.h.b16 %v1780
    %v2526 = vunpack.c.l.b16 %v1781
    %v2527 = vunpack.c.h.b16 %v1781
    %v2528 = vunpack.c.l.b16 %v1782
    %v2529 = vunpack.c.h.b16 %v1782
    %v2530 = vunpack.c.l.b16 %v1783
    %v2531 = vunpack.c.h.b16 %v1783
    %v2532 = vunpack.c.l.b16 %v1784
    %v2533 = vunpack.c.h.b16 %v1784
    %v2534 = vunpack.c.l.b16 %v1785
    %v2535 = vunpack.c.h.b16 %v1785
    %v2536 = vunpack.c.l.b16 %v1786
    %v2537 = vunpack.c.h.b16 %v1786
    %v2538 = vunpack.c.l.b16 %v1787
    %v2539 = vunpack.c.h.b16 %v1787
    %v2540 = vunpack.c.l.b16 %v1788
    %v2541 = vunpack.c.h.b16 %v1788
    %v2542 = vunpack.c.l.b16 %v1789
    %v2543 = vunpack.c.h.b16 %v1789
    %v2544 = vunpack.c.l.b16 %v1790
    %v2545 = vunpack.c.h.b16 %v1790
    %v2546 = vunpack.c.l.b16 %v1791
    %v2547 = vunpack.c.h.b16 %v1791
    %v2548 = vunpack.c.l.b16 %v1792
    %v2549 = vunpack.c.h.b16 %v1792
    %v2550 = vunpack.c.l.b16 %v1793
    %v2551 = vunpack.c.h.b16 %v1793
    %v2552 = vunpack.c.l.b16 %v1794
    %v2553 = vunpack.c.h.b16 %v1794
    %v2554 = vunpack.c.l.b16 %v1795
    %v2555 = vunpack.c.h.b16 %v1795
    %v2556 = vunpack.c.l.b16 %v1796
    %v2557 = vunpack.c.h.b16 %v1796
    %v2558 = vunpack.c.l.b16 %v1797
    %v2559 = vunpack.c.h.b16 %v1797
    %v2560 = vunpack.c.l.b16 %v1798
    %v2561 = vunpack.c.h.b16 %v1798
    %v2562 = vunpack.c.l.b16 %v1799
    %v2563 = vunpack.c.h.b16 %v1799
    %v2564 = vunpack.c.l.b16 %v1800
    %v2565 = vunpack.c.h.b16 %v1800
    %v2566 = vunpack.c.l.b16 %v1801
    %v2567 = vunpack.c.h.b16 %v1801
    %v2568 = vunpack.c.l.b16 %v1802
    %v2569 = vunpack.c.h.b16 %v1802
    %v2570 = vunpack.c.l.b16 %v1803
    %v2571 = vunpack.c.h.b16 %v1803
    %v2572 = vpack.c.b16 %v2064, %v2060
    %v2573 = vpack.c.b16 %v2065, %v2061
    %v2574 = vpack.c.b16 %v2066, %v2062
    %v2575 = vpack.c.b16 %v2067, %v2063
    %v2576 = vpack.c.b16 %v2072, %v2068
    %v2577 = vpack.c.b16 %v2073, %v2069
    %v2578 = vpack.c.b16 %v2074, %v2070
    %v2579 = vpack.c.b16 %v2075, %v2071
    %v2580 = vpack.c.b16 %v2080, %v2076
    %v2581 = vpack.c.b16 %v2081, %v2077
    %v2582 = vpack.c.b16 %v2082, %v2078
    %v2583 = vpack.c.b16 %v2083, %v2079
    %v2584 = vpack.c.b16 %v2088, %v2084
    %v2585 = vpack.c.b16 %v2089, %v2085
    %v2586 = vpack.c.b16 %v2090, %v2086
    %v2587 = vpack.c.b16 %v2091, %v2087
    %v2588 = vpack.c.b16 %v2096, %v2092
    %v2589 = vpack.c.b16 %v2097, %v2093
    %v2590 = vpack.c.b16 %v2098, %v2094
    %v2591 = vpack.c.b16 %v2099, %v2095
    %v2592 = vpack.c.b16 %v2104, %v2100
    %v2593 = vpack.c.b16 %v2105, %v2101
    %v2594 = vpack.c.b16 %v2106, %v2102
    %v2595 = vpack.c.b16 %v2107, %v2103
    %v2596 = vpack.c.b16 %v2112, %v2108
    %v2597 = vpack.c.b16 %v2113, %v2109
    %v2598 = vpack.c.b16 %v2114, %v2110
    %v2599 = vpack.c.b16 %v2115, %v2111
    %v2600 = vpack.c.b16 %v2120, %v2116
    %v2601 = vpack.c.b16 %v2121, %v2117
    %v2602 = vpack.c.b16 %v2122, %v2118
    %v2603 = vpack.c.b16 %v2123, %v2119
    %v2604 = vpack.c.b16 %v2128, %v2124
    %v2605 = vpack.c.b16 %v2129, %v2125
    %v2606 = vpack.c.b16 %v2130, %v2126
    %v2607 = vpack.c.b16 %v2131, %v2127
    %v2608 = vpack.c.b16 %v2136, %v2132
    %v2609 = vpack.c.b16 %v2137, %v2133
    %v2610 = vpack.c.b16 %v2138, %v2134
    %v2611 = vpack.c.b16 %v2139, %v2135
    %v2612 = vpack.c.b16 %v2144, %v2140
    %v2613 = vpack.c.b16 %v2145, %v2141
    %v2614 = vpack.c.b16 %v2146, %v2142
    %v2615 = vpack.c.b16 %v2147, %v2143
    %v2616 = vpack.c.b16 %v2152, %v2148
    %v2617 = vpack.c.b16 %v2153, %v2149
    %v2618 = vpack.c.b16 %v2154, %v2150
    %v2619 = vpack.c.b16 %v2155, %v2151
    %v2620 = vpack.c.b16 %v2160, %v2156
    %v2621 = vpack.c.b16 %v2161, %v2157
    %v2622 = vpack.c.b16 %v2162, %v2158
    %v2623 = vpack.c.b16 %v2163, %v2159
    %v2624 = vpack.c.b16 %v2168, %v2164
    %v2625 = vpack.c.b16 %v2169, %v2165
    %v2626 = vpack.c.b16 %v2170, %v2166
    %v2627 = vpack.c.b16 %v2171, %v2167
    %v2628 = vpack.c.b16 %v2176, %v2172
    %v2629 = vpack.c.b16 %v2177, %v2173
    %v2630 = vpack.c.b16 %v2178, %v2174
    %v2631 = vpack.c.b16 %v2179, %v2175
    %v2632 = vpack.c.b16 %v2184, %v2180
    %v2633 = vpack.c.b16 %v2185, %v2181
    %v2634 = vpack.c.b16 %v2186, %v2182
    %v2635 = vpack.c.b16 %v2187, %v2183
    %v2636 = vpack.c.b16 %v2192, %v2188
    %v2637 = vpack.c.b16 %v2193, %v2189
    %v2638 = vpack.c.b16 %v2194, %v2190
    %v2639 = vpack.c.b16 %v2195, %v2191
    %v2640 = vpack.c.b16 %v2200, %v2196
    %v2641 = vpack.c.b16 %v2201, %v2197
    %v2642 = vpack.c.b16 %v2202, %v2198
    %v2643 = vpack.c.b16 %v2203, %v2199
    %v2644 = vpack.c.b16 %v2208, %v2204
    %v2645 = vpack.c.b16 %v2209, %v2205
    %v2646 = vpack.c.b16 %v2210, %v2206
    %v2647 = vpack.c.b16 %v2211, %v2207
    %v2648 = vpack.c.b16 %v2216, %v2212
    %v2649 = vpack.c.b16 %v2217, %v2213
    %v2650 = vpack.c.b16 %v2218, %v2214
    %v2651 = vpack.c.b16 %v2219, %v2215
    %v2652 = vpack.c.b16 %v2224, %v2220
    %v2653 = vpack.c.b16 %v2225, %v2221
    %v2654 = vpack.c.b16 %v2226, %v2222
    %v2655 = vpack.c.b16 %v2227, %v2223
    %v2656 = vpack.c.b16 %v2232, %v2228
    %v2657 = vpack.c.b16 %v2233, %v2229
    %v2658 = vpack.c.b16 %v2234, %v2230
    %v2659 = vpack.c.b16 %v2235, %v2231
    %v2660 = vpack.c.b16 %v2240, %v2236
    %v2661 = vpack.c.b16 %v2241, %v2237
    %v2662 = vpack.c.b16 %v2242, %v2238
    %v2663 = vpack.c.b16 %v2243, %v2239
    %v2664 = vpack.c.b16 %v2248, %v2244
    %v2665 = vpack.c.b16 %v2249, %v2245
    %v2666 = vpack.c.b16 %v2250, %v2246
    %v2667 = vpack.c.b16 %v2251, %v2247
    %v2668 = vpack.c.b16 %v2256, %v2252
    %v2669 = vpack.c.b16 %v2257, %v2253
    %v2670 = vpack.c.b16 %v2258, %v2254
    %v2671 = vpack.c.b16 %v2259, %v2255
    %v2672 = vpack.c.b16 %v2264, %v2260
    %v2673 = vpack.c.b16 %v2265, %v2261
    %v2674 = vpack.c.b16 %v2266, %v2262
    %v2675 = vpack.c.b16 %v2267, %v2263
    %v2676 = vpack.c.b16 %v2272, %v2268
    %v2677 = vpack.c.b16 %v2273, %v2269
    %v2678 = vpack.c.b16 %v2274, %v2270
    %v2679 = vpack.c.b16 %v2275, %v2271
    %v2680 = vpack.c.b16 %v2280, %v2276
    %v2681 = vpack.c.b16 %v2281, %v2277
    %v2682 = vpack.c.b16 %v2282, %v2278
    %v2683 = vpack.c.b16 %v2283, %v2279
    %v2684 = vpack.c.b16 %v2288, %v2284
    %v2685 = vpack.c.b16 %v2289, %v2285
    %v2686 = vpack.c.b16 %v2290, %v2286
    %v2687 = vpack.c.b16 %v2291, %v2287
    %v2688 = vpack.c.b16 %v2296, %v2292
    %v2689 = vpack.c.b16 %v2297, %v2293
    %v2690 = vpack.c.b16 %v2298, %v2294
    %v2691 = vpack.c.b16 %v2299, %v2295
    %v2692 = vpack.c.b16 %v2304, %v2300
    %v2693 = vpack.c.b16 %v2305, %v2301
    %v2694 = vpack.c.b16 %v2306, %v2302
    %v2695 = vpack.c.b16 %v2307, %v2303
    %v2696 = vpack.c.b16 %v2312, %v2308
    %v2697 = vpack.c.b16 %v2313, %v2309
    %v2698 = vpack.c.b16 %v2314, %v2310
    %v2699 = vpack.c.b16 %v2315, %v2311
    %v2700 = vpack.c.b16 %v2320, %v2316
    %v2701 = vpack.c.b16 %v2321, %v2317
    %v2702 = vpack.c.b16 %v2322, %v2318
    %v2703 = vpack.c.b16 %v2323, %v2319
    %v2704 = vpack.c.b16 %v2328, %v2324
    %v2705 = vpack.c.b16 %v2329, %v2325
    %v2706 = vpack.c.b16 %v2330, %v2326
    %v2707 = vpack.c.b16 %v2331, %v2327
    %v2708 = vpack.c.b16 %v2336, %v2332
    %v2709 = vpack.c.b16 %v2337, %v2333
    %v2710 = vpack.c.b16 %v2338, %v2334
    %v2711 = vpack.c.b16 %v2339, %v2335
    %v2712 = vpack.c.b16 %v2344, %v2340
    %v2713 = vpack.c.b16 %v2345, %v2341
    %v2714 = vpack.c.b16 %v2346, %v2342
    %v2715 = vpack.c.b16 %v2347, %v2343
    %v2716 = vpack.c.b16 %v2352, %v2348
    %v2717 = vpack.c.b16 %v2353, %v2349
    %v2718 = vpack.c.b16 %v2354, %v2350
    %v2719 = vpack.c.b16 %v2355, %v2351
    %v2720 = vpack.c.b16 %v2360, %v2356
    %v2721 = vpack.c.b16 %v2361, %v2357
    %v2722 = vpack.c.b16 %v2362, %v2358
    %v2723 = vpack.c.b16 %v2363, %v2359
    %v2724 = vpack.c.b16 %v2368, %v2364
    %v2725 = vpack.c.b16 %v2369, %v2365
    %v2726 = vpack.c.b16 %v2370, %v2366
    %v2727 = vpack.c.b16 %v2371, %v2367
    %v2728 = vpack.c.b16 %v2376, %v2372
    %v2729 = vpack.c.b16 %v2377, %v2373
    %v2730 = vpack.c.b16 %v2378, %v2374
    %v2731 = vpack.c.b16 %v2379, %v2375
    %v2732 = vpack.c.b16 %v2384, %v2380
    %v2733 = vpack.c.b16 %v2385, %v2381
    %v2734 = vpack.c.b16 %v2386, %v2382
    %v2735 = vpack.c.b16 %v2387, %v2383
    %v2736 = vpack.c.b16 %v2392, %v2388
    %v2737 = vpack.c.b16 %v2393, %v2389
    %v2738 = vpack.c.b16 %v2394, %v2390
    %v2739 = vpack.c.b16 %v2395, %v2391
    %v2740 = vpack.c.b16 %v2400, %v2396
    %v2741 = vpack.c.b16 %v2401, %v2397
    %v2742 = vpack.c.b16 %v2402, %v2398
    %v2743 = vpack.c.b16 %v2403, %v2399
    %v2744 = vpack.c.b16 %v2408, %v2404
    %v2745 = vpack.c.b16 %v2409, %v2405
    %v2746 = vpack.c.b16 %v2410, %v2406
    %v2747 = vpack.c.b16 %v2411, %v2407
    %v2748 = vpack.c.b16 %v2416, %v2412
    %v2749 = vpack.c.b16 %v2417, %v2413
    %v2750 = vpack.c.b16 %v2418, %v2414
    %v2751 = vpack.c.b16 %v2419, %v2415
    %v2752 = vpack.c.b16 %v2424, %v2420
    %v2753 = vpack.c.b16 %v2425, %v2421
    %v2754 = vpack.c.b16 %v2426, %v2422
    %v2755 = vpack.c.b16 %v2427, %v2423
    %v2756 = vpack.c.b16 %v2432, %v2428
    %v2757 = vpack.c.b16 %v2433, %v2429
    %v2758 = vpack.c.b16 %v2434, %v2430
    %v2759 = vpack.c.b16 %v2435, %v2431
    %v2760 = vpack.c.b16 %v2440, %v2436
    %v2761 = vpack.c.b16 %v2441, %v2437
    %v2762 = vpack.c.b16 %v2442, %v2438
    %v2763 = vpack.c.b16 %v2443, %v2439
    %v2764 = vpack.c.b16 %v2448, %v2444
    %v2765 = vpack.c.b16 %v2449, %v2445
    %v2766 = vpack.c.b16 %v2450, %v2446
    %v2767 = vpack.c.b16 %v2451, %v2447
    %v2768 = vpack.c.b16 %v2456, %v2452
    %v2769 = vpack.c.b16 %v2457, %v2453
    %v2770 = vpack.c.b16 %v2458, %v2454
    %v2771 = vpack.c.b16 %v2459, %v2455
    %v2772 = vpack.c.b16 %v2464, %v2460
    %v2773 = vpack.c.b16 %v2465, %v2461
    %v2774 = vpack.c.b16 %v2466, %v2462
    %v2775 = vpack.c.b16 %v2467, %v2463
    %v2776 = vpack.c.b16 %v2472, %v2468
    %v2777 = vpack.c.b16 %v2473, %v2469
    %v2778 = vpack.c.b16 %v2474, %v2470
    %v2779 = vpack.c.b16 %v2475, %v2471
    %v2780 = vpack.c.b16 %v2480, %v2476
    %v2781 = vpack.c.b16 %v2481, %v2477
    %v2782 = vpack.c.b16 %v2482, %v2478
    %v2783 = vpack.c.b16 %v2483, %v2479
    %v2784 = vpack.c.b16 %v2488, %v2484
    %v2785 = vpack.c.b16 %v2489, %v2485
    %v2786 = vpack.c.b16 %v2490, %v2486
    %v2787 = vpack.c.b16 %v2491, %v2487
    %v2788 = vpack.c.b16 %v2496, %v2492
    %v2789 = vpack.c.b16 %v2497, %v2493
    %v2790 = vpack.c.b16 %v2498, %v2494
    %v2791 = vpack.c.b16 %v2499, %v2495
    %v2792 = vpack.c.b16 %v2504, %v2500
    %v2793 = vpack.c.b16 %v2505, %v2501
    %v2794 = vpack.c.b16 %v2506, %v2502
    %v2795 = vpack.c.b16 %v2507, %v2503
    %v2796 = vpack.c.b16 %v2512, %v2508
    %v2797 = vpack.c.b16 %v2513, %v2509
    %v2798 = vpack.c.b16 %v2514, %v2510
    %v2799 = vpack.c.b16 %v2515, %v2511
    %v2800 = vpack.c.b16 %v2520, %v2516
    %v2801 = vpack.c.b16 %v2521, %v2517
    %v2802 = vpack.c.b16 %v2522, %v2518
    %v2803 = vpack.c.b16 %v2523, %v2519
    %v2804 = vpack.c.b16 %v2528, %v2524
    %v2805 = vpack.c.b16 %v2529, %v2525
    %v2806 = vpack.c.b16 %v2530, %v2526
    %v2807 = vpack.c.b16 %v2531, %v2527
    %v2808 = vpack.c.b16 %v2536, %v2532
    %v2809 = vpack.c.b16 %v2537, %v2533
    %v2810 = vpack.c.b16 %v2538, %v2534
    %v2811 = vpack.c.b16 %v2539, %v2535
    %v2812 = vpack.c.b16 %v2544, %v2540
    %v2813 = vpack.c.b16 %v2545, %v2541
    %v2814 = vpack.c.b16 %v2546, %v2542
    %v2815 = vpack.c.b16 %v2547, %v2543
    %v2816 = vpack.c.b16 %v2552, %v2548
    %v2817 = vpack.c.b16 %v2553, %v2549
    %v2818 = vpack.c.b16 %v2554, %v2550
    %v2819 = vpack.c.b16 %v2555, %v2551
    %v2820 = vpack.c.b16 %v2560, %v2556
    %v2821 = vpack.c.b16 %v2561, %v2557
    %v2822 = vpack.c.b16 %v2562, %v2558
    %v2823 = vpack.c.b16 %v2563, %v2559
    %v2824 = vpack.c.b16 %v2568, %v2564
    %v2825 = vpack.c.b16 %v2569, %v2565
    %v2826 = vpack.c.b16 %v2570, %v2566
    %v2827 = vpack.c.b16 %v2571, %v2567
    %3084 = vmatpush.bf16.msra.mxu0 %v2600
    %3085 = vmatpush.bf16.msra.mxu0 %v2596
    %3086 = vmatpush.bf16.msra.mxu0 %v2592
    %3087 = vmatpush.bf16.msra.mxu0 %v2588
    %3088 = vmatpush.bf16.msra.mxu0 %v2584
    %3089 = vmatpush.bf16.msra.mxu0 %v2580
    %3090 = vmatpush.bf16.msra.mxu0 %v2576
    %3091 = vmatpush.bf16.msra.mxu0 %v2572
    %3092 = vmatmul.bf16.gmra.mxu0 %v1540
    %v3093 = vpop.f32.mrf.mxu0
    %v3094 = vadd.f32 0.0, %v3093
    %v3095 = vpop.f32.mrf.mxu0
    %3096 = vdwg.mxu0
    %3097 = vmatpush.bf16.msra.mxu0 %v2632
    %3098 = vmatpush.bf16.msra.mxu0 %v2628
    %3099 = vmatpush.bf16.msra.mxu0 %v2624
    %3100 = vmatpush.bf16.msra.mxu0 %v2620
    %3101 = vmatpush.bf16.msra.mxu0 %v2616
    %3102 = vmatpush.bf16.msra.mxu0 %v2612
    %3103 = vmatpush.bf16.msra.mxu0 %v2608
    %3104 = vmatpush.bf16.msra.mxu0 %v2604
    %3105 = vmatmul.bf16.gmra.mxu0 %v1541
    %v3106 = vpop.f32.mrf.mxu0
    %v3107 = vadd.f32 %v3094, %v3106
    %v3108 = vpop.f32.mrf.mxu0
    %3109 = vdwg.mxu0
    %3110 = vmatpush.bf16.msra.mxu0 %v2664
    %3111 = vmatpush.bf16.msra.mxu0 %v2660
    %3112 = vmatpush.bf16.msra.mxu0 %v2656
    %3113 = vmatpush.bf16.msra.mxu0 %v2652
    %3114 = vmatpush.bf16.msra.mxu0 %v2648
    %3115 = vmatpush.bf16.msra.mxu0 %v2644
    %3116 = vmatpush.bf16.msra.mxu0 %v2640
    %3117 = vmatpush.bf16.msra.mxu0 %v2636
    %3118 = vmatmul.bf16.gmra.mxu0 %v1542
    %v3119 = vpop.f32.mrf.mxu0
    %v3120 = vadd.f32 %v3107, %v3119
    %v3121 = vpop.f32.mrf.mxu0
    %3122 = vdwg.mxu0
    %3123 = vmatpush.bf16.msra.mxu0 %v2696
    %3124 = vmatpush.bf16.msra.mxu0 %v2692
    %3125 = vmatpush.bf16.msra.mxu0 %v2688
    %3126 = vmatpush.bf16.msra.mxu0 %v2684
    %3127 = vmatpush.bf16.msra.mxu0 %v2680
    %3128 = vmatpush.bf16.msra.mxu0 %v2676
    %3129 = vmatpush.bf16.msra.mxu0 %v2672
    %3130 = vmatpush.bf16.msra.mxu0 %v2668
    %3131 = vmatmul.bf16.gmra.mxu0 %v1543
    %v3132 = vpop.f32.mrf.mxu0
    %v3133 = vadd.f32 %v3120, %v3132
    %v3134 = vpop.f32.mrf.mxu0
    %3135 = vdwg.mxu0
    %3136 = vmatpush.bf16.msra.mxu0 %v2728
    %3137 = vmatpush.bf16.msra.mxu0 %v2724
    %3138 = vmatpush.bf16.msra.mxu0 %v2720
    %3139 = vmatpush.bf16.msra.mxu0 %v2716
    %3140 = vmatpush.bf16.msra.mxu0 %v2712
    %3141 = vmatpush.bf16.msra.mxu0 %v2708
    %3142 = vmatpush.bf16.msra.mxu0 %v2704
    %3143 = vmatpush.bf16.msra.mxu0 %v2700
    %3144 = vmatmul.bf16.gmra.mxu0 %v1544
    %v3145 = vpop.f32.mrf.mxu0
    %v3146 = vadd.f32 %v3133, %v3145
    %v3147 = vpop.f32.mrf.mxu0
    %3148 = vdwg.mxu0
    %3149 = vmatpush.bf16.msra.mxu0 %v2760
    %3150 = vmatpush.bf16.msra.mxu0 %v2756
    %3151 = vmatpush.bf16.msra.mxu0 %v2752
    %3152 = vmatpush.bf16.msra.mxu0 %v2748
    %3153 = vmatpush.bf16.msra.mxu0 %v2744
    %3154 = vmatpush.bf16.msra.mxu0 %v2740
    %3155 = vmatpush.bf16.msra.mxu0 %v2736
    %3156 = vmatpush.bf16.msra.mxu0 %v2732
    %3157 = vmatmul.bf16.gmra.mxu0 %v1545
    %v3158 = vpop.f32.mrf.mxu0
    %v3159 = vadd.f32 %v3146, %v3158
    %v3160 = vpop.f32.mrf.mxu0
    %3161 = vdwg.mxu0
    %3162 = vmatpush.bf16.msra.mxu0 %v2792
    %3163 = vmatpush.bf16.msra.mxu0 %v2788
    %3164 = vmatpush.bf16.msra.mxu0 %v2784
    %3165 = vmatpush.bf16.msra.mxu0 %v2780
    %3166 = vmatpush.bf16.msra.mxu0 %v2776
    %3167 = vmatpush.bf16.msra.mxu0 %v2772
    %3168 = vmatpush.bf16.msra.mxu0 %v2768
    %3169 = vmatpush.bf16.msra.mxu0 %v2764
    %3170 = vmatmul.bf16.gmra.mxu0 %v1546
    %v3171 = vpop.f32.mrf.mxu0
    %v3172 = vadd.f32 %v3159, %v3171
    %v3173 = vpop.f32.mrf.mxu0
    %3174 = vdwg.mxu0
    %3175 = vmatpush.bf16.msra.mxu0 %v2824
    %3176 = vmatpush.bf16.msra.mxu0 %v2820
    %3177 = vmatpush.bf16.msra.mxu0 %v2816
    %3178 = vmatpush.bf16.msra.mxu0 %v2812
    %3179 = vmatpush.bf16.msra.mxu0 %v2808
    %3180 = vmatpush.bf16.msra.mxu0 %v2804
    %3181 = vmatpush.bf16.msra.mxu0 %v2800
    %3182 = vmatpush.bf16.msra.mxu0 %v2796
    %3183 = vmatmul.bf16.gmra.mxu0 %v1547
    %v3184 = vpop.f32.mrf.mxu0
    %v3185 = vadd.f32 %v3172, %v3184
    %v3186 = vpop.f32.mrf.mxu0
    %3187 = vdwg.mxu0
    %3188 = vmatpush.bf16.msra.mxu0 %v2601
    %3189 = vmatpush.bf16.msra.mxu0 %v2597
    %3190 = vmatpush.bf16.msra.mxu0 %v2593
    %3191 = vmatpush.bf16.msra.mxu0 %v2589
    %3192 = vmatpush.bf16.msra.mxu0 %v2585
    %3193 = vmatpush.bf16.msra.mxu0 %v2581
    %3194 = vmatpush.bf16.msra.mxu0 %v2577
    %3195 = vmatpush.bf16.msra.mxu0 %v2573
    %3196 = vmatmul.bf16.gmra.mxu0 %v1540
    %v3197 = vpop.f32.mrf.mxu0
    %v3198 = vadd.f32 0.0, %v3197
    %v3199 = vpop.f32.mrf.mxu0
    %3200 = vdwg.mxu0
    %3201 = vmatpush.bf16.msra.mxu0 %v2633
    %3202 = vmatpush.bf16.msra.mxu0 %v2629
    %3203 = vmatpush.bf16.msra.mxu0 %v2625
    %3204 = vmatpush.bf16.msra.mxu0 %v2621
    %3205 = vmatpush.bf16.msra.mxu0 %v2617
    %3206 = vmatpush.bf16.msra.mxu0 %v2613
    %3207 = vmatpush.bf16.msra.mxu0 %v2609
    %3208 = vmatpush.bf16.msra.mxu0 %v2605
    %3209 = vmatmul.bf16.gmra.mxu0 %v1541
    %v3210 = vpop.f32.mrf.mxu0
    %v3211 = vadd.f32 %v3198, %v3210
    %v3212 = vpop.f32.mrf.mxu0
    %3213 = vdwg.mxu0
    %3214 = vmatpush.bf16.msra.mxu0 %v2665
    %3215 = vmatpush.bf16.msra.mxu0 %v2661
    %3216 = vmatpush.bf16.msra.mxu0 %v2657
    %3217 = vmatpush.bf16.msra.mxu0 %v2653
    %3218 = vmatpush.bf16.msra.mxu0 %v2649
    %3219 = vmatpush.bf16.msra.mxu0 %v2645
    %3220 = vmatpush.bf16.msra.mxu0 %v2641
    %3221 = vmatpush.bf16.msra.mxu0 %v2637
    %3222 = vmatmul.bf16.gmra.mxu0 %v1542
    %v3223 = vpop.f32.mrf.mxu0
    %v3224 = vadd.f32 %v3211, %v3223
    %v3225 = vpop.f32.mrf.mxu0
    %3226 = vdwg.mxu0
    %3227 = vmatpush.bf16.msra.mxu0 %v2697
    %3228 = vmatpush.bf16.msra.mxu0 %v2693
    %3229 = vmatpush.bf16.msra.mxu0 %v2689
    %3230 = vmatpush.bf16.msra.mxu0 %v2685
    %3231 = vmatpush.bf16.msra.mxu0 %v2681
    %3232 = vmatpush.bf16.msra.mxu0 %v2677
    %3233 = vmatpush.bf16.msra.mxu0 %v2673
    %3234 = vmatpush.bf16.msra.mxu0 %v2669
    %3235 = vmatmul.bf16.gmra.mxu0 %v1543
    %v3236 = vpop.f32.mrf.mxu0
    %v3237 = vadd.f32 %v3224, %v3236
    %v3238 = vpop.f32.mrf.mxu0
    %3239 = vdwg.mxu0
    %3240 = vmatpush.bf16.msra.mxu0 %v2729
    %3241 = vmatpush.bf16.msra.mxu0 %v2725
    %3242 = vmatpush.bf16.msra.mxu0 %v2721
    %3243 = vmatpush.bf16.msra.mxu0 %v2717
    %3244 = vmatpush.bf16.msra.mxu0 %v2713
    %3245 = vmatpush.bf16.msra.mxu0 %v2709
    %3246 = vmatpush.bf16.msra.mxu0 %v2705
    %3247 = vmatpush.bf16.msra.mxu0 %v2701
    %3248 = vmatmul.bf16.gmra.mxu0 %v1544
    %v3249 = vpop.f32.mrf.mxu0
    %v3250 = vadd.f32 %v3237, %v3249
    %v3251 = vpop.f32.mrf.mxu0
    %3252 = vdwg.mxu0
    %3253 = vmatpush.bf16.msra.mxu0 %v2761
    %3254 = vmatpush.bf16.msra.mxu0 %v2757
    %3255 = vmatpush.bf16.msra.mxu0 %v2753
    %3256 = vmatpush.bf16.msra.mxu0 %v2749
    %3257 = vmatpush.bf16.msra.mxu0 %v2745
    %3258 = vmatpush.bf16.msra.mxu0 %v2741
    %3259 = vmatpush.bf16.msra.mxu0 %v2737
    %3260 = vmatpush.bf16.msra.mxu0 %v2733
    %3261 = vmatmul.bf16.gmra.mxu0 %v1545
    %v3262 = vpop.f32.mrf.mxu0
    %v3263 = vadd.f32 %v3250, %v3262
    %v3264 = vpop.f32.mrf.mxu0
    %3265 = vdwg.mxu0
    %3266 = vmatpush.bf16.msra.mxu0 %v2793
    %3267 = vmatpush.bf16.msra.mxu0 %v2789
    %3268 = vmatpush.bf16.msra.mxu0 %v2785
    %3269 = vmatpush.bf16.msra.mxu0 %v2781
    %3270 = vmatpush.bf16.msra.mxu0 %v2777
    %3271 = vmatpush.bf16.msra.mxu0 %v2773
    %3272 = vmatpush.bf16.msra.mxu0 %v2769
    %3273 = vmatpush.bf16.msra.mxu0 %v2765
    %3274 = vmatmul.bf16.gmra.mxu0 %v1546
    %v3275 = vpop.f32.mrf.mxu0
    %v3276 = vadd.f32 %v3263, %v3275
    %v3277 = vpop.f32.mrf.mxu0
    %3278 = vdwg.mxu0
    %3279 = vmatpush.bf16.msra.mxu0 %v2825
    %3280 = vmatpush.bf16.msra.mxu0 %v2821
    %3281 = vmatpush.bf16.msra.mxu0 %v2817
    %3282 = vmatpush.bf16.msra.mxu0 %v2813
    %3283 = vmatpush.bf16.msra.mxu0 %v2809
    %3284 = vmatpush.bf16.msra.mxu0 %v2805
    %3285 = vmatpush.bf16.msra.mxu0 %v2801
    %3286 = vmatpush.bf16.msra.mxu0 %v2797
    %3287 = vmatmul.bf16.gmra.mxu0 %v1547
    %v3288 = vpop.f32.mrf.mxu0
    %v3289 = vadd.f32 %v3276, %v3288
    %v3290 = vpop.f32.mrf.mxu0
    %3291 = vdwg.mxu0
    %3292 = vmatpush.bf16.msra.mxu0 %v2602
    %3293 = vmatpush.bf16.msra.mxu0 %v2598
    %3294 = vmatpush.bf16.msra.mxu0 %v2594
    %3295 = vmatpush.bf16.msra.mxu0 %v2590
    %3296 = vmatpush.bf16.msra.mxu0 %v2586
    %3297 = vmatpush.bf16.msra.mxu0 %v2582
    %3298 = vmatpush.bf16.msra.mxu0 %v2578
    %3299 = vmatpush.bf16.msra.mxu0 %v2574
    %3300 = vmatmul.bf16.gmra.mxu0 %v1540
    %v3301 = vpop.f32.mrf.mxu0
    %v3302 = vadd.f32 0.0, %v3301
    %v3303 = vpop.f32.mrf.mxu0
    %3304 = vdwg.mxu0
    %3305 = vmatpush.bf16.msra.mxu0 %v2634
    %3306 = vmatpush.bf16.msra.mxu0 %v2630
    %3307 = vmatpush.bf16.msra.mxu0 %v2626
    %3308 = vmatpush.bf16.msra.mxu0 %v2622
    %3309 = vmatpush.bf16.msra.mxu0 %v2618
    %3310 = vmatpush.bf16.msra.mxu0 %v2614
    %3311 = vmatpush.bf16.msra.mxu0 %v2610
    %3312 = vmatpush.bf16.msra.mxu0 %v2606
    %3313 = vmatmul.bf16.gmra.mxu0 %v1541
    %v3314 = vpop.f32.mrf.mxu0
    %v3315 = vadd.f32 %v3302, %v3314
    %v3316 = vpop.f32.mrf.mxu0
    %3317 = vdwg.mxu0
    %3318 = vmatpush.bf16.msra.mxu0 %v2666
    %3319 = vmatpush.bf16.msra.mxu0 %v2662
    %3320 = vmatpush.bf16.msra.mxu0 %v2658
    %3321 = vmatpush.bf16.msra.mxu0 %v2654
    %3322 = vmatpush.bf16.msra.mxu0 %v2650
    %3323 = vmatpush.bf16.msra.mxu0 %v2646
    %3324 = vmatpush.bf16.msra.mxu0 %v2642
    %3325 = vmatpush.bf16.msra.mxu0 %v2638
    %3326 = vmatmul.bf16.gmra.mxu0 %v1542
    %v3327 = vpop.f32.mrf.mxu0
    %v3328 = vadd.f32 %v3315, %v3327
    %v3329 = vpop.f32.mrf.mxu0
    %3330 = vdwg.mxu0
    %3331 = vmatpush.bf16.msra.mxu0 %v2698
    %3332 = vmatpush.bf16.msra.mxu0 %v2694
    %3333 = vmatpush.bf16.msra.mxu0 %v2690
    %3334 = vmatpush.bf16.msra.mxu0 %v2686
    %3335 = vmatpush.bf16.msra.mxu0 %v2682
    %3336 = vmatpush.bf16.msra.mxu0 %v2678
    %3337 = vmatpush.bf16.msra.mxu0 %v2674
    %3338 = vmatpush.bf16.msra.mxu0 %v2670
    %3339 = vmatmul.bf16.gmra.mxu0 %v1543
    %v3340 = vpop.f32.mrf.mxu0
    %v3341 = vadd.f32 %v3328, %v3340
    %v3342 = vpop.f32.mrf.mxu0
    %3343 = vdwg.mxu0
    %3344 = vmatpush.bf16.msra.mxu0 %v2730
    %3345 = vmatpush.bf16.msra.mxu0 %v2726
    %3346 = vmatpush.bf16.msra.mxu0 %v2722
    %3347 = vmatpush.bf16.msra.mxu0 %v2718
    %3348 = vmatpush.bf16.msra.mxu0 %v2714
    %3349 = vmatpush.bf16.msra.mxu0 %v2710
    %3350 = vmatpush.bf16.msra.mxu0 %v2706
    %3351 = vmatpush.bf16.msra.mxu0 %v2702
    %3352 = vmatmul.bf16.gmra.mxu0 %v1544
    %v3353 = vpop.f32.mrf.mxu0
    %v3354 = vadd.f32 %v3341, %v3353
    %v3355 = vpop.f32.mrf.mxu0
    %3356 = vdwg.mxu0
    %3357 = vmatpush.bf16.msra.mxu0 %v2762
    %3358 = vmatpush.bf16.msra.mxu0 %v2758
    %3359 = vmatpush.bf16.msra.mxu0 %v2754
    %3360 = vmatpush.bf16.msra.mxu0 %v2750
    %3361 = vmatpush.bf16.msra.mxu0 %v2746
    %3362 = vmatpush.bf16.msra.mxu0 %v2742
    %3363 = vmatpush.bf16.msra.mxu0 %v2738
    %3364 = vmatpush.bf16.msra.mxu0 %v2734
    %3365 = vmatmul.bf16.gmra.mxu0 %v1545
    %v3366 = vpop.f32.mrf.mxu0
    %v3367 = vadd.f32 %v3354, %v3366
    %v3368 = vpop.f32.mrf.mxu0
    %3369 = vdwg.mxu0
    %3370 = vmatpush.bf16.msra.mxu0 %v2794
    %3371 = vmatpush.bf16.msra.mxu0 %v2790
    %3372 = vmatpush.bf16.msra.mxu0 %v2786
    %3373 = vmatpush.bf16.msra.mxu0 %v2782
    %3374 = vmatpush.bf16.msra.mxu0 %v2778
    %3375 = vmatpush.bf16.msra.mxu0 %v2774
    %3376 = vmatpush.bf16.msra.mxu0 %v2770
    %3377 = vmatpush.bf16.msra.mxu0 %v2766
    %3378 = vmatmul.bf16.gmra.mxu0 %v1546
    %v3379 = vpop.f32.mrf.mxu0
    %v3380 = vadd.f32 %v3367, %v3379
    %v3381 = vpop.f32.mrf.mxu0
    %3382 = vdwg.mxu0
    %3383 = vmatpush.bf16.msra.mxu0 %v2826
    %3384 = vmatpush.bf16.msra.mxu0 %v2822
    %3385 = vmatpush.bf16.msra.mxu0 %v2818
    %3386 = vmatpush.bf16.msra.mxu0 %v2814
    %3387 = vmatpush.bf16.msra.mxu0 %v2810
    %3388 = vmatpush.bf16.msra.mxu0 %v2806
    %3389 = vmatpush.bf16.msra.mxu0 %v2802
    %3390 = vmatpush.bf16.msra.mxu0 %v2798
    %3391 = vmatmul.bf16.gmra.mxu0 %v1547
    %v3392 = vpop.f32.mrf.mxu0
    %v3393 = vadd.f32 %v3380, %v3392
    %v3394 = vpop.f32.mrf.mxu0
    %3395 = vdwg.mxu0
    %3396 = vmatpush.bf16.msra.mxu0 %v2603
    %3397 = vmatpush.bf16.msra.mxu0 %v2599
    %3398 = vmatpush.bf16.msra.mxu0 %v2595
    %3399 = vmatpush.bf16.msra.mxu0 %v2591
    %3400 = vmatpush.bf16.msra.mxu0 %v2587
    %3401 = vmatpush.bf16.msra.mxu0 %v2583
    %3402 = vmatpush.bf16.msra.mxu0 %v2579
    %3403 = vmatpush.bf16.msra.mxu0 %v2575
    %3404 = vmatmul.bf16.gmra.mxu0 %v1540
    %v3405 = vpop.f32.mrf.mxu0
    %v3406 = vadd.f32 0.0, %v3405
    %v3407 = vpop.f32.mrf.mxu0
    %3408 = vdwg.mxu0
    %3409 = vmatpush.bf16.msra.mxu0 %v2635
    %3410 = vmatpush.bf16.msra.mxu0 %v2631
    %3411 = vmatpush.bf16.msra.mxu0 %v2627
    %3412 = vmatpush.bf16.msra.mxu0 %v2623
    %3413 = vmatpush.bf16.msra.mxu0 %v2619
    %3414 = vmatpush.bf16.msra.mxu0 %v2615
    %3415 = vmatpush.bf16.msra.mxu0 %v2611
    %3416 = vmatpush.bf16.msra.mxu0 %v2607
    %3417 = vmatmul.bf16.gmra.mxu0 %v1541
    %v3418 = vpop.f32.mrf.mxu0
    %v3419 = vadd.f32 %v3406, %v3418
    %v3420 = vpop.f32.mrf.mxu0
    %3421 = vdwg.mxu0
    %3422 = vmatpush.bf16.msra.mxu0 %v2667
    %3423 = vmatpush.bf16.msra.mxu0 %v2663
    %3424 = vmatpush.bf16.msra.mxu0 %v2659
    %3425 = vmatpush.bf16.msra.mxu0 %v2655
    %3426 = vmatpush.bf16.msra.mxu0 %v2651
    %3427 = vmatpush.bf16.msra.mxu0 %v2647
    %3428 = vmatpush.bf16.msra.mxu0 %v2643
    %3429 = vmatpush.bf16.msra.mxu0 %v2639
    %3430 = vmatmul.bf16.gmra.mxu0 %v1542
    %v3431 = vpop.f32.mrf.mxu0
    %v3432 = vadd.f32 %v3419, %v3431
    %v3433 = vpop.f32.mrf.mxu0
    %3434 = vdwg.mxu0
    %3435 = vmatpush.bf16.msra.mxu0 %v2699
    %3436 = vmatpush.bf16.msra.mxu0 %v2695
    %3437 = vmatpush.bf16.msra.mxu0 %v2691
    %3438 = vmatpush.bf16.msra.mxu0 %v2687
    %3439 = vmatpush.bf16.msra.mxu0 %v2683
    %3440 = vmatpush.bf16.msra.mxu0 %v2679
    %3441 = vmatpush.bf16.msra.mxu0 %v2675
    %3442 = vmatpush.bf16.msra.mxu0 %v2671
    %3443 = vmatmul.bf16.gmra.mxu0 %v1543
    %v3444 = vpop.f32.mrf.mxu0
    %v3445 = vadd.f32 %v3432, %v3444
    %v3446 = vpop.f32.mrf.mxu0
    %3447 = vdwg.mxu0
    %3448 = vmatpush.bf16.msra.mxu0 %v2731
    %3449 = vmatpush.bf16.msra.mxu0 %v2727
    %3450 = vmatpush.bf16.msra.mxu0 %v2723
    %3451 = vmatpush.bf16.msra.mxu0 %v2719
    %3452 = vmatpush.bf16.msra.mxu0 %v2715
    %3453 = vmatpush.bf16.msra.mxu0 %v2711
    %3454 = vmatpush.bf16.msra.mxu0 %v2707
    %3455 = vmatpush.bf16.msra.mxu0 %v2703
    %3456 = vmatmul.bf16.gmra.mxu0 %v1544
    %v3457 = vpop.f32.mrf.mxu0
    %v3458 = vadd.f32 %v3445, %v3457
    %v3459 = vpop.f32.mrf.mxu0
    %3460 = vdwg.mxu0
    %3461 = vmatpush.bf16.msra.mxu0 %v2763
    %3462 = vmatpush.bf16.msra.mxu0 %v2759
    %3463 = vmatpush.bf16.msra.mxu0 %v2755
    %3464 = vmatpush.bf16.msra.mxu0 %v2751
    %3465 = vmatpush.bf16.msra.mxu0 %v2747
    %3466 = vmatpush.bf16.msra.mxu0 %v2743
    %3467 = vmatpush.bf16.msra.mxu0 %v2739
    %3468 = vmatpush.bf16.msra.mxu0 %v2735
    %3469 = vmatmul.bf16.gmra.mxu0 %v1545
    %v3470 = vpop.f32.mrf.mxu0
    %v3471 = vadd.f32 %v3458, %v3470
    %v3472 = vpop.f32.mrf.mxu0
    %3473 = vdwg.mxu0
    %3474 = vmatpush.bf16.msra.mxu0 %v2795
    %3475 = vmatpush.bf16.msra.mxu0 %v2791
    %3476 = vmatpush.bf16.msra.mxu0 %v2787
    %3477 = vmatpush.bf16.msra.mxu0 %v2783
    %3478 = vmatpush.bf16.msra.mxu0 %v2779
    %3479 = vmatpush.bf16.msra.mxu0 %v2775
    %3480 = vmatpush.bf16.msra.mxu0 %v2771
    %3481 = vmatpush.bf16.msra.mxu0 %v2767
    %3482 = vmatmul.bf16.gmra.mxu0 %v1546
    %v3483 = vpop.f32.mrf.mxu0
    %v3484 = vadd.f32 %v3471, %v3483
    %v3485 = vpop.f32.mrf.mxu0
    %3486 = vdwg.mxu0
    %3487 = vmatpush.bf16.msra.mxu0 %v2827
    %3488 = vmatpush.bf16.msra.mxu0 %v2823
    %3489 = vmatpush.bf16.msra.mxu0 %v2819
    %3490 = vmatpush.bf16.msra.mxu0 %v2815
    %3491 = vmatpush.bf16.msra.mxu0 %v2811
    %3492 = vmatpush.bf16.msra.mxu0 %v2807
    %3493 = vmatpush.bf16.msra.mxu0 %v2803
    %3494 = vmatpush.bf16.msra.mxu0 %v2799
    %3495 = vmatmul.bf16.gmra.mxu0 %v1547
    %v3496 = vpop.f32.mrf.mxu0
    %v3497 = vadd.f32 %v3484, %v3496
    %v3498 = vpop.f32.mrf.mxu0
    %3499 = vdwg.mxu0
    %v3500 = vsel %vm1086, %v3185, 0.0
    %v3501 = vrot.slane %v3500, 4
    %v3502 = vadd.f32 %v3500, %v3501
    %v3503 = vrot.slane %v3502, 2
    %v3504 = vadd.f32 %v3502, %v3503
    %v3505 = vrot.slane %v3504, 1
    %v3506 = vadd.f32 %v3504, %v3505
    %v3507 = vsel %vm1086, %v3289, 0.0
    %v3508 = vrot.slane %v3507, 4
    %v3509 = vadd.f32 %v3507, %v3508
    %v3510 = vrot.slane %v3509, 2
    %v3511 = vadd.f32 %v3509, %v3510
    %v3512 = vrot.slane %v3511, 1
    %v3513 = vadd.f32 %v3511, %v3512
    %v3514 = vsel %vm1086, %v3393, 0.0
    %v3515 = vrot.slane %v3514, 4
    %v3516 = vadd.f32 %v3514, %v3515
    %v3517 = vrot.slane %v3516, 2
    %v3518 = vadd.f32 %v3516, %v3517
    %v3519 = vrot.slane %v3518, 1
    %v3520 = vadd.f32 %v3518, %v3519
    %v3521 = vsel %vm1086, %v3497, 0.0
    %v3522 = vrot.slane %v3521, 4
    %v3523 = vadd.f32 %v3521, %v3522
    %v3524 = vrot.slane %v3523, 2
    %v3525 = vadd.f32 %v3523, %v3524
    %v3526 = vrot.slane %v3525, 1
    %v3527 = vadd.f32 %v3525, %v3526
    %v3528 = vmul.f32 %v3185, %v3185
    %v3529 = vmul.f32 %v3289, %v3289
    %v3530 = vmul.f32 %v3393, %v3393
    %v3531 = vmul.f32 %v3497, %v3497
    %v3532 = vsel %vm1086, %v3528, 0.0
    %v3533 = vrot.slane %v3532, 4
    %v3534 = vadd.f32 %v3532, %v3533
    %v3535 = vrot.slane %v3534, 2
    %v3536 = vadd.f32 %v3534, %v3535
    %v3537 = vrot.slane %v3536, 1
    %v3538 = vadd.f32 %v3536, %v3537
    %v3539 = vsel %vm1086, %v3529, 0.0
    %v3540 = vrot.slane %v3539, 4
    %v3541 = vadd.f32 %v3539, %v3540
    %v3542 = vrot.slane %v3541, 2
    %v3543 = vadd.f32 %v3541, %v3542
    %v3544 = vrot.slane %v3543, 1
    %v3545 = vadd.f32 %v3543, %v3544
    %v3546 = vsel %vm1086, %v3530, 0.0
    %v3547 = vrot.slane %v3546, 4
    %v3548 = vadd.f32 %v3546, %v3547
    %v3549 = vrot.slane %v3548, 2
    %v3550 = vadd.f32 %v3548, %v3549
    %v3551 = vrot.slane %v3550, 1
    %v3552 = vadd.f32 %v3550, %v3551
    %v3553 = vsel %vm1086, %v3531, 0.0
    %v3554 = vrot.slane %v3553, 4
    %v3555 = vadd.f32 %v3553, %v3554
    %v3556 = vrot.slane %v3555, 2
    %v3557 = vadd.f32 %v3555, %v3556
    %v3558 = vrot.slane %v3557, 1
    %v3559 = vadd.f32 %v3557, %v3558
    %v3560 = vsel %vm1207, %v3506, %v3538
    %v3561 = vsel %vm1207, %v3513, %v3545
    %v3562 = vsel %vm1207, %v3520, %v3552
    %v3563 = vsel %vm1207, %v3527, %v3559
    %3564 = vrot.lane.b32.xlu0 %v3560, 32
    %v3565 = vpop.permute.xlu0 %3564
    %3566 = vrot.lane.b32.xlu0 %v3561, 32
    %v3567 = vpop.permute.xlu0 %3566
    %3568 = vrot.lane.b32.xlu0 %v3562, 32
    %v3569 = vpop.permute.xlu0 %3568
    %3570 = vrot.lane.b32.xlu0 %v3563, 32
    %v3571 = vpop.permute.xlu0 %3570
    %v3572 = vsel %vm1267, %v3569, %v3571
    %v3573 = vsel %vm1267, %v3567, %v3569
    %v3574 = vsel %vm1267, %v3565, %v3567
    %v3575 = vsel %vm1267, %v3571, %v3565
    %v3576 = vadd.f32 %v3560, %v3575
    %v3577 = vadd.f32 %v3561, %v3574
    %v3578 = vadd.f32 %v3562, %v3573
    %v3579 = vadd.f32 %v3563, %v3572
    %3580 = vrot.lane.b32.xlu0 %v3576, 64
    %v3581 = vpop.permute.xlu0 %3580
    %3582 = vrot.lane.b32.xlu0 %v3577, 64
    %v3583 = vpop.permute.xlu0 %3582
    %3584 = vrot.lane.b32.xlu0 %v3578, 64
    %v3585 = vpop.permute.xlu0 %3584
    %3586 = vrot.lane.b32.xlu0 %v3579, 64
    %v3587 = vpop.permute.xlu0 %3586
    %v3588 = vsel %vm1300, %v3585, %v3587
    %v3589 = vsel %vm1300, %v3583, %v3585
    %v3590 = vsel %vm1300, %v3581, %v3583
    %v3591 = vsel %vm1300, %v3587, %v3581
    %v3592 = vadd.f32 %v3576, %v3591
    %v3593 = vadd.f32 %v3577, %v3590
    %v3594 = vadd.f32 %v3578, %v3589
    %v3595 = vadd.f32 %v3579, %v3588
    %v3596 = vadd.f32 %v3592, %v3595
    %v3597 = vadd.f32 %v3593, %v3592
    %v3598 = vadd.f32 %v3594, %v3593
    %v3599 = vadd.f32 %v3595, %v3594
    %v3600 = vadd.f32 %v3596, %v3598
    %v3601 = vadd.f32 %v3597, %v3599
    %v3602 = vmul.f32 %v3600, 0.010416667
    %v3603 = vmul.f32 %v3601, 0.010416667
    %v3604 = vmul.f32 %v3602, %v3602
    %v3605 = vmul.f32 %v3603, %v3603
    %v3608 = vrot.slane %v3604, 7
    %v3609 = vrot.slane %v3605, 7
    %v3612 = vsub.f32 %v3602, %v3608
    %v3613 = vsub.f32 %v3603, %v3609
    %v3614 = vmax.f32 %v3612, 0.0
    %v3615 = vmax.f32 %v3613, 0.0
    %v3616 = vadd.f32 %v3614, 1e-05
    %v3617 = vadd.f32 %v3615, 1e-05
    %v3618 = vrsqrt.pop %v3616
    %v3619 = vmul.f32 %v3618, %v3616
    %v3620 = vmul.f32 %v3619, %v3618
    %v3621 = vmul.f32 0.5, %v3620
    %v3622 = vsub.f32 1.5, %v3621
    %v3623 = vmul.f32 %v3618, %v3622
    %vm3624 = vweird.f32 %v3616
    %vm3625 = vweird.f32 %v3618
    %vm3626 = vmor %vm3624, %vm3625
    %v3627 = vsel %vm3626, %v3618, %v3623
    %v3628 = vrsqrt.pop %v3617
    %v3629 = vmul.f32 %v3628, %v3617
    %v3630 = vmul.f32 %v3629, %v3628
    %v3631 = vmul.f32 0.5, %v3630
    %v3632 = vsub.f32 1.5, %v3631
    %v3633 = vmul.f32 %v3628, %v3632
    %vm3634 = vweird.f32 %v3617
    %vm3635 = vweird.f32 %v3628
    %vm3636 = vmor %vm3634, %vm3635
    %v3637 = vsel %vm3636, %v3628, %v3633
    %v3640 = vrot.slane %v3637, 6
    %v3641 = vrot.slane %v3627, 4
    %v3642 = vrot.slane %v3637, 2
    %vm3643 = vcmask 1041408
    %v3644 = vsel %vm3643, %v3627, %v3640
    %vm3645 = vcmask 1045508
    %v3646 = vsel %vm3645, %v3641, %v3642
    %v3647 = vsel %vm1415, %v3644, %v3646
    %v3648 = vrot.slane %v3647, 7
    %v3649 = vrot.slane %v3648, 2
    %v3651 = vmul.f32 %v77, %v3649
    %v3653 = vperm.slane %v3651, 0
    %v3654 = vperm.slane %v3651, 2
    %v3655 = vperm.slane %v3651, 4
    %v3656 = vperm.slane %v3651, 6
    %v3661 = vmul.f32 %v3602, %v3653
    %v3662 = vmul.f32 %v3603, %v3654
    %v3663 = vmul.f32 %v3602, %v3655
    %v3664 = vmul.f32 %v3603, %v3656
    %v3669 = vrot.slane %v3662, 6
    %v3670 = vrot.slane %v3663, 4
    %v3671 = vrot.slane %v3664, 2
    %v3672 = vsel %vm3643, %v3661, %v3669
    %v3673 = vsel %vm3645, %v3670, %v3671
    %v3674 = vsel %vm1415, %v3672, %v3673
    %v3675 = vrot.slane %v3674, 7
    %v3677 = vsub.f32 %v77, %v3675
    %v3678 = vperm.slane %v3653, 0
    %v3679 = vperm.slane %v3654, 0
    %v3680 = vperm.slane %v3655, 0
    %v3681 = vperm.slane %v3656, 0
    %v3682 = vmul.f32 %v3185, %v3678
    %v3683 = vmul.f32 %v3289, %v3679
    %v3684 = vmul.f32 %v3393, %v3680
    %v3685 = vmul.f32 %v3497, %v3681
    %v3687 = vperm.slane %v3677, 1
    %v3688 = vperm.slane %v3677, 3
    %v3689 = vperm.slane %v3677, 5
    %v3690 = vperm.slane %v3677, 7
    %v3695 = vperm.slane %v3687, 1
    %v3696 = vperm.slane %v3688, 1
    %v3697 = vperm.slane %v3689, 1
    %v3698 = vperm.slane %v3690, 1
    %v3699 = vadd.f32 %v3682, %v3695
    %v3700 = vadd.f32 %v3683, %v3696
    %v3701 = vadd.f32 %v3684, %v3697
    %v3702 = vadd.f32 %v3685, %v3698
    %v3703 = vmax.f32 %v3699, 0.0
    %v3704 = vmax.f32 %v3700, 0.0
    %v3705 = vmax.f32 %v3701, 0.0
    %v3706 = vmax.f32 %v3702, 0.0
    %v3707 = vpack.c.bf16 %v3703, %v3703
    %v3708 = vpack.c.bf16 %v3704, %v3704
    %v3709 = vpack.c.bf16 %v3705, %v3705
    %v3710 = vpack.c.bf16 %v3706, %v3706
    %v3711 = vld [vmem:[#allocation6] sm:$0xff]
    %v3712 = vld [vmem:[#allocation6 + $0x8] sm:$0xff]
    %v3713 = vld [vmem:[#allocation6 + $0x10] sm:$0xff]
    %v3714 = vld [vmem:[#allocation6 + $0x18] sm:$0xff]
    %v3715 = vld [vmem:[#allocation6 + $0x20] sm:$0xff]
    %v3716 = vld [vmem:[#allocation6 + $0x28] sm:$0xff]
    %v3717 = vld [vmem:[#allocation6 + $0x30] sm:$0xff]
    %v3718 = vld [vmem:[#allocation6 + $0x38] sm:$0xff]
    %v3719 = vld [vmem:[#allocation6 + $0x40] sm:$0xff]
    %v3720 = vld [vmem:[#allocation6 + $0x48] sm:$0xff]
    %v3721 = vld [vmem:[#allocation6 + $0x50] sm:$0xff]
    %v3722 = vld [vmem:[#allocation6 + $0x58] sm:$0xff]
    %v3723 = vld [vmem:[#allocation6 + $0x60] sm:$0xff]
    %v3724 = vld [vmem:[#allocation6 + $0x68] sm:$0xff]
    %v3725 = vld [vmem:[#allocation6 + $0x70] sm:$0xff]
    %v3726 = vld [vmem:[#allocation6 + $0x78] sm:$0xff]
    %v3727 = vld [vmem:[#allocation6 + $0x80] sm:$0xff]
    %v3728 = vld [vmem:[#allocation6 + $0x88] sm:$0xff]
    %v3729 = vld [vmem:[#allocation6 + $0x90] sm:$0xff]
    %v3730 = vld [vmem:[#allocation6 + $0x98] sm:$0xff]
    %v3731 = vld [vmem:[#allocation6 + $0xa0] sm:$0xff]
    %v3732 = vld [vmem:[#allocation6 + $0xa8] sm:$0xff]
    %v3733 = vld [vmem:[#allocation6 + $0xb0] sm:$0xff]
    %v3734 = vld [vmem:[#allocation6 + $0xb8] sm:$0xff]
    %v3735 = vld [vmem:[#allocation6 + $0xc0] sm:$0xff]
    %v3736 = vld [vmem:[#allocation6 + $0xc8] sm:$0xff]
    %v3737 = vld [vmem:[#allocation6 + $0xd0] sm:$0xff]
    %v3738 = vld [vmem:[#allocation6 + $0xd8] sm:$0xff]
    %v3739 = vld [vmem:[#allocation6 + $0xe0] sm:$0xff]
    %v3740 = vld [vmem:[#allocation6 + $0xe8] sm:$0xff]
    %v3741 = vld [vmem:[#allocation6 + $0xf0] sm:$0xff]
    %v3742 = vld [vmem:[#allocation6 + $0xf8] sm:$0xff]
    %v3743 = vld [vmem:[#allocation6 + $0x100] sm:$0xff]
    %v3744 = vld [vmem:[#allocation6 + $0x108] sm:$0xff]
    %v3745 = vld [vmem:[#allocation6 + $0x110] sm:$0xff]
    %v3746 = vld [vmem:[#allocation6 + $0x118] sm:$0xff]
    %v3747 = vld [vmem:[#allocation6 + $0x120] sm:$0xff]
    %v3748 = vld [vmem:[#allocation6 + $0x128] sm:$0xff]
    %v3749 = vld [vmem:[#allocation6 + $0x130] sm:$0xff]
    %v3750 = vld [vmem:[#allocation6 + $0x138] sm:$0xff]
    %v3751 = vld [vmem:[#allocation6 + $0x140] sm:$0xff]
    %v3752 = vld [vmem:[#allocation6 + $0x148] sm:$0xff]
    %v3753 = vld [vmem:[#allocation6 + $0x150] sm:$0xff]
    %v3754 = vld [vmem:[#allocation6 + $0x158] sm:$0xff]
    %v3755 = vld [vmem:[#allocation6 + $0x160] sm:$0xff]
    %v3756 = vld [vmem:[#allocation6 + $0x168] sm:$0xff]
    %v3757 = vld [vmem:[#allocation6 + $0x170] sm:$0xff]
    %v3758 = vld [vmem:[#allocation6 + $0x178] sm:$0xff]
    %v3759 = vld [vmem:[#allocation6 + $0x180] sm:$0xff]
    %v3760 = vld [vmem:[#allocation6 + $0x188] sm:$0xff]
    %v3761 = vld [vmem:[#allocation6 + $0x190] sm:$0xff]
    %v3762 = vld [vmem:[#allocation6 + $0x198] sm:$0xff]
    %v3763 = vld [vmem:[#allocation6 + $0x1a0] sm:$0xff]
    %v3764 = vld [vmem:[#allocation6 + $0x1a8] sm:$0xff]
    %v3765 = vld [vmem:[#allocation6 + $0x1b0] sm:$0xff]
    %v3766 = vld [vmem:[#allocation6 + $0x1b8] sm:$0xff]
    %v3767 = vld [vmem:[#allocation6 + $0x1c0] sm:$0xff]
    %v3768 = vld [vmem:[#allocation6 + $0x1c8] sm:$0xff]
    %v3769 = vld [vmem:[#allocation6 + $0x1d0] sm:$0xff]
    %v3770 = vld [vmem:[#allocation6 + $0x1d8] sm:$0xff]
    %v3771 = vld [vmem:[#allocation6 + $0x1e0] sm:$0xff]
    %v3772 = vld [vmem:[#allocation6 + $0x1e8] sm:$0xff]
    %v3773 = vld [vmem:[#allocation6 + $0x1f0] sm:$0xff]
    %v3774 = vld [vmem:[#allocation6 + $0x1f8] sm:$0xff]
    %v3775 = vld [vmem:[%s6] sm:$0x3]
    %v3777 = vperm.slane %v3775, 0
    %v3778 = vperm.slane %v3775, 1
    %v3845 = vunpack.c.l.b16 %v3711
    %v3846 = vunpack.c.h.b16 %v3711
    %v3847 = vunpack.c.l.b16 %v3712
    %v3848 = vunpack.c.h.b16 %v3712
    %v3849 = vunpack.c.l.b16 %v3713
    %v3850 = vunpack.c.h.b16 %v3713
    %v3851 = vunpack.c.l.b16 %v3714
    %v3852 = vunpack.c.h.b16 %v3714
    %v3853 = vunpack.c.l.b16 %v3715
    %v3854 = vunpack.c.h.b16 %v3715
    %v3855 = vunpack.c.l.b16 %v3716
    %v3856 = vunpack.c.h.b16 %v3716
    %v3857 = vunpack.c.l.b16 %v3717
    %v3858 = vunpack.c.h.b16 %v3717
    %v3859 = vunpack.c.l.b16 %v3718
    %v3860 = vunpack.c.h.b16 %v3718
    %v3861 = vunpack.c.l.b16 %v3719
    %v3862 = vunpack.c.h.b16 %v3719
    %v3863 = vunpack.c.l.b16 %v3720
    %v3864 = vunpack.c.h.b16 %v3720
    %v3865 = vunpack.c.l.b16 %v3721
    %v3866 = vunpack.c.h.b16 %v3721
    %v3867 = vunpack.c.l.b16 %v3722
    %v3868 = vunpack.c.h.b16 %v3722
    %v3869 = vunpack.c.l.b16 %v3723
    %v3870 = vunpack.c.h.b16 %v3723
    %v3871 = vunpack.c.l.b16 %v3724
    %v3872 = vunpack.c.h.b16 %v3724
    %v3873 = vunpack.c.l.b16 %v3725
    %v3874 = vunpack.c.h.b16 %v3725
    %v3875 = vunpack.c.l.b16 %v3726
    %v3876 = vunpack.c.h.b16 %v3726
    %v3877 = vunpack.c.l.b16 %v3727
    %v3878 = vunpack.c.h.b16 %v3727
    %v3879 = vunpack.c.l.b16 %v3728
    %v3880 = vunpack.c.h.b16 %v3728
    %v3881 = vunpack.c.l.b16 %v3729
    %v3882 = vunpack.c.h.b16 %v3729
    %v3883 = vunpack.c.l.b16 %v3730
    %v3884 = vunpack.c.h.b16 %v3730
    %v3885 = vunpack.c.l.b16 %v3731
    %v3886 = vunpack.c.h.b16 %v3731
    %v3887 = vunpack.c.l.b16 %v3732
    %v3888 = vunpack.c.h.b16 %v3732
    %v3889 = vunpack.c.l.b16 %v3733
    %v3890 = vunpack.c.h.b16 %v3733
    %v3891 = vunpack.c.l.b16 %v3734
    %v3892 = vunpack.c.h.b16 %v3734
    %v3893 = vunpack.c.l.b16 %v3735
    %v3894 = vunpack.c.h.b16 %v3735
    %v3895 = vunpack.c.l.b16 %v3736
    %v3896 = vunpack.c.h.b16 %v3736
    %v3897 = vunpack.c.l.b16 %v3737
    %v3898 = vunpack.c.h.b16 %v3737
    %v3899 = vunpack.c.l.b16 %v3738
    %v3900 = vunpack.c.h.b16 %v3738
    %v3901 = vunpack.c.l.b16 %v3739
    %v3902 = vunpack.c.h.b16 %v3739
    %v3903 = vunpack.c.l.b16 %v3740
    %v3904 = vunpack.c.h.b16 %v3740
    %v3905 = vunpack.c.l.b16 %v3741
    %v3906 = vunpack.c.h.b16 %v3741
    %v3907 = vunpack.c.l.b16 %v3742
    %v3908 = vunpack.c.h.b16 %v3742
    %v3909 = vunpack.c.l.b16 %v3743
    %v3910 = vunpack.c.h.b16 %v3743
    %v3911 = vunpack.c.l.b16 %v3744
    %v3912 = vunpack.c.h.b16 %v3744
    %v3913 = vunpack.c.l.b16 %v3745
    %v3914 = vunpack.c.h.b16 %v3745
    %v3915 = vunpack.c.l.b16 %v3746
    %v3916 = vunpack.c.h.b16 %v3746
    %v3917 = vunpack.c.l.b16 %v3747
    %v3918 = vunpack.c.h.b16 %v3747
    %v3919 = vunpack.c.l.b16 %v3748
    %v3920 = vunpack.c.h.b16 %v3748
    %v3921 = vunpack.c.l.b16 %v3749
    %v3922 = vunpack.c.h.b16 %v3749
    %v3923 = vunpack.c.l.b16 %v3750
    %v3924 = vunpack.c.h.b16 %v3750
    %v3925 = vunpack.c.l.b16 %v3751
    %v3926 = vunpack.c.h.b16 %v3751
    %v3927 = vunpack.c.l.b16 %v3752
    %v3928 = vunpack.c.h.b16 %v3752
    %v3929 = vunpack.c.l.b16 %v3753
    %v3930 = vunpack.c.h.b16 %v3753
    %v3931 = vunpack.c.l.b16 %v3754
    %v3932 = vunpack.c.h.b16 %v3754
    %v3933 = vunpack.c.l.b16 %v3755
    %v3934 = vunpack.c.h.b16 %v3755
    %v3935 = vunpack.c.l.b16 %v3756
    %v3936 = vunpack.c.h.b16 %v3756
    %v3937 = vunpack.c.l.b16 %v3757
    %v3938 = vunpack.c.h.b16 %v3757
    %v3939 = vunpack.c.l.b16 %v3758
    %v3940 = vunpack.c.h.b16 %v3758
    %v3941 = vunpack.c.l.b16 %v3759
    %v3942 = vunpack.c.h.b16 %v3759
    %v3943 = vunpack.c.l.b16 %v3760
    %v3944 = vunpack.c.h.b16 %v3760
    %v3945 = vunpack.c.l.b16 %v3761
    %v3946 = vunpack.c.h.b16 %v3761
    %v3947 = vunpack.c.l.b16 %v3762
    %v3948 = vunpack.c.h.b16 %v3762
    %v3949 = vunpack.c.l.b16 %v3763
    %v3950 = vunpack.c.h.b16 %v3763
    %v3951 = vunpack.c.l.b16 %v3764
    %v3952 = vunpack.c.h.b16 %v3764
    %v3953 = vunpack.c.l.b16 %v3765
    %v3954 = vunpack.c.h.b16 %v3765
    %v3955 = vunpack.c.l.b16 %v3766
    %v3956 = vunpack.c.h.b16 %v3766
    %v3957 = vunpack.c.l.b16 %v3767
    %v3958 = vunpack.c.h.b16 %v3767
    %v3959 = vunpack.c.l.b16 %v3768
    %v3960 = vunpack.c.h.b16 %v3768
    %v3961 = vunpack.c.l.b16 %v3769
    %v3962 = vunpack.c.h.b16 %v3769
    %v3963 = vunpack.c.l.b16 %v3770
    %v3964 = vunpack.c.h.b16 %v3770
    %v3965 = vunpack.c.l.b16 %v3771
    %v3966 = vunpack.c.h.b16 %v3771
    %v3967 = vunpack.c.l.b16 %v3772
    %v3968 = vunpack.c.h.b16 %v3772
    %v3969 = vunpack.c.l.b16 %v3773
    %v3970 = vunpack.c.h.b16 %v3773
    %v3971 = vunpack.c.l.b16 %v3774
    %v3972 = vunpack.c.h.b16 %v3774
    %v3973 = vpack.c.b16 %v3847, %v3845
    %v3974 = vpack.c.b16 %v3848, %v3846
    %v3975 = vpack.c.b16 %v3851, %v3849
    %v3976 = vpack.c.b16 %v3852, %v3850
    %v3977 = vpack.c.b16 %v3855, %v3853
    %v3978 = vpack.c.b16 %v3856, %v3854
    %v3979 = vpack.c.b16 %v3859, %v3857
    %v3980 = vpack.c.b16 %v3860, %v3858
    %v3981 = vpack.c.b16 %v3863, %v3861
    %v3982 = vpack.c.b16 %v3864, %v3862
    %v3983 = vpack.c.b16 %v3867, %v3865
    %v3984 = vpack.c.b16 %v3868, %v3866
    %v3985 = vpack.c.b16 %v3871, %v3869
    %v3986 = vpack.c.b16 %v3872, %v3870
    %v3987 = vpack.c.b16 %v3875, %v3873
    %v3988 = vpack.c.b16 %v3876, %v3874
    %v3989 = vpack.c.b16 %v3879, %v3877
    %v3990 = vpack.c.b16 %v3880, %v3878
    %v3991 = vpack.c.b16 %v3883, %v3881
    %v3992 = vpack.c.b16 %v3884, %v3882
    %v3993 = vpack.c.b16 %v3887, %v3885
    %v3994 = vpack.c.b16 %v3888, %v3886
    %v3995 = vpack.c.b16 %v3891, %v3889
    %v3996 = vpack.c.b16 %v3892, %v3890
    %v3997 = vpack.c.b16 %v3895, %v3893
    %v3998 = vpack.c.b16 %v3896, %v3894
    %v3999 = vpack.c.b16 %v3899, %v3897
    %v4000 = vpack.c.b16 %v3900, %v3898
    %v4001 = vpack.c.b16 %v3903, %v3901
    %v4002 = vpack.c.b16 %v3904, %v3902
    %v4003 = vpack.c.b16 %v3907, %v3905
    %v4004 = vpack.c.b16 %v3908, %v3906
    %v4005 = vpack.c.b16 %v3911, %v3909
    %v4006 = vpack.c.b16 %v3912, %v3910
    %v4007 = vpack.c.b16 %v3915, %v3913
    %v4008 = vpack.c.b16 %v3916, %v3914
    %v4009 = vpack.c.b16 %v3919, %v3917
    %v4010 = vpack.c.b16 %v3920, %v3918
    %v4011 = vpack.c.b16 %v3923, %v3921
    %v4012 = vpack.c.b16 %v3924, %v3922
    %v4013 = vpack.c.b16 %v3927, %v3925
    %v4014 = vpack.c.b16 %v3928, %v3926
    %v4015 = vpack.c.b16 %v3931, %v3929
    %v4016 = vpack.c.b16 %v3932, %v3930
    %v4017 = vpack.c.b16 %v3935, %v3933
    %v4018 = vpack.c.b16 %v3936, %v3934
    %v4019 = vpack.c.b16 %v3939, %v3937
    %v4020 = vpack.c.b16 %v3940, %v3938
    %v4021 = vpack.c.b16 %v3943, %v3941
    %v4022 = vpack.c.b16 %v3944, %v3942
    %v4023 = vpack.c.b16 %v3947, %v3945
    %v4024 = vpack.c.b16 %v3948, %v3946
    %v4025 = vpack.c.b16 %v3951, %v3949
    %v4026 = vpack.c.b16 %v3952, %v3950
    %v4027 = vpack.c.b16 %v3955, %v3953
    %v4028 = vpack.c.b16 %v3956, %v3954
    %v4029 = vpack.c.b16 %v3959, %v3957
    %v4030 = vpack.c.b16 %v3960, %v3958
    %v4031 = vpack.c.b16 %v3963, %v3961
    %v4032 = vpack.c.b16 %v3964, %v3962
    %v4033 = vpack.c.b16 %v3967, %v3965
    %v4034 = vpack.c.b16 %v3968, %v3966
    %v4035 = vpack.c.b16 %v3971, %v3969
    %v4036 = vpack.c.b16 %v3972, %v3970
    %4101 = vmatpush.bf16.msra.mxu0 %v3987
    %4102 = vmatpush.bf16.msra.mxu0 %v3985
    %4103 = vmatpush.bf16.msra.mxu0 %v3983
    %4104 = vmatpush.bf16.msra.mxu0 %v3981
    %4105 = vmatpush.bf16.msra.mxu0 %v3979
    %4106 = vmatpush.bf16.msra.mxu0 %v3977
    %4107 = vmatpush.bf16.msra.mxu0 %v3975
    %4108 = vmatpush.bf16.msra.mxu0 %v3973
    %4109 = vmatmul.bf16.gmra.mxu0 %v3707
    %v4110 = vpop.f32.mrf.mxu0
    %v4111 = vadd.f32 %v3777, %v4110
    %v4112 = vpop.f32.mrf.mxu0
    %4113 = vdwg.mxu0
    %4114 = vmatpush.bf16.msra.mxu0 %v4003
    %4115 = vmatpush.bf16.msra.mxu0 %v4001
    %4116 = vmatpush.bf16.msra.mxu0 %v3999
    %4117 = vmatpush.bf16.msra.mxu0 %v3997
    %4118 = vmatpush.bf16.msra.mxu0 %v3995
    %4119 = vmatpush.bf16.msra.mxu0 %v3993
    %4120 = vmatpush.bf16.msra.mxu0 %v3991
    %4121 = vmatpush.bf16.msra.mxu0 %v3989
    %4122 = vmatmul.bf16.gmra.mxu0 %v3708
    %v4123 = vpop.f32.mrf.mxu0
    %v4124 = vadd.f32 %v4111, %v4123
    %v4125 = vpop.f32.mrf.mxu0
    %4126 = vdwg.mxu0
    %4127 = vmatpush.bf16.msra.mxu0 %v4019
    %4128 = vmatpush.bf16.msra.mxu0 %v4017
    %4129 = vmatpush.bf16.msra.mxu0 %v4015
    %4130 = vmatpush.bf16.msra.mxu0 %v4013
    %4131 = vmatpush.bf16.msra.mxu0 %v4011
    %4132 = vmatpush.bf16.msra.mxu0 %v4009
    %4133 = vmatpush.bf16.msra.mxu0 %v4007
    %4134 = vmatpush.bf16.msra.mxu0 %v4005
    %4135 = vmatmul.bf16.gmra.mxu0 %v3709
    %v4136 = vpop.f32.mrf.mxu0
    %v4137 = vadd.f32 %v4124, %v4136
    %v4138 = vpop.f32.mrf.mxu0
    %4139 = vdwg.mxu0
    %4140 = vmatpush.bf16.msra.mxu0 %v4035
    %4141 = vmatpush.bf16.msra.mxu0 %v4033
    %4142 = vmatpush.bf16.msra.mxu0 %v4031
    %4143 = vmatpush.bf16.msra.mxu0 %v4029
    %4144 = vmatpush.bf16.msra.mxu0 %v4027
    %4145 = vmatpush.bf16.msra.mxu0 %v4025
    %4146 = vmatpush.bf16.msra.mxu0 %v4023
    %4147 = vmatpush.bf16.msra.mxu0 %v4021
    %4148 = vmatmul.bf16.gmra.mxu0 %v3710
    %v4149 = vpop.f32.mrf.mxu0
    %v4150 = vadd.f32 %v4137, %v4149
    %v4151 = vpop.f32.mrf.mxu0
    %4152 = vdwg.mxu0
    %4153 = vmatpush.bf16.msra.mxu0 %v3988
    %4154 = vmatpush.bf16.msra.mxu0 %v3986
    %4155 = vmatpush.bf16.msra.mxu0 %v3984
    %4156 = vmatpush.bf16.msra.mxu0 %v3982
    %4157 = vmatpush.bf16.msra.mxu0 %v3980
    %4158 = vmatpush.bf16.msra.mxu0 %v3978
    %4159 = vmatpush.bf16.msra.mxu0 %v3976
    %4160 = vmatpush.bf16.msra.mxu0 %v3974
    %4161 = vmatmul.bf16.gmra.mxu0 %v3707
    %v4162 = vpop.f32.mrf.mxu0
    %v4163 = vadd.f32 %v3778, %v4162
    %v4164 = vpop.f32.mrf.mxu0
    %4165 = vdwg.mxu0
    %4166 = vmatpush.bf16.msra.mxu0 %v4004
    %4167 = vmatpush.bf16.msra.mxu0 %v4002
    %4168 = vmatpush.bf16.msra.mxu0 %v4000
    %4169 = vmatpush.bf16.msra.mxu0 %v3998
    %4170 = vmatpush.bf16.msra.mxu0 %v3996
    %4171 = vmatpush.bf16.msra.mxu0 %v3994
    %4172 = vmatpush.bf16.msra.mxu0 %v3992
    %4173 = vmatpush.bf16.msra.mxu0 %v3990
    %4174 = vmatmul.bf16.gmra.mxu0 %v3708
    %v4175 = vpop.f32.mrf.mxu0
    %v4176 = vadd.f32 %v4163, %v4175
    %v4177 = vpop.f32.mrf.mxu0
    %4178 = vdwg.mxu0
    %4179 = vmatpush.bf16.msra.mxu0 %v4020
    %4180 = vmatpush.bf16.msra.mxu0 %v4018
    %4181 = vmatpush.bf16.msra.mxu0 %v4016
    %4182 = vmatpush.bf16.msra.mxu0 %v4014
    %4183 = vmatpush.bf16.msra.mxu0 %v4012
    %4184 = vmatpush.bf16.msra.mxu0 %v4010
    %4185 = vmatpush.bf16.msra.mxu0 %v4008
    %4186 = vmatpush.bf16.msra.mxu0 %v4006
    %4187 = vmatmul.bf16.gmra.mxu0 %v3709
    %v4188 = vpop.f32.mrf.mxu0
    %v4189 = vadd.f32 %v4176, %v4188
    %v4190 = vpop.f32.mrf.mxu0
    %4191 = vdwg.mxu0
    %4192 = vmatpush.bf16.msra.mxu0 %v4036
    %4193 = vmatpush.bf16.msra.mxu0 %v4034
    %4194 = vmatpush.bf16.msra.mxu0 %v4032
    %4195 = vmatpush.bf16.msra.mxu0 %v4030
    %4196 = vmatpush.bf16.msra.mxu0 %v4028
    %4197 = vmatpush.bf16.msra.mxu0 %v4026
    %4198 = vmatpush.bf16.msra.mxu0 %v4024
    %4199 = vmatpush.bf16.msra.mxu0 %v4022
    %4200 = vmatmul.bf16.gmra.mxu0 %v3710
    %v4201 = vpop.f32.mrf.mxu0
    %v4202 = vadd.f32 %v4189, %v4201
    %v4203 = vpop.f32.mrf.mxu0
    %4204 = vdwg.mxu0
    %4205 = vst [vmem:[%s7] sm:$0x3f] %v4150
    %4206 = vst [vmem:[%s7 + $0x8] sm:$0x3f] %v4202
    // Predicated region
    $region42: #{encoder_forward.1} parent=1 // pred_check
      _
    $region43: #{encoder_forward.1} parent=1 // pred_check_branch
      %4208 = sbr.rel (0) target = $region45
    $region44: #{encoder_forward.1} parent=1 // pred_region
      _
    $region45: #{encoder_forward.1} parent=1 // pred_fallthru
      _
    // Predicated region
    $region46: #{encoder_forward.1} parent=1 // pred_check
      _
    $region47: #{encoder_forward.1} parent=1 // pred_check_branch
      %4210 = sbr.rel (0) target = $region49
    $region48: #{encoder_forward.1} parent=1 // pred_region
      _
    $region49: #{encoder_forward.1} parent=1 // pred_fallthru
      _
    %4211 = vsyncpa [#allocation3], 1
    %4212 = vsyncpa [#allocation5], 1

</llo_original>
